<compile_context>
chip_gen: v5e
topology: v5e:2x2
jax: 0.10.0
libtpu: 0.0.40
codegen_flags: <defaults>
</compile_context>

<pallas_src>
import numpy as np
import jax
import jax.numpy as jnp
from jax import lax
from jax.experimental import pallas as pl
from jax.experimental.pallas import tpu as pltpu

EPS = 1e-5


# ----------------------- host-side operator packing ------------------------ #

def _band_weight(w_oihw, scale, k, w_in):
    """Conv-as-one-matmul weight [cin*k*w_in, cout*wo], BN scale folded in.

    Row index r = (ci*k + kh)*w_in + w (matches the kernel's im2col lane order);
    column c = co*wo + ow.  Entry = weight[co,ci,kh, w-ow] * scale[co] when
    0 <= w-ow < k, else 0 (banded / block-Toeplitz structure).
    """
    cout, cin = int(w_oihw.shape[0]), int(w_oihw.shape[1])
    wo = w_in - k + 1
    ws = w_oihw.astype(jnp.float32) * scale[:, None, None, None]
    r = np.arange(cin * k * w_in)
    ci = (r // (k * w_in))[:, None]
    kh = ((r // w_in) % k)[:, None]
    wpos = (r % w_in)[:, None]
    c = np.arange(cout * wo)
    co = (c // wo)[None, :]
    ow = (c % wo)[None, :]
    kw = wpos - ow
    valid = (kw >= 0) & (kw < k)
    kw = np.clip(kw, 0, k - 1)
    return jnp.where(valid, ws[co, ci, kh, kw], 0.0).astype(jnp.float32)


def _col_pool_selector(cout, wo):
    """0/1 matrix [cout*wo, 2*cout*wp]: left half picks even output columns,
    right half odd columns, block-diagonal over channels (host constant)."""
    wp = wo // 2
    r = np.arange(cout * wo)
    c = np.arange(cout * wp)
    same = (r // wo)[:, None] == (c // wp)[None, :]
    ow = (r % wo)[:, None]
    wi = (c % wp)[None, :]
    even = same & (ow == 2 * wi)
    odd = same & (ow == 2 * wi + 1)
    return np.concatenate([even, odd], axis=1).astype(np.float32)


def _row_pool_selector(bsz, ho, h_major=False):
    """0/1 matrix [2*bsz*hp, bsz*ho]: top half picks even rows, bottom half odd
    rows of every sample block.  Output rows are (b, hp) b-major, or (hp, b)
    h-major when h_major=True (used by the last stage so fc1 needs no gather)."""
    hp = ho // 2
    r = np.arange(bsz * hp)
    if h_major:
        hi, b_r = (r // bsz)[:, None], (r % bsz)[:, None]
    else:
        b_r, hi = (r // hp)[:, None], (r % hp)[:, None]
    c = np.arange(bsz * ho)
    b_c, ho_i = (c // ho)[None, :], (c % ho)[None, :]
    same = b_r == b_c
    even = same & (ho_i == 2 * hi)
    odd = same & (ho_i == 2 * hi + 1)
    return np.concatenate([even, odd], axis=0).astype(np.float32)


# ------------------------------ kernel ------------------------------------- #

def _make_kernel(bsz):
    stages = (
        # cin, cout, k, h, w  (stage input spatial size)
        (1, 3, 5, 48, 48),
        (3, 7, 3, 22, 22),
        (7, 12, 3, 10, 10),
    )

    def kernel(x_ref,
               wb1, br1, pc1, pr1,
               wb2, br2, pc2, pr2,
               wb3, br3, pc3, pr3,
               w1p, fb1, w2m, fb2,
               o_ref):

        def conv_bn_relu_pool(x2d, stage, wb, br, pc, pr):
            cin, cout, k, h, w = stage
            ho, wo = h - k + 1, w - k + 1
            wp = wo // 2
            # im2col slab: rows (b, oh), lanes (ci, kh, w).  Shifted slabs are
            # plain row/lane-block slices built once per (b, ci, kh); no
            # per-cout / per-kw replication, no SMEM scalar taps.
            samples = []
            for b in range(bsz):
                base = b * h
                pieces = [x2d[base + kh:base + kh + ho, ci * w:(ci + 1) * w]
                          for ci in range(cin) for kh in range(k)]
                samples.append(jnp.concatenate(pieces, axis=-1))
            stacked = samples[0] if bsz == 1 else jnp.concatenate(samples, axis=0)
            # Whole conv stage (all taps, channels, samples) = ONE MXU matmul
            # against the host-packed banded weight (BN scale folded in).
            y = jnp.dot(stacked, wb[...], preferred_element_type=jnp.float32)
            y = jnp.maximum(y + br[...], 0.0)
            # 2x2/2 max pool, batched over channels and samples:
            #   lane (column) halves via one selection matmul,
            #   sublane (row) halves via one block-diagonal selection matmul.
            zc = jnp.dot(y, pc[...], preferred_element_type=jnp.float32)
            cmax = jnp.maximum(zc[:, :cout * wp], zc[:, cout * wp:])
            zr = jnp.dot(pr[...], cmax, preferred_element_type=jnp.float32)
            half = zr.shape[0] // 2
            return jnp.maximum(zr[:half, :], zr[half:, :])

        x2d = x_ref[...]                                             # [bsz*48, 48]
        p1 = conv_bn_relu_pool(x2d, stages[0], wb1, br1, pc1, pr1)   # [bsz*22, 3*22]
        p2 = conv_bn_relu_pool(p1, stages[1], wb2, br2, pc2, pr2)    # [bsz*10, 7*10]
        p3 = conv_bn_relu_pool(p2, stages[2], wb3, br3, pc3, pr3)    # [4*bsz, 12*4], rows (h, b)

        # fc1 as ONE [bsz,192]@[192,40] matmul: stage-3 rows are already in
        # (h, b) order, so the flatten is 4 contiguous row-block slices + a lane
        # concat; torch's (c,h,w) flatten order is matched by the host-permuted
        # w1p instead of transposing/flattening the activation in-kernel.
        a1 = jnp.concatenate(
            [p3[hh * bsz:(hh + 1) * bsz, :] for hh in range(4)], axis=-1)   # [bsz, 192]
        # TODO(synk): nn.Dropout(0.1) is identity in eval mode; train-mode RNG
        # dropout (and train-mode BatchNorm batch statistics) are not emulated.
        hid = jnp.maximum(
            jnp.dot(a1, w1p[...], preferred_element_type=jnp.float32) + fb1[...], 0.0)
        logits = jnp.dot(hid, w2m[...], preferred_element_type=jnp.float32) + fb2[...]
        z = logits - jnp.max(logits, axis=-1, keepdims=True)
        e = jnp.exp(z)
        o_ref[0] = e / jnp.sum(e, axis=-1, keepdims=True)            # exact softmax

    return kernel


# ------------------------------ wrapper ------------------------------------ #

def _fold_bn(conv_b, gamma, beta, mean, var, eps=EPS):
    scale = gamma / jnp.sqrt(var + eps)
    bias = (conv_b - mean) * scale + beta
    return scale.astype(jnp.float32), bias.astype(jnp.float32)


@jax.jit
def net_forward(x_nchw, p):
    n = int(x_nchw.shape[0])
    # Samples per grid step: batch a few samples so the conv/fc matmuls, input
    # DMA and output store are dense, but keep >= 2 grid steps so the
    # "parallel" axis can be split across v7x's two TensorCores.
    bsz = max(1, min(8, -(-n // 2)))
    nblk = -(-n // bsz)
    npad = nblk * bsz

    # C == 1: NCHW -> 2-D [(b, h) rows, w lanes] slab is a free reshape.
    x2d = x_nchw.astype(jnp.float32).reshape(n * 48, 48)
    if npad != n:
        x2d = jnp.pad(x2d, ((0, (npad - n) * 48), (0, 0)))

    sc1, bi1 = _fold_bn(p['cb1'], p['g1'], p['be1'], p['m1'], p['v1'])
    sc2, bi2 = _fold_bn(p['cb2'], p['g2'], p['be2'], p['m2'], p['v2'])
    sc3, bi3 = _fold_bn(p['cb3'], p['g3'], p['be3'], p['m3'], p['v3'])

    # Conv stages packed as banded matmul weights (+ per-lane bias rows).
    wb1 = _band_weight(p['w1'], sc1, 5, 48)            # [240, 132]
    wb2 = _band_weight(p['w2'], sc2, 3, 22)            # [198, 140]
    wb3 = _band_weight(p['w3'], sc3, 3, 10)            # [210,  96]
    br1 = jnp.repeat(bi1, 44)[None, :]                 # [1, 132]
    br2 = jnp.repeat(bi2, 20)[None, :]                 # [1, 140]
    br3 = jnp.repeat(bi3, 8)[None, :]                  # [1,  96]
    # Pooling selectors are pure host constants (loaded into VMEM once).
    pc1, pc2, pc3 = (_col_pool_selector(3, 44), _col_pool_selector(7, 20),
                     _col_pool_selector(12, 8))
    pr1 = _row_pool_selector(bsz, 44)                  # [2*bsz*22, bsz*44]
    pr2 = _row_pool_selector(bsz, 20)                  # [2*bsz*10, bsz*20]
    pr3 = _row_pool_selector(bsz, 8, h_major=True)     # [8*bsz,    bsz*8 ]

    # fc1 weight host-permuted from torch (c,h,w) flatten order to the kernel's
    # (h,c,w) lane order; fc biases as broadcastable rows.
    w1p = (p['fw1'].astype(jnp.float32).reshape(12, 4, 4, 40)
           .transpose(1, 0, 2, 3).reshape(192, 40))
    fb1 = p['fb1'].reshape(1, 40).astype(jnp.float32)
    w2m = p['fw2'].astype(jnp.float32)
    fb2 = p['fb2'].reshape(1, 3).astype(jnp.float32)

    def res(a):  # resident (constant-block-index) VMEM operand
        return pl.BlockSpec(a.shape, lambda i: (0, 0))

    out = pl.pallas_call(
        _make_kernel(bsz),
        out_shape=jax.ShapeDtypeStruct((nblk, bsz, 3), jnp.float32),
        grid=(nblk,),
        in_specs=[
            pl.BlockSpec((bsz * 48, 48), lambda i: (i, 0)),   # per-step image slab
            res(wb1), res(br1), res(pc1), res(pr1),
            res(wb2), res(br2), res(pc2), res(pr2),
            res(wb3), res(br3), res(pc3), res(pr3),
            res(w1p), res(fb1), res(w2m), res(fb2),
        ],
        out_specs=pl.BlockSpec((1, bsz, 3), lambda i: (i, 0, 0)),
        compiler_params=pltpu.CompilerParams(
            dimension_semantics=("parallel",),   # v7x: sample blocks across TCs
        ),
    )(x2d, wb1, br1, pc1, pr1, wb2, br2, pc2, pr2,
      wb3, br3, pc3, pr3, w1p, fb1, w2m, fb2)
    return out.reshape(npad, 3)[:n]


# --------------------------- params & reference ----------------------------- #

def init_params(key):
    ks = jax.random.split(key, 24)
    u = lambda k, s, lo=-0.2, hi=0.2: jax.random.uniform(k, s, jnp.float32, lo, hi)
    pos = lambda k, s: jax.random.uniform(k, s, jnp.float32, 0.5, 1.5)
    p = {}
    # Conv weights in torch OIHW layout.
    p['w1'], p['cb1'] = u(ks[0], (3, 1, 5, 5)), u(ks[1], (3,))
    p['w2'], p['cb2'] = u(ks[2], (7, 3, 3, 3)), u(ks[3], (7,))
    p['w3'], p['cb3'] = u(ks[4], (12, 7, 3, 3)), u(ks[5], (12,))
    p['g1'], p['be1'], p['m1'], p['v1'] = pos(ks[6], (3,)), u(ks[7], (3,)), u(ks[8], (3,)), pos(ks[9], (3,))
    p['g2'], p['be2'], p['m2'], p['v2'] = pos(ks[10], (7,)), u(ks[11], (7,)), u(ks[12], (7,)), pos(ks[13], (7,))
    p['g3'], p['be3'], p['m3'], p['v3'] = pos(ks[14], (12,)), u(ks[15], (12,)), u(ks[16], (12,)), pos(ks[17], (12,))
    p['fw1'], p['fb1'] = u(ks[18], (192, 40)), u(ks[19], (40,))
    p['fw2'], p['fb2'] = u(ks[20], (40, 3)), u(ks[21], (3,))
    return p


def reference_forward(x_nchw, p):
    hp = jax.lax.Precision.HIGHEST
    x = jnp.transpose(x_nchw, (0, 2, 3, 1)).astype(jnp.float32)

    def block(x, w_oihw, cb, g, be, m, v):
        w = jnp.transpose(w_oihw, (2, 3, 1, 0))          # OIHW -> HWIO
        y = jax.lax.conv_general_dilated(
            x, w, (1, 1), 'VALID',
            dimension_numbers=('NHWC', 'HWIO', 'NHWC'), precision=hp) + cb
        y = (y - m) / jnp.sqrt(v + EPS) * g + be
        y = jnp.maximum(y, 0.0)
        n, hh, ww, c = y.shape
        return jnp.max(y.reshape(n, hh // 2, 2, ww // 2, 2, c), axis=(2, 4))

    x = block(x, p['w1'], p['cb1'], p['g1'], p['be1'], p['m1'], p['v1'])
    x = block(x, p['w2'], p['cb2'], p['g2'], p['be2'], p['m2'], p['v2'])
    x = block(x, p['w3'], p['cb3'], p['g3'], p['be3'], p['m3'], p['v3'])
    x = jnp.transpose(x, (0, 3, 1, 2)).reshape(x.shape[0], -1)       # torch flatten order
    h = jnp.maximum(jnp.dot(x, p['fw1'], precision=hp) + p['fb1'], 0.0)
    logits = jnp.dot(h, p['fw2'], precision=hp) + p['fb2']
    return jax.nn.softmax(logits, axis=1)


# --------------------------------- main ------------------------------------ #

if __name__ == "__main__":
    key = jax.random.PRNGKey(0)
    pkey, xkey = jax.random.split(key)
    params = init_params(pkey)
    # NCHW input exactly as the PyTorch module expects (48x48 forced by fc1).
    # batch=8 exercises both the multi-sample grid step (bsz=4) and the
    # 2-step "parallel" grid.
    x = jax.random.normal(xkey, (8, 1, 48, 48), jnp.float32)

    out = jax.block_until_ready(net_forward(x, params))
    ref = jax.block_until_ready(reference_forward(x, params))

    assert out.shape == (8, 3)
    # Tolerance covers bf16 operand rounding of the in-kernel MXU matmuls
    # (conv-as-matmul, pooling selection, fc layers) at default precision; any
    # structural bug produces deviations orders of magnitude larger than this.
    np.testing.assert_allclose(np.asarray(out), np.asarray(ref), atol=2e-2, rtol=2e-2)
    print("KERNEL_OK")
</pallas_src>

<mosaic_0001>
module attributes {stable_mosaic.version = 11 : i64} {
  func.func @kernel(%arg0: i32, %arg1: memref<192x48xf32, #tpu.memory_space<vmem>>, %arg2: memref<240x132xf32, #tpu.memory_space<vmem>>, %arg3: memref<1x132xf32, #tpu.memory_space<vmem>>, %arg4: memref<132x132xf32, #tpu.memory_space<vmem>>, %arg5: memref<176x176xf32, #tpu.memory_space<vmem>>, %arg6: memref<198x140xf32, #tpu.memory_space<vmem>>, %arg7: memref<1x140xf32, #tpu.memory_space<vmem>>, %arg8: memref<140x140xf32, #tpu.memory_space<vmem>>, %arg9: memref<80x80xf32, #tpu.memory_space<vmem>>, %arg10: memref<210x96xf32, #tpu.memory_space<vmem>>, %arg11: memref<1x96xf32, #tpu.memory_space<vmem>>, %arg12: memref<96x96xf32, #tpu.memory_space<vmem>>, %arg13: memref<32x32xf32, #tpu.memory_space<vmem>>, %arg14: memref<192x40xf32, #tpu.memory_space<vmem>>, %arg15: memref<1x40xf32, #tpu.memory_space<vmem>>, %arg16: memref<40x3xf32, #tpu.memory_space<vmem>>, %arg17: memref<1x3xf32, #tpu.memory_space<vmem>>, %arg18: memref<1x4x3xf32, #tpu.memory_space<vmem>>) attributes {dimension_semantics = [#tpu.dimension_semantics<parallel>], iteration_bounds = array<i64: 2>, scalar_prefetch = 0 : i64, scratch_operands = 0 : i64, tpu.core_type = #tpu.core_type<tc>, window_params = [{transform_indices = @transform_0, window_bounds = array<i64: 192, 48>}, {pipeline_mode = #tpu.pipeline_mode<synchronous>, transform_indices = @transform_1, window_bounds = array<i64: 240, 132>}, {pipeline_mode = #tpu.pipeline_mode<synchronous>, transform_indices = @transform_2, window_bounds = array<i64: 1, 132>}, {pipeline_mode = #tpu.pipeline_mode<synchronous>, transform_indices = @transform_3, window_bounds = array<i64: 132, 132>}, {pipeline_mode = #tpu.pipeline_mode<synchronous>, transform_indices = @transform_4, window_bounds = array<i64: 176, 176>}, {pipeline_mode = #tpu.pipeline_mode<synchronous>, transform_indices = @transform_5, window_bounds = array<i64: 198, 140>}, {pipeline_mode = #tpu.pipeline_mode<synchronous>, transform_indices = @transform_6, window_bounds = array<i64: 1, 140>}, {pipeline_mode = #tpu.pipeline_mode<synchronous>, transform_indices = @transform_7, window_bounds = array<i64: 140, 140>}, {pipeline_mode = #tpu.pipeline_mode<synchronous>, transform_indices = @transform_8, window_bounds = array<i64: 80, 80>}, {pipeline_mode = #tpu.pipeline_mode<synchronous>, transform_indices = @transform_9, window_bounds = array<i64: 210, 96>}, {pipeline_mode = #tpu.pipeline_mode<synchronous>, transform_indices = @transform_10, window_bounds = array<i64: 1, 96>}, {pipeline_mode = #tpu.pipeline_mode<synchronous>, transform_indices = @transform_11, window_bounds = array<i64: 96, 96>}, {pipeline_mode = #tpu.pipeline_mode<synchronous>, transform_indices = @transform_12, window_bounds = array<i64: 32, 32>}, {pipeline_mode = #tpu.pipeline_mode<synchronous>, transform_indices = @transform_13, window_bounds = array<i64: 192, 40>}, {pipeline_mode = #tpu.pipeline_mode<synchronous>, transform_indices = @transform_14, window_bounds = array<i64: 1, 40>}, {pipeline_mode = #tpu.pipeline_mode<synchronous>, transform_indices = @transform_15, window_bounds = array<i64: 40, 3>}, {pipeline_mode = #tpu.pipeline_mode<synchronous>, transform_indices = @transform_16, window_bounds = array<i64: 1, 3>}, {transform_indices = @transform_17, window_bounds = array<i64: 1, 4, 3>}]} {
    %c0 = arith.constant 0 : index
    %c0_0 = arith.constant 0 : index
    %0 = vector.load %arg1[%c0, %c0_0] : memref<192x48xf32, #tpu.memory_space<vmem>>, vector<192x48xf32>
    %1 = vector.extract_strided_slice %0 {offsets = [0, 0], sizes = [44, 48], strides = [1, 1]} : vector<192x48xf32> to vector<44x48xf32>
    %2 = vector.extract_strided_slice %0 {offsets = [1, 0], sizes = [44, 48], strides = [1, 1]} : vector<192x48xf32> to vector<44x48xf32>
    %3 = vector.extract_strided_slice %0 {offsets = [2, 0], sizes = [44, 48], strides = [1, 1]} : vector<192x48xf32> to vector<44x48xf32>
    %4 = vector.extract_strided_slice %0 {offsets = [3, 0], sizes = [44, 48], strides = [1, 1]} : vector<192x48xf32> to vector<44x48xf32>
    %5 = vector.extract_strided_slice %0 {offsets = [4, 0], sizes = [44, 48], strides = [1, 1]} : vector<192x48xf32> to vector<44x48xf32>
    %6 = tpu.concatenate %1, %2, %3, %4, %5 in 1 : vector<44x48xf32>, vector<44x48xf32>, vector<44x48xf32>, vector<44x48xf32>, vector<44x48xf32> -> vector<44x240xf32>
    %7 = vector.extract_strided_slice %0 {offsets = [48, 0], sizes = [44, 48], strides = [1, 1]} : vector<192x48xf32> to vector<44x48xf32>
    %8 = vector.extract_strided_slice %0 {offsets = [49, 0], sizes = [44, 48], strides = [1, 1]} : vector<192x48xf32> to vector<44x48xf32>
    %9 = vector.extract_strided_slice %0 {offsets = [50, 0], sizes = [44, 48], strides = [1, 1]} : vector<192x48xf32> to vector<44x48xf32>
    %10 = vector.extract_strided_slice %0 {offsets = [51, 0], sizes = [44, 48], strides = [1, 1]} : vector<192x48xf32> to vector<44x48xf32>
    %11 = vector.extract_strided_slice %0 {offsets = [52, 0], sizes = [44, 48], strides = [1, 1]} : vector<192x48xf32> to vector<44x48xf32>
    %12 = tpu.concatenate %7, %8, %9, %10, %11 in 1 : vector<44x48xf32>, vector<44x48xf32>, vector<44x48xf32>, vector<44x48xf32>, vector<44x48xf32> -> vector<44x240xf32>
    %13 = vector.extract_strided_slice %0 {offsets = [96, 0], sizes = [44, 48], strides = [1, 1]} : vector<192x48xf32> to vector<44x48xf32>
    %14 = vector.extract_strided_slice %0 {offsets = [97, 0], sizes = [44, 48], strides = [1, 1]} : vector<192x48xf32> to vector<44x48xf32>
    %15 = vector.extract_strided_slice %0 {offsets = [98, 0], sizes = [44, 48], strides = [1, 1]} : vector<192x48xf32> to vector<44x48xf32>
    %16 = vector.extract_strided_slice %0 {offsets = [99, 0], sizes = [44, 48], strides = [1, 1]} : vector<192x48xf32> to vector<44x48xf32>
    %17 = vector.extract_strided_slice %0 {offsets = [100, 0], sizes = [44, 48], strides = [1, 1]} : vector<192x48xf32> to vector<44x48xf32>
    %18 = tpu.concatenate %13, %14, %15, %16, %17 in 1 : vector<44x48xf32>, vector<44x48xf32>, vector<44x48xf32>, vector<44x48xf32>, vector<44x48xf32> -> vector<44x240xf32>
    %19 = vector.extract_strided_slice %0 {offsets = [144, 0], sizes = [44, 48], strides = [1, 1]} : vector<192x48xf32> to vector<44x48xf32>
    %20 = vector.extract_strided_slice %0 {offsets = [145, 0], sizes = [44, 48], strides = [1, 1]} : vector<192x48xf32> to vector<44x48xf32>
    %21 = vector.extract_strided_slice %0 {offsets = [146, 0], sizes = [44, 48], strides = [1, 1]} : vector<192x48xf32> to vector<44x48xf32>
    %22 = vector.extract_strided_slice %0 {offsets = [147, 0], sizes = [44, 48], strides = [1, 1]} : vector<192x48xf32> to vector<44x48xf32>
    %23 = vector.extract_strided_slice %0 {offsets = [148, 0], sizes = [44, 48], strides = [1, 1]} : vector<192x48xf32> to vector<44x48xf32>
    %24 = tpu.concatenate %19, %20, %21, %22, %23 in 1 : vector<44x48xf32>, vector<44x48xf32>, vector<44x48xf32>, vector<44x48xf32>, vector<44x48xf32> -> vector<44x240xf32>
    %25 = tpu.concatenate %6, %12, %18, %24 in 0 : vector<44x240xf32>, vector<44x240xf32>, vector<44x240xf32>, vector<44x240xf32> -> vector<176x240xf32>
    %c0_1 = arith.constant 0 : index
    %c0_2 = arith.constant 0 : index
    %26 = vector.load %arg2[%c0_1, %c0_2] : memref<240x132xf32, #tpu.memory_space<vmem>>, vector<240x132xf32>
    %cst = arith.constant dense<0.000000e+00> : vector<176x132xf32>
    %27 = tpu.matmul %25, %26, %cst {dimension_numbers = #tpu.dot_dimension_numbers<[1], [0], [0], [1], [0, 0, 1, 1], [], []>} : vector<176x240xf32>, vector<240x132xf32>, vector<176x132xf32> -> vector<176x132xf32>
    %c0_3 = arith.constant 0 : index
    %c0_4 = arith.constant 0 : index
    %28 = vector.load %arg3[%c0_3, %c0_4] : memref<1x132xf32, #tpu.memory_space<vmem>>, vector<1x132xf32>
    %29 = vector.broadcast %28 : vector<1x132xf32> to vector<176x132xf32>
    %30 = arith.addf %27, %29 : vector<176x132xf32>
    %cst_5 = arith.constant 0.000000e+00 : f32
    %31 = vector.broadcast %cst_5 : f32 to vector<176x132xf32>
    %32 = arith.maximumf %30, %31 : vector<176x132xf32>
    %c0_6 = arith.constant 0 : index
    %c0_7 = arith.constant 0 : index
    %33 = vector.load %arg4[%c0_6, %c0_7] : memref<132x132xf32, #tpu.memory_space<vmem>>, vector<132x132xf32>
    %cst_8 = arith.constant dense<0.000000e+00> : vector<176x132xf32>
    %34 = tpu.matmul %32, %33, %cst_8 {dimension_numbers = #tpu.dot_dimension_numbers<[1], [0], [0], [1], [0, 0, 1, 1], [], []>} : vector<176x132xf32>, vector<132x132xf32>, vector<176x132xf32> -> vector<176x132xf32>
    %35 = vector.extract_strided_slice %34 {offsets = [0, 0], sizes = [176, 66], strides = [1, 1]} : vector<176x132xf32> to vector<176x66xf32>
    %36 = vector.extract_strided_slice %34 {offsets = [0, 66], sizes = [176, 66], strides = [1, 1]} : vector<176x132xf32> to vector<176x66xf32>
    %37 = arith.maximumf %35, %36 : vector<176x66xf32>
    %c0_9 = arith.constant 0 : index
    %c0_10 = arith.constant 0 : index
    %38 = vector.load %arg5[%c0_9, %c0_10] : memref<176x176xf32, #tpu.memory_space<vmem>>, vector<176x176xf32>
    %cst_11 = arith.constant dense<0.000000e+00> : vector<176x66xf32>
    %39 = tpu.matmul %38, %37, %cst_11 {dimension_numbers = #tpu.dot_dimension_numbers<[1], [0], [0], [1], [0, 0, 1, 1], [], []>} : vector<176x176xf32>, vector<176x66xf32>, vector<176x66xf32> -> vector<176x66xf32>
    %40 = vector.extract_strided_slice %39 {offsets = [0, 0], sizes = [88, 66], strides = [1, 1]} : vector<176x66xf32> to vector<88x66xf32>
    %41 = vector.extract_strided_slice %39 {offsets = [88, 0], sizes = [88, 66], strides = [1, 1]} : vector<176x66xf32> to vector<88x66xf32>
    %42 = arith.maximumf %40, %41 : vector<88x66xf32>
    %43 = vector.extract_strided_slice %42 {offsets = [0, 0], sizes = [20, 22], strides = [1, 1]} : vector<88x66xf32> to vector<20x22xf32>
    %44 = vector.extract_strided_slice %42 {offsets = [1, 0], sizes = [20, 22], strides = [1, 1]} : vector<88x66xf32> to vector<20x22xf32>
    %45 = vector.extract_strided_slice %42 {offsets = [2, 0], sizes = [20, 22], strides = [1, 1]} : vector<88x66xf32> to vector<20x22xf32>
    %46 = vector.extract_strided_slice %42 {offsets = [0, 22], sizes = [20, 22], strides = [1, 1]} : vector<88x66xf32> to vector<20x22xf32>
    %47 = vector.extract_strided_slice %42 {offsets = [1, 22], sizes = [20, 22], strides = [1, 1]} : vector<88x66xf32> to vector<20x22xf32>
    %48 = vector.extract_strided_slice %42 {offsets = [2, 22], sizes = [20, 22], strides = [1, 1]} : vector<88x66xf32> to vector<20x22xf32>
    %49 = vector.extract_strided_slice %42 {offsets = [0, 44], sizes = [20, 22], strides = [1, 1]} : vector<88x66xf32> to vector<20x22xf32>
    %50 = vector.extract_strided_slice %42 {offsets = [1, 44], sizes = [20, 22], strides = [1, 1]} : vector<88x66xf32> to vector<20x22xf32>
    %51 = vector.extract_strided_slice %42 {offsets = [2, 44], sizes = [20, 22], strides = [1, 1]} : vector<88x66xf32> to vector<20x22xf32>
    %52 = tpu.concatenate %43, %44, %45, %46, %47, %48, %49, %50, %51 in 1 : vector<20x22xf32>, vector<20x22xf32>, vector<20x22xf32>, vector<20x22xf32>, vector<20x22xf32>, vector<20x22xf32>, vector<20x22xf32>, vector<20x22xf32>, vector<20x22xf32> -> vector<20x198xf32>
    %53 = vector.extract_strided_slice %42 {offsets = [22, 0], sizes = [20, 22], strides = [1, 1]} : vector<88x66xf32> to vector<20x22xf32>
    %54 = vector.extract_strided_slice %42 {offsets = [23, 0], sizes = [20, 22], strides = [1, 1]} : vector<88x66xf32> to vector<20x22xf32>
    %55 = vector.extract_strided_slice %42 {offsets = [24, 0], sizes = [20, 22], strides = [1, 1]} : vector<88x66xf32> to vector<20x22xf32>
    %56 = vector.extract_strided_slice %42 {offsets = [22, 22], sizes = [20, 22], strides = [1, 1]} : vector<88x66xf32> to vector<20x22xf32>
    %57 = vector.extract_strided_slice %42 {offsets = [23, 22], sizes = [20, 22], strides = [1, 1]} : vector<88x66xf32> to vector<20x22xf32>
    %58 = vector.extract_strided_slice %42 {offsets = [24, 22], sizes = [20, 22], strides = [1, 1]} : vector<88x66xf32> to vector<20x22xf32>
    %59 = vector.extract_strided_slice %42 {offsets = [22, 44], sizes = [20, 22], strides = [1, 1]} : vector<88x66xf32> to vector<20x22xf32>
    %60 = vector.extract_strided_slice %42 {offsets = [23, 44], sizes = [20, 22], strides = [1, 1]} : vector<88x66xf32> to vector<20x22xf32>
    %61 = vector.extract_strided_slice %42 {offsets = [24, 44], sizes = [20, 22], strides = [1, 1]} : vector<88x66xf32> to vector<20x22xf32>
    %62 = tpu.concatenate %53, %54, %55, %56, %57, %58, %59, %60, %61 in 1 : vector<20x22xf32>, vector<20x22xf32>, vector<20x22xf32>, vector<20x22xf32>, vector<20x22xf32>, vector<20x22xf32>, vector<20x22xf32>, vector<20x22xf32>, vector<20x22xf32> -> vector<20x198xf32>
    %63 = vector.extract_strided_slice %42 {offsets = [44, 0], sizes = [20, 22], strides = [1, 1]} : vector<88x66xf32> to vector<20x22xf32>
    %64 = vector.extract_strided_slice %42 {offsets = [45, 0], sizes = [20, 22], strides = [1, 1]} : vector<88x66xf32> to vector<20x22xf32>
    %65 = vector.extract_strided_slice %42 {offsets = [46, 0], sizes = [20, 22], strides = [1, 1]} : vector<88x66xf32> to vector<20x22xf32>
    %66 = vector.extract_strided_slice %42 {offsets = [44, 22], sizes = [20, 22], strides = [1, 1]} : vector<88x66xf32> to vector<20x22xf32>
    %67 = vector.extract_strided_slice %42 {offsets = [45, 22], sizes = [20, 22], strides = [1, 1]} : vector<88x66xf32> to vector<20x22xf32>
    %68 = vector.extract_strided_slice %42 {offsets = [46, 22], sizes = [20, 22], strides = [1, 1]} : vector<88x66xf32> to vector<20x22xf32>
    %69 = vector.extract_strided_slice %42 {offsets = [44, 44], sizes = [20, 22], strides = [1, 1]} : vector<88x66xf32> to vector<20x22xf32>
    %70 = vector.extract_strided_slice %42 {offsets = [45, 44], sizes = [20, 22], strides = [1, 1]} : vector<88x66xf32> to vector<20x22xf32>
    %71 = vector.extract_strided_slice %42 {offsets = [46, 44], sizes = [20, 22], strides = [1, 1]} : vector<88x66xf32> to vector<20x22xf32>
    %72 = tpu.concatenate %63, %64, %65, %66, %67, %68, %69, %70, %71 in 1 : vector<20x22xf32>, vector<20x22xf32>, vector<20x22xf32>, vector<20x22xf32>, vector<20x22xf32>, vector<20x22xf32>, vector<20x22xf32>, vector<20x22xf32>, vector<20x22xf32> -> vector<20x198xf32>
    %73 = vector.extract_strided_slice %42 {offsets = [66, 0], sizes = [20, 22], strides = [1, 1]} : vector<88x66xf32> to vector<20x22xf32>
    %74 = vector.extract_strided_slice %42 {offsets = [67, 0], sizes = [20, 22], strides = [1, 1]} : vector<88x66xf32> to vector<20x22xf32>
    %75 = vector.extract_strided_slice %42 {offsets = [68, 0], sizes = [20, 22], strides = [1, 1]} : vector<88x66xf32> to vector<20x22xf32>
    %76 = vector.extract_strided_slice %42 {offsets = [66, 22], sizes = [20, 22], strides = [1, 1]} : vector<88x66xf32> to vector<20x22xf32>
    %77 = vector.extract_strided_slice %42 {offsets = [67, 22], sizes = [20, 22], strides = [1, 1]} : vector<88x66xf32> to vector<20x22xf32>
    %78 = vector.extract_strided_slice %42 {offsets = [68, 22], sizes = [20, 22], strides = [1, 1]} : vector<88x66xf32> to vector<20x22xf32>
    %79 = vector.extract_strided_slice %42 {offsets = [66, 44], sizes = [20, 22], strides = [1, 1]} : vector<88x66xf32> to vector<20x22xf32>
    %80 = vector.extract_strided_slice %42 {offsets = [67, 44], sizes = [20, 22], strides = [1, 1]} : vector<88x66xf32> to vector<20x22xf32>
    %81 = vector.extract_strided_slice %42 {offsets = [68, 44], sizes = [20, 22], strides = [1, 1]} : vector<88x66xf32> to vector<20x22xf32>
    %82 = tpu.concatenate %73, %74, %75, %76, %77, %78, %79, %80, %81 in 1 : vector<20x22xf32>, vector<20x22xf32>, vector<20x22xf32>, vector<20x22xf32>, vector<20x22xf32>, vector<20x22xf32>, vector<20x22xf32>, vector<20x22xf32>, vector<20x22xf32> -> vector<20x198xf32>
    %83 = tpu.concatenate %52, %62, %72, %82 in 0 : vector<20x198xf32>, vector<20x198xf32>, vector<20x198xf32>, vector<20x198xf32> -> vector<80x198xf32>
    %c0_12 = arith.constant 0 : index
    %c0_13 = arith.constant 0 : index
    %84 = vector.load %arg6[%c0_12, %c0_13] : memref<198x140xf32, #tpu.memory_space<vmem>>, vector<198x140xf32>
    %cst_14 = arith.constant dense<0.000000e+00> : vector<80x140xf32>
    %85 = tpu.matmul %83, %84, %cst_14 {dimension_numbers = #tpu.dot_dimension_numbers<[1], [0], [0], [1], [0, 0, 1, 1], [], []>} : vector<80x198xf32>, vector<198x140xf32>, vector<80x140xf32> -> vector<80x140xf32>
    %c0_15 = arith.constant 0 : index
    %c0_16 = arith.constant 0 : index
    %86 = vector.load %arg7[%c0_15, %c0_16] : memref<1x140xf32, #tpu.memory_space<vmem>>, vector<1x140xf32>
    %87 = vector.broadcast %86 : vector<1x140xf32> to vector<80x140xf32>
    %88 = arith.addf %85, %87 : vector<80x140xf32>
    %cst_17 = arith.constant 0.000000e+00 : f32
    %89 = vector.broadcast %cst_17 : f32 to vector<80x140xf32>
    %90 = arith.maximumf %88, %89 : vector<80x140xf32>
    %c0_18 = arith.constant 0 : index
    %c0_19 = arith.constant 0 : index
    %91 = vector.load %arg8[%c0_18, %c0_19] : memref<140x140xf32, #tpu.memory_space<vmem>>, vector<140x140xf32>
    %cst_20 = arith.constant dense<0.000000e+00> : vector<80x140xf32>
    %92 = tpu.matmul %90, %91, %cst_20 {dimension_numbers = #tpu.dot_dimension_numbers<[1], [0], [0], [1], [0, 0, 1, 1], [], []>} : vector<80x140xf32>, vector<140x140xf32>, vector<80x140xf32> -> vector<80x140xf32>
    %93 = vector.extract_strided_slice %92 {offsets = [0, 0], sizes = [80, 70], strides = [1, 1]} : vector<80x140xf32> to vector<80x70xf32>
    %94 = vector.extract_strided_slice %92 {offsets = [0, 70], sizes = [80, 70], strides = [1, 1]} : vector<80x140xf32> to vector<80x70xf32>
    %95 = arith.maximumf %93, %94 : vector<80x70xf32>
    %c0_21 = arith.constant 0 : index
    %c0_22 = arith.constant 0 : index
    %96 = vector.load %arg9[%c0_21, %c0_22] : memref<80x80xf32, #tpu.memory_space<vmem>>, vector<80x80xf32>
    %cst_23 = arith.constant dense<0.000000e+00> : vector<80x70xf32>
    %97 = tpu.matmul %96, %95, %cst_23 {dimension_numbers = #tpu.dot_dimension_numbers<[1], [0], [0], [1], [0, 0, 1, 1], [], []>} : vector<80x80xf32>, vector<80x70xf32>, vector<80x70xf32> -> vector<80x70xf32>
    %98 = vector.extract_strided_slice %97 {offsets = [0, 0], sizes = [40, 70], strides = [1, 1]} : vector<80x70xf32> to vector<40x70xf32>
    %99 = vector.extract_strided_slice %97 {offsets = [40, 0], sizes = [40, 70], strides = [1, 1]} : vector<80x70xf32> to vector<40x70xf32>
    %100 = arith.maximumf %98, %99 : vector<40x70xf32>
    %101 = vector.extract_strided_slice %100 {offsets = [0, 0], sizes = [8, 10], strides = [1, 1]} : vector<40x70xf32> to vector<8x10xf32>
    %102 = vector.extract_strided_slice %100 {offsets = [1, 0], sizes = [8, 10], strides = [1, 1]} : vector<40x70xf32> to vector<8x10xf32>
    %103 = vector.extract_strided_slice %100 {offsets = [2, 0], sizes = [8, 10], strides = [1, 1]} : vector<40x70xf32> to vector<8x10xf32>
    %104 = vector.extract_strided_slice %100 {offsets = [0, 10], sizes = [8, 10], strides = [1, 1]} : vector<40x70xf32> to vector<8x10xf32>
    %105 = vector.extract_strided_slice %100 {offsets = [1, 10], sizes = [8, 10], strides = [1, 1]} : vector<40x70xf32> to vector<8x10xf32>
    %106 = vector.extract_strided_slice %100 {offsets = [2, 10], sizes = [8, 10], strides = [1, 1]} : vector<40x70xf32> to vector<8x10xf32>
    %107 = vector.extract_strided_slice %100 {offsets = [0, 20], sizes = [8, 10], strides = [1, 1]} : vector<40x70xf32> to vector<8x10xf32>
    %108 = vector.extract_strided_slice %100 {offsets = [1, 20], sizes = [8, 10], strides = [1, 1]} : vector<40x70xf32> to vector<8x10xf32>
    %109 = vector.extract_strided_slice %100 {offsets = [2, 20], sizes = [8, 10], strides = [1, 1]} : vector<40x70xf32> to vector<8x10xf32>
    %110 = vector.extract_strided_slice %100 {offsets = [0, 30], sizes = [8, 10], strides = [1, 1]} : vector<40x70xf32> to vector<8x10xf32>
    %111 = vector.extract_strided_slice %100 {offsets = [1, 30], sizes = [8, 10], strides = [1, 1]} : vector<40x70xf32> to vector<8x10xf32>
    %112 = vector.extract_strided_slice %100 {offsets = [2, 30], sizes = [8, 10], strides = [1, 1]} : vector<40x70xf32> to vector<8x10xf32>
    %113 = vector.extract_strided_slice %100 {offsets = [0, 40], sizes = [8, 10], strides = [1, 1]} : vector<40x70xf32> to vector<8x10xf32>
    %114 = vector.extract_strided_slice %100 {offsets = [1, 40], sizes = [8, 10], strides = [1, 1]} : vector<40x70xf32> to vector<8x10xf32>
    %115 = vector.extract_strided_slice %100 {offsets = [2, 40], sizes = [8, 10], strides = [1, 1]} : vector<40x70xf32> to vector<8x10xf32>
    %116 = vector.extract_strided_slice %100 {offsets = [0, 50], sizes = [8, 10], strides = [1, 1]} : vector<40x70xf32> to vector<8x10xf32>
    %117 = vector.extract_strided_slice %100 {offsets = [1, 50], sizes = [8, 10], strides = [1, 1]} : vector<40x70xf32> to vector<8x10xf32>
    %118 = vector.extract_strided_slice %100 {offsets = [2, 50], sizes = [8, 10], strides = [1, 1]} : vector<40x70xf32> to vector<8x10xf32>
    %119 = vector.extract_strided_slice %100 {offsets = [0, 60], sizes = [8, 10], strides = [1, 1]} : vector<40x70xf32> to vector<8x10xf32>
    %120 = vector.extract_strided_slice %100 {offsets = [1, 60], sizes = [8, 10], strides = [1, 1]} : vector<40x70xf32> to vector<8x10xf32>
    %121 = vector.extract_strided_slice %100 {offsets = [2, 60], sizes = [8, 10], strides = [1, 1]} : vector<40x70xf32> to vector<8x10xf32>
    %122 = tpu.concatenate %101, %102, %103, %104, %105, %106, %107, %108, %109, %110, %111, %112, %113, %114, %115, %116 in 1 : vector<8x10xf32>, vector<8x10xf32>, vector<8x10xf32>, vector<8x10xf32>, vector<8x10xf32>, vector<8x10xf32>, vector<8x10xf32>, vector<8x10xf32>, vector<8x10xf32>, vector<8x10xf32>, vector<8x10xf32>, vector<8x10xf32>, vector<8x10xf32>, vector<8x10xf32>, vector<8x10xf32>, vector<8x10xf32> -> vector<8x160xf32>
    %123 = tpu.concatenate %117, %118, %119, %120, %121 in 1 : vector<8x10xf32>, vector<8x10xf32>, vector<8x10xf32>, vector<8x10xf32>, vector<8x10xf32> -> vector<8x50xf32>
    %124 = tpu.concatenate %122, %123 in 1 : vector<8x160xf32>, vector<8x50xf32> -> vector<8x210xf32>
    %125 = vector.extract_strided_slice %100 {offsets = [10, 0], sizes = [8, 10], strides = [1, 1]} : vector<40x70xf32> to vector<8x10xf32>
    %126 = vector.extract_strided_slice %100 {offsets = [11, 0], sizes = [8, 10], strides = [1, 1]} : vector<40x70xf32> to vector<8x10xf32>
    %127 = vector.extract_strided_slice %100 {offsets = [12, 0], sizes = [8, 10], strides = [1, 1]} : vector<40x70xf32> to vector<8x10xf32>
    %128 = vector.extract_strided_slice %100 {offsets = [10, 10], sizes = [8, 10], strides = [1, 1]} : vector<40x70xf32> to vector<8x10xf32>
    %129 = vector.extract_strided_slice %100 {offsets = [11, 10], sizes = [8, 10], strides = [1, 1]} : vector<40x70xf32> to vector<8x10xf32>
    %130 = vector.extract_strided_slice %100 {offsets = [12, 10], sizes = [8, 10], strides = [1, 1]} : vector<40x70xf32> to vector<8x10xf32>
    %131 = vector.extract_strided_slice %100 {offsets = [10, 20], sizes = [8, 10], strides = [1, 1]} : vector<40x70xf32> to vector<8x10xf32>
    %132 = vector.extract_strided_slice %100 {offsets = [11, 20], sizes = [8, 10], strides = [1, 1]} : vector<40x70xf32> to vector<8x10xf32>
    %133 = vector.extract_strided_slice %100 {offsets = [12, 20], sizes = [8, 10], strides = [1, 1]} : vector<40x70xf32> to vector<8x10xf32>
    %134 = vector.extract_strided_slice %100 {offsets = [10, 30], sizes = [8, 10], strides = [1, 1]} : vector<40x70xf32> to vector<8x10xf32>
    %135 = vector.extract_strided_slice %100 {offsets = [11, 30], sizes = [8, 10], strides = [1, 1]} : vector<40x70xf32> to vector<8x10xf32>
    %136 = vector.extract_strided_slice %100 {offsets = [12, 30], sizes = [8, 10], strides = [1, 1]} : vector<40x70xf32> to vector<8x10xf32>
    %137 = vector.extract_strided_slice %100 {offsets = [10, 40], sizes = [8, 10], strides = [1, 1]} : vector<40x70xf32> to vector<8x10xf32>
    %138 = vector.extract_strided_slice %100 {offsets = [11, 40], sizes = [8, 10], strides = [1, 1]} : vector<40x70xf32> to vector<8x10xf32>
    %139 = vector.extract_strided_slice %100 {offsets = [12, 40], sizes = [8, 10], strides = [1, 1]} : vector<40x70xf32> to vector<8x10xf32>
    %140 = vector.extract_strided_slice %100 {offsets = [10, 50], sizes = [8, 10], strides = [1, 1]} : vector<40x70xf32> to vector<8x10xf32>
    %141 = vector.extract_strided_slice %100 {offsets = [11, 50], sizes = [8, 10], strides = [1, 1]} : vector<40x70xf32> to vector<8x10xf32>
    %142 = vector.extract_strided_slice %100 {offsets = [12, 50], sizes = [8, 10], strides = [1, 1]} : vector<40x70xf32> to vector<8x10xf32>
    %143 = vector.extract_strided_slice %100 {offsets = [10, 60], sizes = [8, 10], strides = [1, 1]} : vector<40x70xf32> to vector<8x10xf32>
    %144 = vector.extract_strided_slice %100 {offsets = [11, 60], sizes = [8, 10], strides = [1, 1]} : vector<40x70xf32> to vector<8x10xf32>
    %145 = vector.extract_strided_slice %100 {offsets = [12, 60], sizes = [8, 10], strides = [1, 1]} : vector<40x70xf32> to vector<8x10xf32>
    %146 = tpu.concatenate %125, %126, %127, %128, %129, %130, %131, %132, %133, %134, %135, %136, %137, %138, %139, %140 in 1 : vector<8x10xf32>, vector<8x10xf32>, vector<8x10xf32>, vector<8x10xf32>, vector<8x10xf32>, vector<8x10xf32>, vector<8x10xf32>, vector<8x10xf32>, vector<8x10xf32>, vector<8x10xf32>, vector<8x10xf32>, vector<8x10xf32>, vector<8x10xf32>, vector<8x10xf32>, vector<8x10xf32>, vector<8x10xf32> -> vector<8x160xf32>
    %147 = tpu.concatenate %141, %142, %143, %144, %145 in 1 : vector<8x10xf32>, vector<8x10xf32>, vector<8x10xf32>, vector<8x10xf32>, vector<8x10xf32> -> vector<8x50xf32>
    %148 = tpu.concatenate %146, %147 in 1 : vector<8x160xf32>, vector<8x50xf32> -> vector<8x210xf32>
    %149 = vector.extract_strided_slice %100 {offsets = [20, 0], sizes = [8, 10], strides = [1, 1]} : vector<40x70xf32> to vector<8x10xf32>
    %150 = vector.extract_strided_slice %100 {offsets = [21, 0], sizes = [8, 10], strides = [1, 1]} : vector<40x70xf32> to vector<8x10xf32>
    %151 = vector.extract_strided_slice %100 {offsets = [22, 0], sizes = [8, 10], strides = [1, 1]} : vector<40x70xf32> to vector<8x10xf32>
    %152 = vector.extract_strided_slice %100 {offsets = [20, 10], sizes = [8, 10], strides = [1, 1]} : vector<40x70xf32> to vector<8x10xf32>
    %153 = vector.extract_strided_slice %100 {offsets = [21, 10], sizes = [8, 10], strides = [1, 1]} : vector<40x70xf32> to vector<8x10xf32>
    %154 = vector.extract_strided_slice %100 {offsets = [22, 10], sizes = [8, 10], strides = [1, 1]} : vector<40x70xf32> to vector<8x10xf32>
    %155 = vector.extract_strided_slice %100 {offsets = [20, 20], sizes = [8, 10], strides = [1, 1]} : vector<40x70xf32> to vector<8x10xf32>
    %156 = vector.extract_strided_slice %100 {offsets = [21, 20], sizes = [8, 10], strides = [1, 1]} : vector<40x70xf32> to vector<8x10xf32>
    %157 = vector.extract_strided_slice %100 {offsets = [22, 20], sizes = [8, 10], strides = [1, 1]} : vector<40x70xf32> to vector<8x10xf32>
    %158 = vector.extract_strided_slice %100 {offsets = [20, 30], sizes = [8, 10], strides = [1, 1]} : vector<40x70xf32> to vector<8x10xf32>
    %159 = vector.extract_strided_slice %100 {offsets = [21, 30], sizes = [8, 10], strides = [1, 1]} : vector<40x70xf32> to vector<8x10xf32>
    %160 = vector.extract_strided_slice %100 {offsets = [22, 30], sizes = [8, 10], strides = [1, 1]} : vector<40x70xf32> to vector<8x10xf32>
    %161 = vector.extract_strided_slice %100 {offsets = [20, 40], sizes = [8, 10], strides = [1, 1]} : vector<40x70xf32> to vector<8x10xf32>
    %162 = vector.extract_strided_slice %100 {offsets = [21, 40], sizes = [8, 10], strides = [1, 1]} : vector<40x70xf32> to vector<8x10xf32>
    %163 = vector.extract_strided_slice %100 {offsets = [22, 40], sizes = [8, 10], strides = [1, 1]} : vector<40x70xf32> to vector<8x10xf32>
    %164 = vector.extract_strided_slice %100 {offsets = [20, 50], sizes = [8, 10], strides = [1, 1]} : vector<40x70xf32> to vector<8x10xf32>
    %165 = vector.extract_strided_slice %100 {offsets = [21, 50], sizes = [8, 10], strides = [1, 1]} : vector<40x70xf32> to vector<8x10xf32>
    %166 = vector.extract_strided_slice %100 {offsets = [22, 50], sizes = [8, 10], strides = [1, 1]} : vector<40x70xf32> to vector<8x10xf32>
    %167 = vector.extract_strided_slice %100 {offsets = [20, 60], sizes = [8, 10], strides = [1, 1]} : vector<40x70xf32> to vector<8x10xf32>
    %168 = vector.extract_strided_slice %100 {offsets = [21, 60], sizes = [8, 10], strides = [1, 1]} : vector<40x70xf32> to vector<8x10xf32>
    %169 = vector.extract_strided_slice %100 {offsets = [22, 60], sizes = [8, 10], strides = [1, 1]} : vector<40x70xf32> to vector<8x10xf32>
    %170 = tpu.concatenate %149, %150, %151, %152, %153, %154, %155, %156, %157, %158, %159, %160, %161, %162, %163, %164 in 1 : vector<8x10xf32>, vector<8x10xf32>, vector<8x10xf32>, vector<8x10xf32>, vector<8x10xf32>, vector<8x10xf32>, vector<8x10xf32>, vector<8x10xf32>, vector<8x10xf32>, vector<8x10xf32>, vector<8x10xf32>, vector<8x10xf32>, vector<8x10xf32>, vector<8x10xf32>, vector<8x10xf32>, vector<8x10xf32> -> vector<8x160xf32>
    %171 = tpu.concatenate %165, %166, %167, %168, %169 in 1 : vector<8x10xf32>, vector<8x10xf32>, vector<8x10xf32>, vector<8x10xf32>, vector<8x10xf32> -> vector<8x50xf32>
    %172 = tpu.concatenate %170, %171 in 1 : vector<8x160xf32>, vector<8x50xf32> -> vector<8x210xf32>
    %173 = vector.extract_strided_slice %100 {offsets = [30, 0], sizes = [8, 10], strides = [1, 1]} : vector<40x70xf32> to vector<8x10xf32>
    %174 = vector.extract_strided_slice %100 {offsets = [31, 0], sizes = [8, 10], strides = [1, 1]} : vector<40x70xf32> to vector<8x10xf32>
    %175 = vector.extract_strided_slice %100 {offsets = [32, 0], sizes = [8, 10], strides = [1, 1]} : vector<40x70xf32> to vector<8x10xf32>
    %176 = vector.extract_strided_slice %100 {offsets = [30, 10], sizes = [8, 10], strides = [1, 1]} : vector<40x70xf32> to vector<8x10xf32>
    %177 = vector.extract_strided_slice %100 {offsets = [31, 10], sizes = [8, 10], strides = [1, 1]} : vector<40x70xf32> to vector<8x10xf32>
    %178 = vector.extract_strided_slice %100 {offsets = [32, 10], sizes = [8, 10], strides = [1, 1]} : vector<40x70xf32> to vector<8x10xf32>
    %179 = vector.extract_strided_slice %100 {offsets = [30, 20], sizes = [8, 10], strides = [1, 1]} : vector<40x70xf32> to vector<8x10xf32>
    %180 = vector.extract_strided_slice %100 {offsets = [31, 20], sizes = [8, 10], strides = [1, 1]} : vector<40x70xf32> to vector<8x10xf32>
    %181 = vector.extract_strided_slice %100 {offsets = [32, 20], sizes = [8, 10], strides = [1, 1]} : vector<40x70xf32> to vector<8x10xf32>
    %182 = vector.extract_strided_slice %100 {offsets = [30, 30], sizes = [8, 10], strides = [1, 1]} : vector<40x70xf32> to vector<8x10xf32>
    %183 = vector.extract_strided_slice %100 {offsets = [31, 30], sizes = [8, 10], strides = [1, 1]} : vector<40x70xf32> to vector<8x10xf32>
    %184 = vector.extract_strided_slice %100 {offsets = [32, 30], sizes = [8, 10], strides = [1, 1]} : vector<40x70xf32> to vector<8x10xf32>
    %185 = vector.extract_strided_slice %100 {offsets = [30, 40], sizes = [8, 10], strides = [1, 1]} : vector<40x70xf32> to vector<8x10xf32>
    %186 = vector.extract_strided_slice %100 {offsets = [31, 40], sizes = [8, 10], strides = [1, 1]} : vector<40x70xf32> to vector<8x10xf32>
    %187 = vector.extract_strided_slice %100 {offsets = [32, 40], sizes = [8, 10], strides = [1, 1]} : vector<40x70xf32> to vector<8x10xf32>
    %188 = vector.extract_strided_slice %100 {offsets = [30, 50], sizes = [8, 10], strides = [1, 1]} : vector<40x70xf32> to vector<8x10xf32>
    %189 = vector.extract_strided_slice %100 {offsets = [31, 50], sizes = [8, 10], strides = [1, 1]} : vector<40x70xf32> to vector<8x10xf32>
    %190 = vector.extract_strided_slice %100 {offsets = [32, 50], sizes = [8, 10], strides = [1, 1]} : vector<40x70xf32> to vector<8x10xf32>
    %191 = vector.extract_strided_slice %100 {offsets = [30, 60], sizes = [8, 10], strides = [1, 1]} : vector<40x70xf32> to vector<8x10xf32>
    %192 = vector.extract_strided_slice %100 {offsets = [31, 60], sizes = [8, 10], strides = [1, 1]} : vector<40x70xf32> to vector<8x10xf32>
    %193 = vector.extract_strided_slice %100 {offsets = [32, 60], sizes = [8, 10], strides = [1, 1]} : vector<40x70xf32> to vector<8x10xf32>
    %194 = tpu.concatenate %173, %174, %175, %176, %177, %178, %179, %180, %181, %182, %183, %184, %185, %186, %187, %188 in 1 : vector<8x10xf32>, vector<8x10xf32>, vector<8x10xf32>, vector<8x10xf32>, vector<8x10xf32>, vector<8x10xf32>, vector<8x10xf32>, vector<8x10xf32>, vector<8x10xf32>, vector<8x10xf32>, vector<8x10xf32>, vector<8x10xf32>, vector<8x10xf32>, vector<8x10xf32>, vector<8x10xf32>, vector<8x10xf32> -> vector<8x160xf32>
    %195 = tpu.concatenate %189, %190, %191, %192, %193 in 1 : vector<8x10xf32>, vector<8x10xf32>, vector<8x10xf32>, vector<8x10xf32>, vector<8x10xf32> -> vector<8x50xf32>
    %196 = tpu.concatenate %194, %195 in 1 : vector<8x160xf32>, vector<8x50xf32> -> vector<8x210xf32>
    %197 = tpu.concatenate %124, %148, %172, %196 in 0 : vector<8x210xf32>, vector<8x210xf32>, vector<8x210xf32>, vector<8x210xf32> -> vector<32x210xf32>
    %c0_24 = arith.constant 0 : index
    %c0_25 = arith.constant 0 : index
    %198 = vector.load %arg10[%c0_24, %c0_25] : memref<210x96xf32, #tpu.memory_space<vmem>>, vector<210x96xf32>
    %cst_26 = arith.constant dense<0.000000e+00> : vector<32x96xf32>
    %199 = tpu.matmul %197, %198, %cst_26 {dimension_numbers = #tpu.dot_dimension_numbers<[1], [0], [0], [1], [0, 0, 1, 1], [], []>} : vector<32x210xf32>, vector<210x96xf32>, vector<32x96xf32> -> vector<32x96xf32>
    %c0_27 = arith.constant 0 : index
    %c0_28 = arith.constant 0 : index
    %200 = vector.load %arg11[%c0_27, %c0_28] : memref<1x96xf32, #tpu.memory_space<vmem>>, vector<1x96xf32>
    %201 = vector.broadcast %200 : vector<1x96xf32> to vector<32x96xf32>
    %202 = arith.addf %199, %201 : vector<32x96xf32>
    %cst_29 = arith.constant 0.000000e+00 : f32
    %203 = vector.broadcast %cst_29 : f32 to vector<32x96xf32>
    %204 = arith.maximumf %202, %203 : vector<32x96xf32>
    %c0_30 = arith.constant 0 : index
    %c0_31 = arith.constant 0 : index
    %205 = vector.load %arg12[%c0_30, %c0_31] : memref<96x96xf32, #tpu.memory_space<vmem>>, vector<96x96xf32>
    %cst_32 = arith.constant dense<0.000000e+00> : vector<32x96xf32>
    %206 = tpu.matmul %204, %205, %cst_32 {dimension_numbers = #tpu.dot_dimension_numbers<[1], [0], [0], [1], [0, 0, 1, 1], [], []>} : vector<32x96xf32>, vector<96x96xf32>, vector<32x96xf32> -> vector<32x96xf32>
    %207 = vector.extract_strided_slice %206 {offsets = [0, 0], sizes = [32, 48], strides = [1, 1]} : vector<32x96xf32> to vector<32x48xf32>
    %208 = vector.extract_strided_slice %206 {offsets = [0, 48], sizes = [32, 48], strides = [1, 1]} : vector<32x96xf32> to vector<32x48xf32>
    %209 = arith.maximumf %207, %208 : vector<32x48xf32>
    %c0_33 = arith.constant 0 : index
    %c0_34 = arith.constant 0 : index
    %210 = vector.load %arg13[%c0_33, %c0_34] : memref<32x32xf32, #tpu.memory_space<vmem>>, vector<32x32xf32>
    %cst_35 = arith.constant dense<0.000000e+00> : vector<32x48xf32>
    %211 = tpu.matmul %210, %209, %cst_35 {dimension_numbers = #tpu.dot_dimension_numbers<[1], [0], [0], [1], [0, 0, 1, 1], [], []>} : vector<32x32xf32>, vector<32x48xf32>, vector<32x48xf32> -> vector<32x48xf32>
    %212 = vector.extract_strided_slice %211 {offsets = [0, 0], sizes = [16, 48], strides = [1, 1]} : vector<32x48xf32> to vector<16x48xf32>
    %213 = vector.extract_strided_slice %211 {offsets = [16, 0], sizes = [16, 48], strides = [1, 1]} : vector<32x48xf32> to vector<16x48xf32>
    %214 = arith.maximumf %212, %213 : vector<16x48xf32>
    %215 = vector.extract_strided_slice %214 {offsets = [0, 0], sizes = [4, 48], strides = [1, 1]} : vector<16x48xf32> to vector<4x48xf32>
    %216 = vector.extract_strided_slice %214 {offsets = [4, 0], sizes = [4, 48], strides = [1, 1]} : vector<16x48xf32> to vector<4x48xf32>
    %217 = vector.extract_strided_slice %214 {offsets = [8, 0], sizes = [4, 48], strides = [1, 1]} : vector<16x48xf32> to vector<4x48xf32>
    %218 = vector.extract_strided_slice %214 {offsets = [12, 0], sizes = [4, 48], strides = [1, 1]} : vector<16x48xf32> to vector<4x48xf32>
    %219 = tpu.concatenate %215, %216, %217, %218 in 1 : vector<4x48xf32>, vector<4x48xf32>, vector<4x48xf32>, vector<4x48xf32> -> vector<4x192xf32>
    %c0_36 = arith.constant 0 : index
    %c0_37 = arith.constant 0 : index
    %220 = vector.load %arg14[%c0_36, %c0_37] : memref<192x40xf32, #tpu.memory_space<vmem>>, vector<192x40xf32>
    %cst_38 = arith.constant dense<0.000000e+00> : vector<4x40xf32>
    %221 = tpu.matmul %219, %220, %cst_38 {dimension_numbers = #tpu.dot_dimension_numbers<[1], [0], [0], [1], [0, 0, 1, 1], [], []>} : vector<4x192xf32>, vector<192x40xf32>, vector<4x40xf32> -> vector<4x40xf32>
    %c0_39 = arith.constant 0 : index
    %c0_40 = arith.constant 0 : index
    %222 = vector.load %arg15[%c0_39, %c0_40] : memref<1x40xf32, #tpu.memory_space<vmem>>, vector<1x40xf32>
    %223 = vector.broadcast %222 : vector<1x40xf32> to vector<4x40xf32>
    %224 = arith.addf %221, %223 : vector<4x40xf32>
    %cst_41 = arith.constant 0.000000e+00 : f32
    %225 = vector.broadcast %cst_41 : f32 to vector<4x40xf32>
    %226 = arith.maximumf %224, %225 : vector<4x40xf32>
    %c0_42 = arith.constant 0 : index
    %c0_43 = arith.constant 0 : index
    %227 = vector.load %arg16[%c0_42, %c0_43] : memref<40x3xf32, #tpu.memory_space<vmem>>, vector<40x3xf32>
    %cst_44 = arith.constant dense<0.000000e+00> : vector<4x3xf32>
    %228 = tpu.matmul %226, %227, %cst_44 {dimension_numbers = #tpu.dot_dimension_numbers<[1], [0], [0], [1], [0, 0, 1, 1], [], []>} : vector<4x40xf32>, vector<40x3xf32>, vector<4x3xf32> -> vector<4x3xf32>
    %c0_45 = arith.constant 0 : index
    %c0_46 = arith.constant 0 : index
    %229 = vector.load %arg17[%c0_45, %c0_46] : memref<1x3xf32, #tpu.memory_space<vmem>>, vector<1x3xf32>
    %230 = vector.broadcast %229 : vector<1x3xf32> to vector<4x3xf32>
    %231 = arith.addf %228, %230 : vector<4x3xf32>
    %cst_47 = arith.constant dense<0xFF800000> : vector<4xf32>
    %232 = vector.multi_reduction <maximumf>, %231, %cst_47 [1] : vector<4x3xf32> to vector<4xf32>
    %233 = vector.shape_cast %232 : vector<4xf32> to vector<4x1xf32>
    %234 = vector.broadcast %233 : vector<4x1xf32> to vector<4x3xf32>
    %235 = arith.subf %231, %234 : vector<4x3xf32>
    %236 = math.exp %235 : vector<4x3xf32>
    %cst_48 = arith.constant dense<0.000000e+00> : vector<4xf32>
    %237 = vector.multi_reduction <add>, %236, %cst_48 [1] : vector<4x3xf32> to vector<4xf32>
    %238 = vector.shape_cast %237 : vector<4xf32> to vector<4x1xf32>
    %239 = vector.broadcast %238 : vector<4x1xf32> to vector<4x3xf32>
    %240 = arith.divf %236, %239 : vector<4x3xf32>
    %c0_49 = arith.constant 0 : index
    %c0_50 = arith.constant 0 : index
    %c0_51 = arith.constant 0 : index
    %241 = vector.load %arg18[%c0_49, %c0_50, %c0_51] : memref<1x4x3xf32, #tpu.memory_space<vmem>>, vector<1x4x3xf32>
    %242 = vector.shape_cast %241 : vector<1x4x3xf32> to vector<4x3xf32>
    %243 = vector.shape_cast %240 : vector<4x3xf32> to vector<1x4x3xf32>
    tpu.vector_store %arg18[%c0_49, %c0_50, %c0_51], %243 {strides = array<i32>} : memref<1x4x3xf32, #tpu.memory_space<vmem>>, vector<1x4x3xf32>,
    return
  }
  func.func @transform_0(%arg0: i32) -> (i32, i32) {
    %c0_i32 = arith.constant 0 : i32
    %c0_i32_0 = arith.constant 0 : i32
    return %arg0, %c0_i32 : i32, i32
  }
  func.func @transform_1(%arg0: i32) -> (i32, i32) {
    %c0_i32 = arith.constant 0 : i32
    %c0_i32_0 = arith.constant 0 : i32
    %c0_i32_1 = arith.constant 0 : i32
    return %c0_i32, %c0_i32_0 : i32, i32
  }
  func.func @transform_2(%arg0: i32) -> (i32, i32) {
    %c0_i32 = arith.constant 0 : i32
    %c0_i32_0 = arith.constant 0 : i32
    %c0_i32_1 = arith.constant 0 : i32
    return %c0_i32, %c0_i32_0 : i32, i32
  }
  func.func @transform_3(%arg0: i32) -> (i32, i32) {
    %c0_i32 = arith.constant 0 : i32
    %c0_i32_0 = arith.constant 0 : i32
    %c0_i32_1 = arith.constant 0 : i32
    return %c0_i32, %c0_i32_0 : i32, i32
  }
  func.func @transform_4(%arg0: i32) -> (i32, i32) {
    %c0_i32 = arith.constant 0 : i32
    %c0_i32_0 = arith.constant 0 : i32
    %c0_i32_1 = arith.constant 0 : i32
    return %c0_i32, %c0_i32_0 : i32, i32
  }
  func.func @transform_5(%arg0: i32) -> (i32, i32) {
    %c0_i32 = arith.constant 0 : i32
    %c0_i32_0 = arith.constant 0 : i32
    %c0_i32_1 = arith.constant 0 : i32
    return %c0_i32, %c0_i32_0 : i32, i32
  }
  func.func @transform_6(%arg0: i32) -> (i32, i32) {
    %c0_i32 = arith.constant 0 : i32
    %c0_i32_0 = arith.constant 0 : i32
    %c0_i32_1 = arith.constant 0 : i32
    return %c0_i32, %c0_i32_0 : i32, i32
  }
  func.func @transform_7(%arg0: i32) -> (i32, i32) {
    %c0_i32 = arith.constant 0 : i32
    %c0_i32_0 = arith.constant 0 : i32
    %c0_i32_1 = arith.constant 0 : i32
    return %c0_i32, %c0_i32_0 : i32, i32
  }
  func.func @transform_8(%arg0: i32) -> (i32, i32) {
    %c0_i32 = arith.constant 0 : i32
    %c0_i32_0 = arith.constant 0 : i32
    %c0_i32_1 = arith.constant 0 : i32
    return %c0_i32, %c0_i32_0 : i32, i32
  }
  func.func @transform_9(%arg0: i32) -> (i32, i32) {
    %c0_i32 = arith.constant 0 : i32
    %c0_i32_0 = arith.constant 0 : i32
    %c0_i32_1 = arith.constant 0 : i32
    return %c0_i32, %c0_i32_0 : i32, i32
  }
  func.func @transform_10(%arg0: i32) -> (i32, i32) {
    %c0_i32 = arith.constant 0 : i32
    %c0_i32_0 = arith.constant 0 : i32
    %c0_i32_1 = arith.constant 0 : i32
    return %c0_i32, %c0_i32_0 : i32, i32
  }
  func.func @transform_11(%arg0: i32) -> (i32, i32) {
    %c0_i32 = arith.constant 0 : i32
    %c0_i32_0 = arith.constant 0 : i32
    %c0_i32_1 = arith.constant 0 : i32
    return %c0_i32, %c0_i32_0 : i32, i32
  }
  func.func @transform_12(%arg0: i32) -> (i32, i32) {
    %c0_i32 = arith.constant 0 : i32
    %c0_i32_0 = arith.constant 0 : i32
    %c0_i32_1 = arith.constant 0 : i32
    return %c0_i32, %c0_i32_0 : i32, i32
  }
  func.func @transform_13(%arg0: i32) -> (i32, i32) {
    %c0_i32 = arith.constant 0 : i32
    %c0_i32_0 = arith.constant 0 : i32
    %c0_i32_1 = arith.constant 0 : i32
    return %c0_i32, %c0_i32_0 : i32, i32
  }
  func.func @transform_14(%arg0: i32) -> (i32, i32) {
    %c0_i32 = arith.constant 0 : i32
    %c0_i32_0 = arith.constant 0 : i32
    %c0_i32_1 = arith.constant 0 : i32
    return %c0_i32, %c0_i32_0 : i32, i32
  }
  func.func @transform_15(%arg0: i32) -> (i32, i32) {
    %c0_i32 = arith.constant 0 : i32
    %c0_i32_0 = arith.constant 0 : i32
    %c0_i32_1 = arith.constant 0 : i32
    return %c0_i32, %c0_i32_0 : i32, i32
  }
  func.func @transform_16(%arg0: i32) -> (i32, i32) {
    %c0_i32 = arith.constant 0 : i32
    %c0_i32_0 = arith.constant 0 : i32
    %c0_i32_1 = arith.constant 0 : i32
    return %c0_i32, %c0_i32_0 : i32, i32
  }
  func.func @transform_17(%arg0: i32) -> (i32, i32, i32) {
    %c0_i32 = arith.constant 0 : i32
    %c0_i32_0 = arith.constant 0 : i32
    %c0_i32_1 = arith.constant 0 : i32
    return %arg0, %c0_i32, %c0_i32_0 : i32, i32, i32
  }
}

</mosaic_0001>

<llo_original>
// kernel: net_forward.1
$region0: #{net_forward.1}
  #allocation0 [shape = 'u32[]', space=smem, size = 0x4, offset = 0x4, fixed_abs, tag = 'smem constant byte address 0x4 - core index']
  #allocation1 [shape = 'u32[72,128]{1,0:T(1,128)}', space=vmem, size = 0x9000, scoped, tag = 'internal scratch']
  %s0 = inlined_call_operand.vmem [shape: f32[384,48], index: 0, kind: input, shape index: {}]
  %s1 = inlined_call_operand.vmem [shape: f32[240,132], index: 1, kind: input, shape index: {}]
  %s2 = inlined_call_operand.vmem [shape: f32[1,132], index: 2, kind: input, shape index: {}]
  %s3 = inlined_call_operand.vmem [shape: f32[132,132], index: 3, kind: input, shape index: {}]
  %s4 = inlined_call_operand.vmem [shape: f32[176,176], index: 4, kind: input, shape index: {}]
  %s5 = inlined_call_operand.vmem [shape: f32[198,140], index: 5, kind: input, shape index: {}]
  %s6 = inlined_call_operand.vmem [shape: f32[1,140], index: 6, kind: input, shape index: {}]
  %s7 = inlined_call_operand.vmem [shape: f32[140,140], index: 7, kind: input, shape index: {}]
  %s8 = inlined_call_operand.vmem [shape: f32[80,80], index: 8, kind: input, shape index: {}]
  %s9 = inlined_call_operand.vmem [shape: f32[210,96], index: 9, kind: input, shape index: {}]
  %s10 = inlined_call_operand.vmem [shape: f32[1,96], index: 10, kind: input, shape index: {}]
  %s11 = inlined_call_operand.vmem [shape: f32[96,96], index: 11, kind: input, shape index: {}]
  %s12 = inlined_call_operand.vmem [shape: f32[32,32], index: 12, kind: input, shape index: {}]
  %s13 = inlined_call_operand.vmem [shape: f32[192,40], index: 13, kind: input, shape index: {}]
  %s14 = inlined_call_operand.vmem [shape: f32[1,40], index: 14, kind: input, shape index: {}]
  %s15 = inlined_call_operand.vmem [shape: f32[40,3], index: 15, kind: input, shape index: {}]
  %s16 = inlined_call_operand.vmem [shape: f32[1,3], index: 16, kind: input, shape index: {}]
  %s17 = inlined_call_operand.vmem [shape: f32[2,4,3], index: 17, kind: output, shape index: {}]
  %s18 = sld [smem:[#allocation0]]
  $region101: #{net_forward.1} parent=0
    _
  %s20 = ssub.s32 1, %s18
  %s21 = scalar_select 0, %s20, %s18
  loop: start=0, step=1, limit=4
  $region2: #{net_forward.1} parent=0 // loop_pre_header
    _
  $region3: #{net_forward.1} parent=0 // loop_header
    %s23 = sphi 0, %s27
    %p24 = scmp.ge.s32.totalorder %s23, 4
    %s33 = sphi 0, %s35
    %s36 = sphi 0, %s33
    %s37 = sphi 0, %s36
    %s53 = sphi 0, %s37
    %s57 = sphi 0, %s57
    %s59 = sphi 0, %s57
    %s60 = sphi 0, %s59
    %s74 = sphi 0, %s60
    %s78 = sphi 0, %s78
    %s80 = sphi 0, %s78
    %s81 = sphi 0, %s80
    %s95 = sphi 0, %s81
    %s99 = sphi 0, %s99
    %s101 = sphi 0, %s99
    %s102 = sphi 0, %s101
    %s116 = sphi 0, %s102
    %s120 = sphi 0, %s120
    %s122 = sphi 0, %s120
    %s123 = sphi 0, %s122
    %s137 = sphi 0, %s123
    %s141 = sphi 0, %s141
    %s143 = sphi 0, %s141
    %s144 = sphi 0, %s143
    %s158 = sphi 0, %s144
    %s162 = sphi 0, %s162
    %s164 = sphi 0, %s162
    %s165 = sphi 0, %s164
    %s179 = sphi 0, %s165
    %s183 = sphi 0, %s183
    %s185 = sphi 0, %s183
    %s186 = sphi 0, %s185
    %s200 = sphi 0, %s186
    %s204 = sphi 0, %s204
    %s206 = sphi 0, %s204
    %s207 = sphi 0, %s206
    %s221 = sphi 0, %s207
    %s225 = sphi 0, %s225
    %s227 = sphi 0, %s225
    %s228 = sphi 0, %s227
    %s242 = sphi 0, %s228
    %s246 = sphi 0, %s246
    %s248 = sphi 0, %s246
    %s249 = sphi 0, %s248
    %s263 = sphi 0, %s249
    %s267 = sphi 0, %s267
    %s269 = sphi 0, %s267
    %s270 = sphi 0, %s269
    %s284 = sphi 0, %s270
    %s288 = sphi 0, %s288
    %s290 = sphi 0, %s288
    %s291 = sphi 0, %s290
    %s305 = sphi 0, %s291
    %s309 = sphi 0, %s309
    %s311 = sphi 0, %s309
    %s312 = sphi 0, %s311
    %s326 = sphi 0, %s312
    %s330 = sphi 0, %s330
    %s332 = sphi 0, %s330
    %s333 = sphi 0, %s332
    %s347 = sphi 0, %s333
    %s351 = sphi 0, %s351
    %s353 = sphi 0, %s351
    %s354 = sphi 0, %s353
    %s368 = sphi 0, %s354
    %s372 = sphi 0, %s372
    %s374 = sphi 0, %s372
    %s375 = sphi 0, %s374
    %s389 = sphi 0, %s375
    %s395 = sphi 0, %s397
    %s398 = sphi 0, %s395
    %s399 = sphi 0, %s398
    %s415 = sphi 0, %s399
  $region4: #{net_forward.1} parent=0 // loop_header_branch
    %26 = sbr.rel (%p24) target = $region8
  $region5: #{net_forward.1} parent=0 // loop_body
    %s28 = ssub.s32 %s23, 1
    %s29 = ssub.s32 %s23, 2
    %s30 = sadd.s32 %s23, 1
    %s31 = ssub.s32 %s23, %s30
    %p32 = scmp.eq.s32.totalorder %s31, 0
    %s34 = sadd.s32 %s33, 1
    %s35 = scalar_select %p32, %s33, %s34
    %p38 = pneg %p32
    %p39 = scmp.eq.s32.totalorder %s23, 1
    %p40 = por %p38, %p39
    %p41 = scmp.ne.s32.totalorder %s33, %s36
    %p42 = scmp.eq.s32.totalorder %s23, 0
    %p43 = por %p41, %p42
    %p44 = scmp.ne.s32.totalorder %s33, %s36
    %p45 = scmp.eq.s32.totalorder %s28, 1
    %p46 = por %p44, %p45
    %p47 = scmp.ne.s32.totalorder %s36, %s37
    %p48 = scmp.eq.s32.totalorder %s28, 0
    %p49 = por %p47, %p48
    %p50 = scmp.ne.s32.totalorder %s36, %s37
    %p51 = scmp.eq.s32.totalorder %s29, 1
    %p52 = por %p50, %p51
    %p54 = scmp.ne.s32.totalorder %s37, %s53
    %p55 = scmp.eq.s32.totalorder %s29, 0
    %p56 = por %p54, %p55
    %s58 = sadd.s32 %s57, 1
    %p61 = scmp.eq.s32.totalorder %s23, 1
    %p62 = scmp.ne.s32.totalorder %s57, %s59
    %p63 = scmp.eq.s32.totalorder %s23, 0
    %p64 = por %p62, %p63
    %p65 = scmp.ne.s32.totalorder %s57, %s59
    %p66 = scmp.eq.s32.totalorder %s28, 1
    %p67 = por %p65, %p66
    %p68 = scmp.ne.s32.totalorder %s59, %s60
    %p69 = scmp.eq.s32.totalorder %s28, 0
    %p70 = por %p68, %p69
    %p71 = scmp.ne.s32.totalorder %s59, %s60
    %p72 = scmp.eq.s32.totalorder %s29, 1
    %p73 = por %p71, %p72
    %p75 = scmp.ne.s32.totalorder %s60, %s74
    %p76 = scmp.eq.s32.totalorder %s29, 0
    %p77 = por %p75, %p76
    %s79 = sadd.s32 %s78, 1
    %p82 = scmp.eq.s32.totalorder %s23, 1
    %p83 = scmp.ne.s32.totalorder %s78, %s80
    %p84 = scmp.eq.s32.totalorder %s23, 0
    %p85 = por %p83, %p84
    %p86 = scmp.ne.s32.totalorder %s78, %s80
    %p87 = scmp.eq.s32.totalorder %s28, 1
    %p88 = por %p86, %p87
    %p89 = scmp.ne.s32.totalorder %s80, %s81
    %p90 = scmp.eq.s32.totalorder %s28, 0
    %p91 = por %p89, %p90
    %p92 = scmp.ne.s32.totalorder %s80, %s81
    %p93 = scmp.eq.s32.totalorder %s29, 1
    %p94 = por %p92, %p93
    %p96 = scmp.ne.s32.totalorder %s81, %s95
    %p97 = scmp.eq.s32.totalorder %s29, 0
    %p98 = por %p96, %p97
    %s100 = sadd.s32 %s99, 1
    %p103 = scmp.eq.s32.totalorder %s23, 1
    %p104 = scmp.ne.s32.totalorder %s99, %s101
    %p105 = scmp.eq.s32.totalorder %s23, 0
    %p106 = por %p104, %p105
    %p107 = scmp.ne.s32.totalorder %s99, %s101
    %p108 = scmp.eq.s32.totalorder %s28, 1
    %p109 = por %p107, %p108
    %p110 = scmp.ne.s32.totalorder %s101, %s102
    %p111 = scmp.eq.s32.totalorder %s28, 0
    %p112 = por %p110, %p111
    %p113 = scmp.ne.s32.totalorder %s101, %s102
    %p114 = scmp.eq.s32.totalorder %s29, 1
    %p115 = por %p113, %p114
    %p117 = scmp.ne.s32.totalorder %s102, %s116
    %p118 = scmp.eq.s32.totalorder %s29, 0
    %p119 = por %p117, %p118
    %s121 = sadd.s32 %s120, 1
    %p124 = scmp.eq.s32.totalorder %s23, 1
    %p125 = scmp.ne.s32.totalorder %s120, %s122
    %p126 = scmp.eq.s32.totalorder %s23, 0
    %p127 = por %p125, %p126
    %p128 = scmp.ne.s32.totalorder %s120, %s122
    %p129 = scmp.eq.s32.totalorder %s28, 1
    %p130 = por %p128, %p129
    %p131 = scmp.ne.s32.totalorder %s122, %s123
    %p132 = scmp.eq.s32.totalorder %s28, 0
    %p133 = por %p131, %p132
    %p134 = scmp.ne.s32.totalorder %s122, %s123
    %p135 = scmp.eq.s32.totalorder %s29, 1
    %p136 = por %p134, %p135
    %p138 = scmp.ne.s32.totalorder %s123, %s137
    %p139 = scmp.eq.s32.totalorder %s29, 0
    %p140 = por %p138, %p139
    %s142 = sadd.s32 %s141, 1
    %p145 = scmp.eq.s32.totalorder %s23, 1
    %p146 = scmp.ne.s32.totalorder %s141, %s143
    %p147 = scmp.eq.s32.totalorder %s23, 0
    %p148 = por %p146, %p147
    %p149 = scmp.ne.s32.totalorder %s141, %s143
    %p150 = scmp.eq.s32.totalorder %s28, 1
    %p151 = por %p149, %p150
    %p152 = scmp.ne.s32.totalorder %s143, %s144
    %p153 = scmp.eq.s32.totalorder %s28, 0
    %p154 = por %p152, %p153
    %p155 = scmp.ne.s32.totalorder %s143, %s144
    %p156 = scmp.eq.s32.totalorder %s29, 1
    %p157 = por %p155, %p156
    %p159 = scmp.ne.s32.totalorder %s144, %s158
    %p160 = scmp.eq.s32.totalorder %s29, 0
    %p161 = por %p159, %p160
    %s163 = sadd.s32 %s162, 1
    %p166 = scmp.eq.s32.totalorder %s23, 1
    %p167 = scmp.ne.s32.totalorder %s162, %s164
    %p168 = scmp.eq.s32.totalorder %s23, 0
    %p169 = por %p167, %p168
    %p170 = scmp.ne.s32.totalorder %s162, %s164
    %p171 = scmp.eq.s32.totalorder %s28, 1
    %p172 = por %p170, %p171
    %p173 = scmp.ne.s32.totalorder %s164, %s165
    %p174 = scmp.eq.s32.totalorder %s28, 0
    %p175 = por %p173, %p174
    %p176 = scmp.ne.s32.totalorder %s164, %s165
    %p177 = scmp.eq.s32.totalorder %s29, 1
    %p178 = por %p176, %p177
    %p180 = scmp.ne.s32.totalorder %s165, %s179
    %p181 = scmp.eq.s32.totalorder %s29, 0
    %p182 = por %p180, %p181
    %s184 = sadd.s32 %s183, 1
    %p187 = scmp.eq.s32.totalorder %s23, 1
    %p188 = scmp.ne.s32.totalorder %s183, %s185
    %p189 = scmp.eq.s32.totalorder %s23, 0
    %p190 = por %p188, %p189
    %p191 = scmp.ne.s32.totalorder %s183, %s185
    %p192 = scmp.eq.s32.totalorder %s28, 1
    %p193 = por %p191, %p192
    %p194 = scmp.ne.s32.totalorder %s185, %s186
    %p195 = scmp.eq.s32.totalorder %s28, 0
    %p196 = por %p194, %p195
    %p197 = scmp.ne.s32.totalorder %s185, %s186
    %p198 = scmp.eq.s32.totalorder %s29, 1
    %p199 = por %p197, %p198
    %p201 = scmp.ne.s32.totalorder %s186, %s200
    %p202 = scmp.eq.s32.totalorder %s29, 0
    %p203 = por %p201, %p202
    %s205 = sadd.s32 %s204, 1
    %p208 = scmp.eq.s32.totalorder %s23, 1
    %p209 = scmp.ne.s32.totalorder %s204, %s206
    %p210 = scmp.eq.s32.totalorder %s23, 0
    %p211 = por %p209, %p210
    %p212 = scmp.ne.s32.totalorder %s204, %s206
    %p213 = scmp.eq.s32.totalorder %s28, 1
    %p214 = por %p212, %p213
    %p215 = scmp.ne.s32.totalorder %s206, %s207
    %p216 = scmp.eq.s32.totalorder %s28, 0
    %p217 = por %p215, %p216
    %p218 = scmp.ne.s32.totalorder %s206, %s207
    %p219 = scmp.eq.s32.totalorder %s29, 1
    %p220 = por %p218, %p219
    %p222 = scmp.ne.s32.totalorder %s207, %s221
    %p223 = scmp.eq.s32.totalorder %s29, 0
    %p224 = por %p222, %p223
    %s226 = sadd.s32 %s225, 1
    %p229 = scmp.eq.s32.totalorder %s23, 1
    %p230 = scmp.ne.s32.totalorder %s225, %s227
    %p231 = scmp.eq.s32.totalorder %s23, 0
    %p232 = por %p230, %p231
    %p233 = scmp.ne.s32.totalorder %s225, %s227
    %p234 = scmp.eq.s32.totalorder %s28, 1
    %p235 = por %p233, %p234
    %p236 = scmp.ne.s32.totalorder %s227, %s228
    %p237 = scmp.eq.s32.totalorder %s28, 0
    %p238 = por %p236, %p237
    %p239 = scmp.ne.s32.totalorder %s227, %s228
    %p240 = scmp.eq.s32.totalorder %s29, 1
    %p241 = por %p239, %p240
    %p243 = scmp.ne.s32.totalorder %s228, %s242
    %p244 = scmp.eq.s32.totalorder %s29, 0
    %p245 = por %p243, %p244
    %s247 = sadd.s32 %s246, 1
    %p250 = scmp.eq.s32.totalorder %s23, 1
    %p251 = scmp.ne.s32.totalorder %s246, %s248
    %p252 = scmp.eq.s32.totalorder %s23, 0
    %p253 = por %p251, %p252
    %p254 = scmp.ne.s32.totalorder %s246, %s248
    %p255 = scmp.eq.s32.totalorder %s28, 1
    %p256 = por %p254, %p255
    %p257 = scmp.ne.s32.totalorder %s248, %s249
    %p258 = scmp.eq.s32.totalorder %s28, 0
    %p259 = por %p257, %p258
    %p260 = scmp.ne.s32.totalorder %s248, %s249
    %p261 = scmp.eq.s32.totalorder %s29, 1
    %p262 = por %p260, %p261
    %p264 = scmp.ne.s32.totalorder %s249, %s263
    %p265 = scmp.eq.s32.totalorder %s29, 0
    %p266 = por %p264, %p265
    %s268 = sadd.s32 %s267, 1
    %p271 = scmp.eq.s32.totalorder %s23, 1
    %p272 = scmp.ne.s32.totalorder %s267, %s269
    %p273 = scmp.eq.s32.totalorder %s23, 0
    %p274 = por %p272, %p273
    %p275 = scmp.ne.s32.totalorder %s267, %s269
    %p276 = scmp.eq.s32.totalorder %s28, 1
    %p277 = por %p275, %p276
    %p278 = scmp.ne.s32.totalorder %s269, %s270
    %p279 = scmp.eq.s32.totalorder %s28, 0
    %p280 = por %p278, %p279
    %p281 = scmp.ne.s32.totalorder %s269, %s270
    %p282 = scmp.eq.s32.totalorder %s29, 1
    %p283 = por %p281, %p282
    %p285 = scmp.ne.s32.totalorder %s270, %s284
    %p286 = scmp.eq.s32.totalorder %s29, 0
    %p287 = por %p285, %p286
    %s289 = sadd.s32 %s288, 1
    %p292 = scmp.eq.s32.totalorder %s23, 1
    %p293 = scmp.ne.s32.totalorder %s288, %s290
    %p294 = scmp.eq.s32.totalorder %s23, 0
    %p295 = por %p293, %p294
    %p296 = scmp.ne.s32.totalorder %s288, %s290
    %p297 = scmp.eq.s32.totalorder %s28, 1
    %p298 = por %p296, %p297
    %p299 = scmp.ne.s32.totalorder %s290, %s291
    %p300 = scmp.eq.s32.totalorder %s28, 0
    %p301 = por %p299, %p300
    %p302 = scmp.ne.s32.totalorder %s290, %s291
    %p303 = scmp.eq.s32.totalorder %s29, 1
    %p304 = por %p302, %p303
    %p306 = scmp.ne.s32.totalorder %s291, %s305
    %p307 = scmp.eq.s32.totalorder %s29, 0
    %p308 = por %p306, %p307
    %s310 = sadd.s32 %s309, 1
    %p313 = scmp.eq.s32.totalorder %s23, 1
    %p314 = scmp.ne.s32.totalorder %s309, %s311
    %p315 = scmp.eq.s32.totalorder %s23, 0
    %p316 = por %p314, %p315
    %p317 = scmp.ne.s32.totalorder %s309, %s311
    %p318 = scmp.eq.s32.totalorder %s28, 1
    %p319 = por %p317, %p318
    %p320 = scmp.ne.s32.totalorder %s311, %s312
    %p321 = scmp.eq.s32.totalorder %s28, 0
    %p322 = por %p320, %p321
    %p323 = scmp.ne.s32.totalorder %s311, %s312
    %p324 = scmp.eq.s32.totalorder %s29, 1
    %p325 = por %p323, %p324
    %p327 = scmp.ne.s32.totalorder %s312, %s326
    %p328 = scmp.eq.s32.totalorder %s29, 0
    %p329 = por %p327, %p328
    %s331 = sadd.s32 %s330, 1
    %p334 = scmp.eq.s32.totalorder %s23, 1
    %p335 = scmp.ne.s32.totalorder %s330, %s332
    %p336 = scmp.eq.s32.totalorder %s23, 0
    %p337 = por %p335, %p336
    %p338 = scmp.ne.s32.totalorder %s330, %s332
    %p339 = scmp.eq.s32.totalorder %s28, 1
    %p340 = por %p338, %p339
    %p341 = scmp.ne.s32.totalorder %s332, %s333
    %p342 = scmp.eq.s32.totalorder %s28, 0
    %p343 = por %p341, %p342
    %p344 = scmp.ne.s32.totalorder %s332, %s333
    %p345 = scmp.eq.s32.totalorder %s29, 1
    %p346 = por %p344, %p345
    %p348 = scmp.ne.s32.totalorder %s333, %s347
    %p349 = scmp.eq.s32.totalorder %s29, 0
    %p350 = por %p348, %p349
    %s352 = sadd.s32 %s351, 1
    %p355 = scmp.eq.s32.totalorder %s23, 1
    %p356 = scmp.ne.s32.totalorder %s351, %s353
    %p357 = scmp.eq.s32.totalorder %s23, 0
    %p358 = por %p356, %p357
    %p359 = scmp.ne.s32.totalorder %s351, %s353
    %p360 = scmp.eq.s32.totalorder %s28, 1
    %p361 = por %p359, %p360
    %p362 = scmp.ne.s32.totalorder %s353, %s354
    %p363 = scmp.eq.s32.totalorder %s28, 0
    %p364 = por %p362, %p363
    %p365 = scmp.ne.s32.totalorder %s353, %s354
    %p366 = scmp.eq.s32.totalorder %s29, 1
    %p367 = por %p365, %p366
    %p369 = scmp.ne.s32.totalorder %s354, %s368
    %p370 = scmp.eq.s32.totalorder %s29, 0
    %p371 = por %p369, %p370
    %s373 = sadd.s32 %s372, 1
    %p376 = scmp.eq.s32.totalorder %s23, 1
    %p377 = scmp.ne.s32.totalorder %s372, %s374
    %p378 = scmp.eq.s32.totalorder %s23, 0
    %p379 = por %p377, %p378
    %p380 = scmp.ne.s32.totalorder %s372, %s374
    %p381 = scmp.eq.s32.totalorder %s28, 1
    %p382 = por %p380, %p381
    %p383 = scmp.ne.s32.totalorder %s374, %s375
    %p384 = scmp.eq.s32.totalorder %s28, 0
    %p385 = por %p383, %p384
    %p386 = scmp.ne.s32.totalorder %s374, %s375
    %p387 = scmp.eq.s32.totalorder %s29, 1
    %p388 = por %p386, %p387
    %p390 = scmp.ne.s32.totalorder %s375, %s389
    %p391 = scmp.eq.s32.totalorder %s29, 0
    %p392 = por %p390, %p391
    %s393 = ssub.s32 %s23, %s30
    %p394 = scmp.eq.s32.totalorder %s393, 0
    %s396 = sadd.s32 %s395, 1
    %s397 = scalar_select %p394, %s395, %s396
    %p400 = pneg %p394
    %p401 = scmp.eq.s32.totalorder %s23, 1
    %p402 = por %p400, %p401
    %p403 = scmp.ne.s32.totalorder %s395, %s398
    %p404 = scmp.eq.s32.totalorder %s23, 0
    %p405 = por %p403, %p404
    %p406 = scmp.ne.s32.totalorder %s395, %s398
    %p407 = scmp.eq.s32.totalorder %s28, 1
    %p408 = por %p406, %p407
    %p409 = scmp.ne.s32.totalorder %s398, %s399
    %p410 = scmp.eq.s32.totalorder %s28, 0
    %p411 = por %p409, %p410
    %p412 = scmp.ne.s32.totalorder %s398, %s399
    %p413 = scmp.eq.s32.totalorder %s29, 1
    %p414 = por %p412, %p413
    %p416 = scmp.ne.s32.totalorder %s399, %s415
    %p417 = scmp.eq.s32.totalorder %s29, 0
    %p418 = por %p416, %p417
    %p419 = scmp.le.s32.totalorder 1, %s23
    %p420 = scmp.lt.s32.totalorder %s23, 3
    %p421 = pnand %p419, %p420
    %p422 = pneg %p421
    // Predicated region
    $region9: #{net_forward.1} parent=5 // pred_check
      _
    $region10: #{net_forward.1} parent=5 // pred_check_branch
      %424 = sbr.rel (%p421) target = $region12
    $region11: #{net_forward.1} parent=5 // pred_region
      %s425 = ssub.s32 %s23, 1
      // Predicated region
      $region13: #{net_forward.1} parent=11 // pred_check
        %p426 = pneg %p70
      $region14: #{net_forward.1} parent=11 // pred_check_branch
        %428 = sbr.rel (%p426) target = $region16
      $region15: #{net_forward.1} parent=11 // pred_region
        _
      $region16: #{net_forward.1} parent=11 // pred_fallthru
        _
      // Predicated region
      $region17: #{net_forward.1} parent=11 // pred_check
        %p429 = pneg %p91
      $region18: #{net_forward.1} parent=11 // pred_check_branch
        %431 = sbr.rel (%p429) target = $region20
      $region19: #{net_forward.1} parent=11 // pred_region
        _
      $region20: #{net_forward.1} parent=11 // pred_fallthru
        _
      // Predicated region
      $region21: #{net_forward.1} parent=11 // pred_check
        %p432 = pneg %p112
      $region22: #{net_forward.1} parent=11 // pred_check_branch
        %434 = sbr.rel (%p432) target = $region24
      $region23: #{net_forward.1} parent=11 // pred_region
        _
      $region24: #{net_forward.1} parent=11 // pred_fallthru
        _
      // Predicated region
      $region25: #{net_forward.1} parent=11 // pred_check
        %p435 = pneg %p133
      $region26: #{net_forward.1} parent=11 // pred_check_branch
        %437 = sbr.rel (%p435) target = $region28
      $region27: #{net_forward.1} parent=11 // pred_region
        _
      $region28: #{net_forward.1} parent=11 // pred_fallthru
        _
      // Predicated region
      $region29: #{net_forward.1} parent=11 // pred_check
        %p438 = pneg %p154
      $region30: #{net_forward.1} parent=11 // pred_check_branch
        %440 = sbr.rel (%p438) target = $region32
      $region31: #{net_forward.1} parent=11 // pred_region
        _
      $region32: #{net_forward.1} parent=11 // pred_fallthru
        _
      // Predicated region
      $region33: #{net_forward.1} parent=11 // pred_check
        %p441 = pneg %p175
      $region34: #{net_forward.1} parent=11 // pred_check_branch
        %443 = sbr.rel (%p441) target = $region36
      $region35: #{net_forward.1} parent=11 // pred_region
        _
      $region36: #{net_forward.1} parent=11 // pred_fallthru
        _
      // Predicated region
      $region37: #{net_forward.1} parent=11 // pred_check
        %p444 = pneg %p196
      $region38: #{net_forward.1} parent=11 // pred_check_branch
        %446 = sbr.rel (%p444) target = $region40
      $region39: #{net_forward.1} parent=11 // pred_region
        _
      $region40: #{net_forward.1} parent=11 // pred_fallthru
        _
      // Predicated region
      $region41: #{net_forward.1} parent=11 // pred_check
        %p447 = pneg %p217
      $region42: #{net_forward.1} parent=11 // pred_check_branch
        %449 = sbr.rel (%p447) target = $region44
      $region43: #{net_forward.1} parent=11 // pred_region
        _
      $region44: #{net_forward.1} parent=11 // pred_fallthru
        _
      // Predicated region
      $region45: #{net_forward.1} parent=11 // pred_check
        %p450 = pneg %p238
      $region46: #{net_forward.1} parent=11 // pred_check_branch
        %452 = sbr.rel (%p450) target = $region48
      $region47: #{net_forward.1} parent=11 // pred_region
        _
      $region48: #{net_forward.1} parent=11 // pred_fallthru
        _
      // Predicated region
      $region49: #{net_forward.1} parent=11 // pred_check
        %p453 = pneg %p259
      $region50: #{net_forward.1} parent=11 // pred_check_branch
        %455 = sbr.rel (%p453) target = $region52
      $region51: #{net_forward.1} parent=11 // pred_region
        _
      $region52: #{net_forward.1} parent=11 // pred_fallthru
        _
      // Predicated region
      $region53: #{net_forward.1} parent=11 // pred_check
        %p456 = pneg %p280
      $region54: #{net_forward.1} parent=11 // pred_check_branch
        %458 = sbr.rel (%p456) target = $region56
      $region55: #{net_forward.1} parent=11 // pred_region
        _
      $region56: #{net_forward.1} parent=11 // pred_fallthru
        _
      // Predicated region
      $region57: #{net_forward.1} parent=11 // pred_check
        %p459 = pneg %p301
      $region58: #{net_forward.1} parent=11 // pred_check_branch
        %461 = sbr.rel (%p459) target = $region60
      $region59: #{net_forward.1} parent=11 // pred_region
        _
      $region60: #{net_forward.1} parent=11 // pred_fallthru
        _
      // Predicated region
      $region61: #{net_forward.1} parent=11 // pred_check
        %p462 = pneg %p322
      $region62: #{net_forward.1} parent=11 // pred_check_branch
        %464 = sbr.rel (%p462) target = $region64
      $region63: #{net_forward.1} parent=11 // pred_region
        _
      $region64: #{net_forward.1} parent=11 // pred_fallthru
        _
      // Predicated region
      $region65: #{net_forward.1} parent=11 // pred_check
        %p465 = pneg %p343
      $region66: #{net_forward.1} parent=11 // pred_check_branch
        %467 = sbr.rel (%p465) target = $region68
      $region67: #{net_forward.1} parent=11 // pred_region
        _
      $region68: #{net_forward.1} parent=11 // pred_fallthru
        _
      // Predicated region
      $region69: #{net_forward.1} parent=11 // pred_check
        %p468 = pneg %p364
      $region70: #{net_forward.1} parent=11 // pred_check_branch
        %470 = sbr.rel (%p468) target = $region72
      $region71: #{net_forward.1} parent=11 // pred_region
        _
      $region72: #{net_forward.1} parent=11 // pred_fallthru
        _
      // Predicated region
      $region73: #{net_forward.1} parent=11 // pred_check
        %p471 = pneg %p385
      $region74: #{net_forward.1} parent=11 // pred_check_branch
        %473 = sbr.rel (%p471) target = $region76
      $region75: #{net_forward.1} parent=11 // pred_region
        _
      $region76: #{net_forward.1} parent=11 // pred_fallthru
        _
    $region12: #{net_forward.1} parent=5 // pred_fallthru
      _
    %p474 = scmp.lt.s32.totalorder %s23, 2
    // Predicated region
    $region77: #{net_forward.1} parent=5 // pred_check
      %p475 = pneg %p474
    $region78: #{net_forward.1} parent=5 // pred_check_branch
      %477 = sbr.rel (%p475) target = $region80
    $region79: #{net_forward.1} parent=5 // pred_region
      // Predicated region
      $region81: #{net_forward.1} parent=79 // pred_check
        %p478 = pneg %p43
      $region82: #{net_forward.1} parent=79 // pred_check_branch
        %480 = sbr.rel (%p478) target = $region84
      $region83: #{net_forward.1} parent=79 // pred_region
        %s481 = smul.u32 24, %s23
        %p482 = scmp.lt.s32.totalorder %s481, 47
        %s483 = scalar_select %p482, %s481, 47
        %s484 = smul.addr %s483, 8
        %s485 = scalar_lea.vmem %s0, %s484
        %s486 = smul.u32 24, %s23
      $region84: #{net_forward.1} parent=79 // pred_fallthru
        _
    $region80: #{net_forward.1} parent=5 // pred_fallthru
      _
    %p487 = scmp.le.s32.totalorder 1, %s23
    %p488 = scmp.lt.s32.totalorder %s23, 3
    %p489 = pnand %p487, %p488
    %p490 = pneg %p489
    // Predicated region
    $region85: #{net_forward.1} parent=5 // pred_check
      _
    $region86: #{net_forward.1} parent=5 // pred_check_branch
      %492 = sbr.rel (%p489) target = $region88
    $region87: #{net_forward.1} parent=5 // pred_region
      %s493 = ssub.s32 %s23, 1
      %s494 = smul.u32 24, %s28
      %p495 = scmp.lt.s32.totalorder %s494, 47
      %s496 = scalar_select %p495, %s494, 47
      %s497 = smul.addr %s496, 8
      %s498 = scalar_lea.vmem %s0, %s497
      %p499 = pneg %p49
      %p500 = pneg %p46
      %p501 = pneg %p70
      %p502 = pneg %p67
      %p503 = pneg %p91
      %p504 = pneg %p88
      %p505 = pneg %p112
      %p506 = pneg %p109
      %p507 = pneg %p133
      %p508 = pneg %p130
      %p509 = pneg %p154
      %p510 = pneg %p151
      %p511 = pneg %p175
      %p512 = pneg %p172
      %p513 = pneg %p196
      %p514 = pneg %p193
      %p515 = pneg %p217
      %p516 = pneg %p214
      %p517 = pneg %p238
      %p518 = pneg %p235
      %p519 = pneg %p259
      %p520 = pneg %p256
      %p521 = pneg %p280
      %p522 = pneg %p277
      %p523 = pneg %p301
      %p524 = pneg %p298
      %p525 = pneg %p322
      %p526 = pneg %p319
      %p527 = pneg %p343
      %p528 = pneg %p340
      %p529 = pneg %p364
      %p530 = pneg %p361
      %p531 = pneg %p385
      %p532 = pneg %p382
      %p533 = pneg %p411
      %p534 = pneg %p408
      %p535 = scmp.lt.s32.totalorder %s28, 1
      %s536 = scalar_select %p535, %s28, 1
      %s537 = smul.addr %s536, 4
      %s538 = scalar_lea.vmem %s17, %s537
      %s539 = smul.u32 24, %s28
      %p540 = scmp.lt.s32.totalorder %s539, 47
      %s541 = scalar_select %p540, %s539, 47
      %s542 = smul.addr %s541, 8
      %s543 = scalar_lea.vmem %s0, %s542
      %s544 = smul.u32 24, %s28
      %p545 = scmp.lt.s32.totalorder %s28, 1
      %s546 = scalar_select %p545, %s28, 1
      %s547 = smul.addr %s546, 4
      %s548 = scalar_lea.vmem %s17, %s547
      %v549 = vld [vmem:[%s543] sm:$0xff]
      %v550 = vld [vmem:[%s543 + $0x8] sm:$0xff]
      %v551 = vld [vmem:[%s543 + $0x10] sm:$0xff]
      %v552 = vld [vmem:[%s543 + $0x18] sm:$0xff]
      %v553 = vld [vmem:[%s543 + $0x20] sm:$0xff]
      %v554 = vld [vmem:[%s543 + $0x28] sm:$0xff]
      %v555 = vld [vmem:[%s543 + $0x30] sm:$0xff]
      %v556 = vld [vmem:[%s543 + $0x38] sm:$0xff]
      %v557 = vld [vmem:[%s543 + $0x40] sm:$0xff]
      %v558 = vld [vmem:[%s543 + $0x48] sm:$0xff]
      %v559 = vld [vmem:[%s543 + $0x50] sm:$0xff]
      %v560 = vld [vmem:[%s543 + $0x58] sm:$0xff]
      %v561 = vld [vmem:[%s543 + $0x60] sm:$0xff]
      %v562 = vld [vmem:[%s543 + $0x68] sm:$0xff]
      %v563 = vld [vmem:[%s543 + $0x70] sm:$0xff]
      %v564 = vld [vmem:[%s543 + $0x78] sm:$0xff]
      %v565 = vld [vmem:[%s543 + $0x80] sm:$0xff]
      %v566 = vld [vmem:[%s543 + $0x88] sm:$0xff]
      %v567 = vld [vmem:[%s543 + $0x90] sm:$0xff]
      %v568 = vld [vmem:[%s543 + $0x98] sm:$0xff]
      %v569 = vld [vmem:[%s543 + $0xa0] sm:$0xff]
      %v570 = vld [vmem:[%s543 + $0xa8] sm:$0xff]
      %v571 = vld [vmem:[%s543 + $0xb0] sm:$0xff]
      %v572 = vld [vmem:[%s543 + $0xb8] sm:$0xff]
      %vm579 = vcmask 1046528
      %v580 = vrot.slane %v549, 1
      %v581 = vrot.slane %v550, 1
      %v582 = vsel %vm579, %v580, %v581
      %v583 = vrot.slane %v551, 1
      %v584 = vsel %vm579, %v581, %v583
      %v585 = vrot.slane %v552, 1
      %v586 = vsel %vm579, %v583, %v585
      %v587 = vrot.slane %v553, 1
      %v588 = vsel %vm579, %v585, %v587
      %v589 = vrot.slane %v554, 1
      %v590 = vsel %vm579, %v587, %v589
      %591 = vrot.lane.b32.xlu0 %v582, 48
      %v592 = vpop.permute.xlu0 %591
      %593 = vrot.lane.b32.xlu0 %v584, 48
      %v594 = vpop.permute.xlu0 %593
      %595 = vrot.lane.b32.xlu0 %v586, 48
      %v596 = vpop.permute.xlu0 %595
      %597 = vrot.lane.b32.xlu0 %v588, 48
      %v598 = vpop.permute.xlu0 %597
      %599 = vrot.lane.b32.xlu0 %v590, 48
      %v600 = vpop.permute.xlu0 %599
      %601 = vrot.lane.b32.xlu0 %v589, 48
      %v602 = vpop.permute.xlu0 %601
      %vm609 = vcmask 1045504
      %v610 = vrot.slane %v549, 2
      %v611 = vrot.slane %v550, 2
      %v612 = vsel %vm609, %v610, %v611
      %v613 = vrot.slane %v551, 2
      %v614 = vsel %vm609, %v611, %v613
      %v615 = vrot.slane %v552, 2
      %v616 = vsel %vm609, %v613, %v615
      %v617 = vrot.slane %v553, 2
      %v618 = vsel %vm609, %v615, %v617
      %v619 = vrot.slane %v554, 2
      %v620 = vsel %vm609, %v617, %v619
      %621 = vrot.lane.b32.xlu0 %v612, 96
      %v622 = vpop.permute.xlu0 %621
      %623 = vrot.lane.b32.xlu0 %v614, 96
      %v624 = vpop.permute.xlu0 %623
      %625 = vrot.lane.b32.xlu0 %v616, 96
      %v626 = vpop.permute.xlu0 %625
      %627 = vrot.lane.b32.xlu0 %v618, 96
      %v628 = vpop.permute.xlu0 %627
      %629 = vrot.lane.b32.xlu0 %v620, 96
      %v630 = vpop.permute.xlu0 %629
      %631 = vrot.lane.b32.xlu0 %v619, 96
      %v632 = vpop.permute.xlu0 %631
      %vm639 = vcmask 1044480
      %v640 = vrot.slane %v549, 3
      %v641 = vrot.slane %v550, 3
      %v642 = vsel %vm639, %v640, %v641
      %v643 = vrot.slane %v551, 3
      %v644 = vsel %vm639, %v641, %v643
      %v645 = vrot.slane %v552, 3
      %v646 = vsel %vm639, %v643, %v645
      %v647 = vrot.slane %v553, 3
      %v648 = vsel %vm639, %v645, %v647
      %v649 = vrot.slane %v554, 3
      %v650 = vsel %vm639, %v647, %v649
      %651 = vrot.lane.b32.xlu0 %v642, 16
      %v652 = vpop.permute.xlu0 %651
      %653 = vrot.lane.b32.xlu0 %v644, 16
      %v654 = vpop.permute.xlu0 %653
      %655 = vrot.lane.b32.xlu0 %v646, 16
      %v656 = vpop.permute.xlu0 %655
      %657 = vrot.lane.b32.xlu0 %v648, 16
      %v658 = vpop.permute.xlu0 %657
      %659 = vrot.lane.b32.xlu0 %v650, 16
      %v660 = vpop.permute.xlu0 %659
      %661 = vrot.lane.b32.xlu0 %v649, 16
      %v662 = vpop.permute.xlu0 %661
      %vm669 = vcmask 1043456
      %v670 = vrot.slane %v549, 4
      %v671 = vrot.slane %v550, 4
      %v672 = vsel %vm669, %v670, %v671
      %v673 = vrot.slane %v551, 4
      %v674 = vsel %vm669, %v671, %v673
      %v675 = vrot.slane %v552, 4
      %v676 = vsel %vm669, %v673, %v675
      %v677 = vrot.slane %v553, 4
      %v678 = vsel %vm669, %v675, %v677
      %v679 = vrot.slane %v554, 4
      %v680 = vsel %vm669, %v677, %v679
      %681 = vrot.lane.b32.xlu0 %v672, 64
      %v682 = vpop.permute.xlu0 %681
      %683 = vrot.lane.b32.xlu0 %v674, 64
      %v684 = vpop.permute.xlu0 %683
      %685 = vrot.lane.b32.xlu0 %v676, 64
      %v686 = vpop.permute.xlu0 %685
      %687 = vrot.lane.b32.xlu0 %v678, 64
      %v688 = vpop.permute.xlu0 %687
      %689 = vrot.lane.b32.xlu0 %v680, 64
      %v690 = vpop.permute.xlu0 %689
      %691 = vrot.lane.b32.xlu0 %v679, 64
      %v692 = vpop.permute.xlu0 %691
      %vm699 = vcmask 392192
      %v700 = vsel %vm699, %v549, %v592
      %v701 = vsel %vm699, %v550, %v594
      %v702 = vsel %vm699, %v551, %v596
      %v703 = vsel %vm699, %v552, %v598
      %v704 = vsel %vm699, %v553, %v600
      %v705 = vsel %vm699, %v554, %v602
      %vm706 = vcmask 785408
      %v707 = vsel %vm706, %v700, %v622
      %v708 = vsel %vm706, %v701, %v624
      %v709 = vsel %vm706, %v702, %v626
      %v710 = vsel %vm706, %v703, %v628
      %v711 = vsel %vm706, %v704, %v630
      %v712 = vsel %vm706, %v705, %v632
      %vm713 = vcmask 130048
      %v714 = vsel %vm713, %v622, %v652
      %v715 = vsel %vm713, %v624, %v654
      %v716 = vsel %vm713, %v626, %v656
      %v717 = vsel %vm713, %v628, %v658
      %v718 = vsel %vm713, %v630, %v660
      %v719 = vsel %vm713, %v632, %v662
      %vm720 = vcmask 523264
      %v721 = vsel %vm720, %v714, %v682
      %v722 = vsel %vm720, %v715, %v684
      %v723 = vsel %vm720, %v716, %v686
      %v724 = vsel %vm720, %v717, %v688
      %v725 = vsel %vm720, %v718, %v690
      %v726 = vsel %vm720, %v719, %v692
      %v733 = vrot.slane %v555, 1
      %v734 = vrot.slane %v556, 1
      %v735 = vsel %vm579, %v733, %v734
      %v736 = vrot.slane %v557, 1
      %v737 = vsel %vm579, %v734, %v736
      %v738 = vrot.slane %v558, 1
      %v739 = vsel %vm579, %v736, %v738
      %v740 = vrot.slane %v559, 1
      %v741 = vsel %vm579, %v738, %v740
      %v742 = vrot.slane %v560, 1
      %v743 = vsel %vm579, %v740, %v742
      %744 = vrot.lane.b32.xlu0 %v735, 48
      %v745 = vpop.permute.xlu0 %744
      %746 = vrot.lane.b32.xlu0 %v737, 48
      %v747 = vpop.permute.xlu0 %746
      %748 = vrot.lane.b32.xlu0 %v739, 48
      %v749 = vpop.permute.xlu0 %748
      %750 = vrot.lane.b32.xlu0 %v741, 48
      %v751 = vpop.permute.xlu0 %750
      %752 = vrot.lane.b32.xlu0 %v743, 48
      %v753 = vpop.permute.xlu0 %752
      %754 = vrot.lane.b32.xlu0 %v742, 48
      %v755 = vpop.permute.xlu0 %754
      %v762 = vrot.slane %v555, 2
      %v763 = vrot.slane %v556, 2
      %v764 = vsel %vm609, %v762, %v763
      %v765 = vrot.slane %v557, 2
      %v766 = vsel %vm609, %v763, %v765
      %v767 = vrot.slane %v558, 2
      %v768 = vsel %vm609, %v765, %v767
      %v769 = vrot.slane %v559, 2
      %v770 = vsel %vm609, %v767, %v769
      %v771 = vrot.slane %v560, 2
      %v772 = vsel %vm609, %v769, %v771
      %773 = vrot.lane.b32.xlu0 %v764, 96
      %v774 = vpop.permute.xlu0 %773
      %775 = vrot.lane.b32.xlu0 %v766, 96
      %v776 = vpop.permute.xlu0 %775
      %777 = vrot.lane.b32.xlu0 %v768, 96
      %v778 = vpop.permute.xlu0 %777
      %779 = vrot.lane.b32.xlu0 %v770, 96
      %v780 = vpop.permute.xlu0 %779
      %781 = vrot.lane.b32.xlu0 %v772, 96
      %v782 = vpop.permute.xlu0 %781
      %783 = vrot.lane.b32.xlu0 %v771, 96
      %v784 = vpop.permute.xlu0 %783
      %v791 = vrot.slane %v555, 3
      %v792 = vrot.slane %v556, 3
      %v793 = vsel %vm639, %v791, %v792
      %v794 = vrot.slane %v557, 3
      %v795 = vsel %vm639, %v792, %v794
      %v796 = vrot.slane %v558, 3
      %v797 = vsel %vm639, %v794, %v796
      %v798 = vrot.slane %v559, 3
      %v799 = vsel %vm639, %v796, %v798
      %v800 = vrot.slane %v560, 3
      %v801 = vsel %vm639, %v798, %v800
      %802 = vrot.lane.b32.xlu0 %v793, 16
      %v803 = vpop.permute.xlu0 %802
      %804 = vrot.lane.b32.xlu0 %v795, 16
      %v805 = vpop.permute.xlu0 %804
      %806 = vrot.lane.b32.xlu0 %v797, 16
      %v807 = vpop.permute.xlu0 %806
      %808 = vrot.lane.b32.xlu0 %v799, 16
      %v809 = vpop.permute.xlu0 %808
      %810 = vrot.lane.b32.xlu0 %v801, 16
      %v811 = vpop.permute.xlu0 %810
      %812 = vrot.lane.b32.xlu0 %v800, 16
      %v813 = vpop.permute.xlu0 %812
      %v820 = vrot.slane %v555, 4
      %v821 = vrot.slane %v556, 4
      %v822 = vsel %vm669, %v820, %v821
      %v823 = vrot.slane %v557, 4
      %v824 = vsel %vm669, %v821, %v823
      %v825 = vrot.slane %v558, 4
      %v826 = vsel %vm669, %v823, %v825
      %v827 = vrot.slane %v559, 4
      %v828 = vsel %vm669, %v825, %v827
      %v829 = vrot.slane %v560, 4
      %v830 = vsel %vm669, %v827, %v829
      %831 = vrot.lane.b32.xlu0 %v822, 64
      %v832 = vpop.permute.xlu0 %831
      %833 = vrot.lane.b32.xlu0 %v824, 64
      %v834 = vpop.permute.xlu0 %833
      %835 = vrot.lane.b32.xlu0 %v826, 64
      %v836 = vpop.permute.xlu0 %835
      %837 = vrot.lane.b32.xlu0 %v828, 64
      %v838 = vpop.permute.xlu0 %837
      %839 = vrot.lane.b32.xlu0 %v830, 64
      %v840 = vpop.permute.xlu0 %839
      %841 = vrot.lane.b32.xlu0 %v829, 64
      %v842 = vpop.permute.xlu0 %841
      %v849 = vsel %vm699, %v555, %v745
      %v850 = vsel %vm699, %v556, %v747
      %v851 = vsel %vm699, %v557, %v749
      %v852 = vsel %vm699, %v558, %v751
      %v853 = vsel %vm699, %v559, %v753
      %v854 = vsel %vm699, %v560, %v755
      %v855 = vsel %vm706, %v849, %v774
      %v856 = vsel %vm706, %v850, %v776
      %v857 = vsel %vm706, %v851, %v778
      %v858 = vsel %vm706, %v852, %v780
      %v859 = vsel %vm706, %v853, %v782
      %v860 = vsel %vm706, %v854, %v784
      %v861 = vsel %vm713, %v774, %v803
      %v862 = vsel %vm713, %v776, %v805
      %v863 = vsel %vm713, %v778, %v807
      %v864 = vsel %vm713, %v780, %v809
      %v865 = vsel %vm713, %v782, %v811
      %v866 = vsel %vm713, %v784, %v813
      %v867 = vsel %vm720, %v861, %v832
      %v868 = vsel %vm720, %v862, %v834
      %v869 = vsel %vm720, %v863, %v836
      %v870 = vsel %vm720, %v864, %v838
      %v871 = vsel %vm720, %v865, %v840
      %v872 = vsel %vm720, %v866, %v842
      %v879 = vrot.slane %v561, 1
      %v880 = vrot.slane %v562, 1
      %v881 = vsel %vm579, %v879, %v880
      %v882 = vrot.slane %v563, 1
      %v883 = vsel %vm579, %v880, %v882
      %v884 = vrot.slane %v564, 1
      %v885 = vsel %vm579, %v882, %v884
      %v886 = vrot.slane %v565, 1
      %v887 = vsel %vm579, %v884, %v886
      %v888 = vrot.slane %v566, 1
      %v889 = vsel %vm579, %v886, %v888
      %890 = vrot.lane.b32.xlu0 %v881, 48
      %v891 = vpop.permute.xlu0 %890
      %892 = vrot.lane.b32.xlu0 %v883, 48
      %v893 = vpop.permute.xlu0 %892
      %894 = vrot.lane.b32.xlu0 %v885, 48
      %v895 = vpop.permute.xlu0 %894
      %896 = vrot.lane.b32.xlu0 %v887, 48
      %v897 = vpop.permute.xlu0 %896
      %898 = vrot.lane.b32.xlu0 %v889, 48
      %v899 = vpop.permute.xlu0 %898
      %900 = vrot.lane.b32.xlu0 %v888, 48
      %v901 = vpop.permute.xlu0 %900
      %v908 = vrot.slane %v561, 2
      %v909 = vrot.slane %v562, 2
      %v910 = vsel %vm609, %v908, %v909
      %v911 = vrot.slane %v563, 2
      %v912 = vsel %vm609, %v909, %v911
      %v913 = vrot.slane %v564, 2
      %v914 = vsel %vm609, %v911, %v913
      %v915 = vrot.slane %v565, 2
      %v916 = vsel %vm609, %v913, %v915
      %v917 = vrot.slane %v566, 2
      %v918 = vsel %vm609, %v915, %v917
      %919 = vrot.lane.b32.xlu0 %v910, 96
      %v920 = vpop.permute.xlu0 %919
      %921 = vrot.lane.b32.xlu0 %v912, 96
      %v922 = vpop.permute.xlu0 %921
      %923 = vrot.lane.b32.xlu0 %v914, 96
      %v924 = vpop.permute.xlu0 %923
      %925 = vrot.lane.b32.xlu0 %v916, 96
      %v926 = vpop.permute.xlu0 %925
      %927 = vrot.lane.b32.xlu0 %v918, 96
      %v928 = vpop.permute.xlu0 %927
      %929 = vrot.lane.b32.xlu0 %v917, 96
      %v930 = vpop.permute.xlu0 %929
      %v937 = vrot.slane %v561, 3
      %v938 = vrot.slane %v562, 3
      %v939 = vsel %vm639, %v937, %v938
      %v940 = vrot.slane %v563, 3
      %v941 = vsel %vm639, %v938, %v940
      %v942 = vrot.slane %v564, 3
      %v943 = vsel %vm639, %v940, %v942
      %v944 = vrot.slane %v565, 3
      %v945 = vsel %vm639, %v942, %v944
      %v946 = vrot.slane %v566, 3
      %v947 = vsel %vm639, %v944, %v946
      %948 = vrot.lane.b32.xlu0 %v939, 16
      %v949 = vpop.permute.xlu0 %948
      %950 = vrot.lane.b32.xlu0 %v941, 16
      %v951 = vpop.permute.xlu0 %950
      %952 = vrot.lane.b32.xlu0 %v943, 16
      %v953 = vpop.permute.xlu0 %952
      %954 = vrot.lane.b32.xlu0 %v945, 16
      %v955 = vpop.permute.xlu0 %954
      %956 = vrot.lane.b32.xlu0 %v947, 16
      %v957 = vpop.permute.xlu0 %956
      %958 = vrot.lane.b32.xlu0 %v946, 16
      %v959 = vpop.permute.xlu0 %958
      %v966 = vrot.slane %v561, 4
      %v967 = vrot.slane %v562, 4
      %v968 = vsel %vm669, %v966, %v967
      %v969 = vrot.slane %v563, 4
      %v970 = vsel %vm669, %v967, %v969
      %v971 = vrot.slane %v564, 4
      %v972 = vsel %vm669, %v969, %v971
      %v973 = vrot.slane %v565, 4
      %v974 = vsel %vm669, %v971, %v973
      %v975 = vrot.slane %v566, 4
      %v976 = vsel %vm669, %v973, %v975
      %977 = vrot.lane.b32.xlu0 %v968, 64
      %v978 = vpop.permute.xlu0 %977
      %979 = vrot.lane.b32.xlu0 %v970, 64
      %v980 = vpop.permute.xlu0 %979
      %981 = vrot.lane.b32.xlu0 %v972, 64
      %v982 = vpop.permute.xlu0 %981
      %983 = vrot.lane.b32.xlu0 %v974, 64
      %v984 = vpop.permute.xlu0 %983
      %985 = vrot.lane.b32.xlu0 %v976, 64
      %v986 = vpop.permute.xlu0 %985
      %987 = vrot.lane.b32.xlu0 %v975, 64
      %v988 = vpop.permute.xlu0 %987
      %v995 = vsel %vm699, %v561, %v891
      %v996 = vsel %vm699, %v562, %v893
      %v997 = vsel %vm699, %v563, %v895
      %v998 = vsel %vm699, %v564, %v897
      %v999 = vsel %vm699, %v565, %v899
      %v1000 = vsel %vm699, %v566, %v901
      %v1001 = vsel %vm706, %v995, %v920
      %v1002 = vsel %vm706, %v996, %v922
      %v1003 = vsel %vm706, %v997, %v924
      %v1004 = vsel %vm706, %v998, %v926
      %v1005 = vsel %vm706, %v999, %v928
      %v1006 = vsel %vm706, %v1000, %v930
      %v1007 = vsel %vm713, %v920, %v949
      %v1008 = vsel %vm713, %v922, %v951
      %v1009 = vsel %vm713, %v924, %v953
      %v1010 = vsel %vm713, %v926, %v955
      %v1011 = vsel %vm713, %v928, %v957
      %v1012 = vsel %vm713, %v930, %v959
      %v1013 = vsel %vm720, %v1007, %v978
      %v1014 = vsel %vm720, %v1008, %v980
      %v1015 = vsel %vm720, %v1009, %v982
      %v1016 = vsel %vm720, %v1010, %v984
      %v1017 = vsel %vm720, %v1011, %v986
      %v1018 = vsel %vm720, %v1012, %v988
      %v1025 = vrot.slane %v567, 1
      %v1026 = vrot.slane %v568, 1
      %v1027 = vsel %vm579, %v1025, %v1026
      %v1028 = vrot.slane %v569, 1
      %v1029 = vsel %vm579, %v1026, %v1028
      %v1030 = vrot.slane %v570, 1
      %v1031 = vsel %vm579, %v1028, %v1030
      %v1032 = vrot.slane %v571, 1
      %v1033 = vsel %vm579, %v1030, %v1032
      %v1034 = vrot.slane %v572, 1
      %v1035 = vsel %vm579, %v1032, %v1034
      %1036 = vrot.lane.b32.xlu0 %v1027, 48
      %v1037 = vpop.permute.xlu0 %1036
      %1038 = vrot.lane.b32.xlu0 %v1029, 48
      %v1039 = vpop.permute.xlu0 %1038
      %1040 = vrot.lane.b32.xlu0 %v1031, 48
      %v1041 = vpop.permute.xlu0 %1040
      %1042 = vrot.lane.b32.xlu0 %v1033, 48
      %v1043 = vpop.permute.xlu0 %1042
      %1044 = vrot.lane.b32.xlu0 %v1035, 48
      %v1045 = vpop.permute.xlu0 %1044
      %1046 = vrot.lane.b32.xlu0 %v1034, 48
      %v1047 = vpop.permute.xlu0 %1046
      %v1054 = vrot.slane %v567, 2
      %v1055 = vrot.slane %v568, 2
      %v1056 = vsel %vm609, %v1054, %v1055
      %v1057 = vrot.slane %v569, 2
      %v1058 = vsel %vm609, %v1055, %v1057
      %v1059 = vrot.slane %v570, 2
      %v1060 = vsel %vm609, %v1057, %v1059
      %v1061 = vrot.slane %v571, 2
      %v1062 = vsel %vm609, %v1059, %v1061
      %v1063 = vrot.slane %v572, 2
      %v1064 = vsel %vm609, %v1061, %v1063
      %1065 = vrot.lane.b32.xlu0 %v1056, 96
      %v1066 = vpop.permute.xlu0 %1065
      %1067 = vrot.lane.b32.xlu0 %v1058, 96
      %v1068 = vpop.permute.xlu0 %1067
      %1069 = vrot.lane.b32.xlu0 %v1060, 96
      %v1070 = vpop.permute.xlu0 %1069
      %1071 = vrot.lane.b32.xlu0 %v1062, 96
      %v1072 = vpop.permute.xlu0 %1071
      %1073 = vrot.lane.b32.xlu0 %v1064, 96
      %v1074 = vpop.permute.xlu0 %1073
      %1075 = vrot.lane.b32.xlu0 %v1063, 96
      %v1076 = vpop.permute.xlu0 %1075
      %v1083 = vrot.slane %v567, 3
      %v1084 = vrot.slane %v568, 3
      %v1085 = vsel %vm639, %v1083, %v1084
      %v1086 = vrot.slane %v569, 3
      %v1087 = vsel %vm639, %v1084, %v1086
      %v1088 = vrot.slane %v570, 3
      %v1089 = vsel %vm639, %v1086, %v1088
      %v1090 = vrot.slane %v571, 3
      %v1091 = vsel %vm639, %v1088, %v1090
      %v1092 = vrot.slane %v572, 3
      %v1093 = vsel %vm639, %v1090, %v1092
      %1094 = vrot.lane.b32.xlu0 %v1085, 16
      %v1095 = vpop.permute.xlu0 %1094
      %1096 = vrot.lane.b32.xlu0 %v1087, 16
      %v1097 = vpop.permute.xlu0 %1096
      %1098 = vrot.lane.b32.xlu0 %v1089, 16
      %v1099 = vpop.permute.xlu0 %1098
      %1100 = vrot.lane.b32.xlu0 %v1091, 16
      %v1101 = vpop.permute.xlu0 %1100
      %1102 = vrot.lane.b32.xlu0 %v1093, 16
      %v1103 = vpop.permute.xlu0 %1102
      %1104 = vrot.lane.b32.xlu0 %v1092, 16
      %v1105 = vpop.permute.xlu0 %1104
      %v1112 = vrot.slane %v567, 4
      %v1113 = vrot.slane %v568, 4
      %v1114 = vsel %vm669, %v1112, %v1113
      %v1115 = vrot.slane %v569, 4
      %v1116 = vsel %vm669, %v1113, %v1115
      %v1117 = vrot.slane %v570, 4
      %v1118 = vsel %vm669, %v1115, %v1117
      %v1119 = vrot.slane %v571, 4
      %v1120 = vsel %vm669, %v1117, %v1119
      %v1121 = vrot.slane %v572, 4
      %v1122 = vsel %vm669, %v1119, %v1121
      %1123 = vrot.lane.b32.xlu0 %v1114, 64
      %v1124 = vpop.permute.xlu0 %1123
      %1125 = vrot.lane.b32.xlu0 %v1116, 64
      %v1126 = vpop.permute.xlu0 %1125
      %1127 = vrot.lane.b32.xlu0 %v1118, 64
      %v1128 = vpop.permute.xlu0 %1127
      %1129 = vrot.lane.b32.xlu0 %v1120, 64
      %v1130 = vpop.permute.xlu0 %1129
      %1131 = vrot.lane.b32.xlu0 %v1122, 64
      %v1132 = vpop.permute.xlu0 %1131
      %1133 = vrot.lane.b32.xlu0 %v1121, 64
      %v1134 = vpop.permute.xlu0 %1133
      %v1141 = vsel %vm699, %v567, %v1037
      %v1142 = vsel %vm699, %v568, %v1039
      %v1143 = vsel %vm699, %v569, %v1041
      %v1144 = vsel %vm699, %v570, %v1043
      %v1145 = vsel %vm699, %v571, %v1045
      %v1146 = vsel %vm699, %v572, %v1047
      %v1147 = vsel %vm706, %v1141, %v1066
      %v1148 = vsel %vm706, %v1142, %v1068
      %v1149 = vsel %vm706, %v1143, %v1070
      %v1150 = vsel %vm706, %v1144, %v1072
      %v1151 = vsel %vm706, %v1145, %v1074
      %v1152 = vsel %vm706, %v1146, %v1076
      %v1153 = vsel %vm713, %v1066, %v1095
      %v1154 = vsel %vm713, %v1068, %v1097
      %v1155 = vsel %vm713, %v1070, %v1099
      %v1156 = vsel %vm713, %v1072, %v1101
      %v1157 = vsel %vm713, %v1074, %v1103
      %v1158 = vsel %vm713, %v1076, %v1105
      %v1159 = vsel %vm720, %v1153, %v1124
      %v1160 = vsel %vm720, %v1154, %v1126
      %v1161 = vsel %vm720, %v1155, %v1128
      %v1162 = vsel %vm720, %v1156, %v1130
      %v1163 = vsel %vm720, %v1157, %v1132
      %v1164 = vsel %vm720, %v1158, %v1134
      %v1177 = vrot.slane %v855, 4
      %v1178 = vrot.slane %v867, 4
      %v1179 = vrot.slane %v856, 4
      %v1180 = vsel %vm669, %v1177, %v1179
      %v1181 = vrot.slane %v868, 4
      %v1182 = vsel %vm669, %v1178, %v1181
      %v1183 = vrot.slane %v857, 4
      %v1184 = vsel %vm669, %v1179, %v1183
      %v1185 = vrot.slane %v869, 4
      %v1186 = vsel %vm669, %v1181, %v1185
      %v1187 = vrot.slane %v858, 4
      %v1188 = vsel %vm669, %v1183, %v1187
      %v1189 = vrot.slane %v870, 4
      %v1190 = vsel %vm669, %v1185, %v1189
      %v1191 = vrot.slane %v859, 4
      %v1192 = vsel %vm669, %v1187, %v1191
      %v1193 = vrot.slane %v871, 4
      %v1194 = vsel %vm669, %v1189, %v1193
      %v1195 = vrot.slane %v860, 4
      %v1196 = vsel %vm669, %v1191, %v1195
      %v1197 = vrot.slane %v872, 4
      %v1198 = vsel %vm669, %v1193, %v1197
      %v1218 = vrot.slane %v1147, 4
      %v1219 = vrot.slane %v1159, 4
      %v1220 = vrot.slane %v1148, 4
      %v1221 = vsel %vm669, %v1218, %v1220
      %v1222 = vrot.slane %v1160, 4
      %v1223 = vsel %vm669, %v1219, %v1222
      %v1224 = vrot.slane %v1149, 4
      %v1225 = vsel %vm669, %v1220, %v1224
      %v1226 = vrot.slane %v1161, 4
      %v1227 = vsel %vm669, %v1222, %v1226
      %v1228 = vrot.slane %v1150, 4
      %v1229 = vsel %vm669, %v1224, %v1228
      %v1230 = vrot.slane %v1162, 4
      %v1231 = vsel %vm669, %v1226, %v1230
      %v1232 = vrot.slane %v1151, 4
      %v1233 = vsel %vm669, %v1228, %v1232
      %v1234 = vrot.slane %v1163, 4
      %v1235 = vsel %vm669, %v1230, %v1234
      %v1236 = vrot.slane %v1152, 4
      %v1237 = vsel %vm669, %v1232, %v1236
      %v1238 = vrot.slane %v1164, 4
      %v1239 = vsel %vm669, %v1234, %v1238
      %v1247 = vsel %vm669, %v712, %v1177
      %v1248 = vsel %vm669, %v726, %v1178
      %v1249 = vsel %vm669, %v1006, %v1218
      %v1250 = vsel %vm669, %v1018, %v1219
      %v1251 = vld [vmem:[%s1] sm:$0xff]
      %v1252 = vld [vmem:[%s1 + $0x8] sm:$0xff]
      %v1253 = vld [vmem:[%s1 + $0x10] sm:$0xff]
      %v1254 = vld [vmem:[%s1 + $0x18] sm:$0xff]
      %v1255 = vld [vmem:[%s1 + $0x20] sm:$0xff]
      %v1256 = vld [vmem:[%s1 + $0x28] sm:$0xff]
      %v1257 = vld [vmem:[%s1 + $0x30] sm:$0xff]
      %v1258 = vld [vmem:[%s1 + $0x38] sm:$0xff]
      %v1259 = vld [vmem:[%s1 + $0x40] sm:$0xff]
      %v1260 = vld [vmem:[%s1 + $0x48] sm:$0xff]
      %v1261 = vld [vmem:[%s1 + $0x50] sm:$0xff]
      %v1262 = vld [vmem:[%s1 + $0x58] sm:$0xff]
      %v1263 = vld [vmem:[%s1 + $0x60] sm:$0xff]
      %v1264 = vld [vmem:[%s1 + $0x68] sm:$0xff]
      %v1265 = vld [vmem:[%s1 + $0x70] sm:$0xff]
      %v1266 = vld [vmem:[%s1 + $0x78] sm:$0xff]
      %v1267 = vld [vmem:[%s1 + $0x80] sm:$0xff]
      %v1268 = vld [vmem:[%s1 + $0x88] sm:$0xff]
      %v1269 = vld [vmem:[%s1 + $0x90] sm:$0xff]
      %v1270 = vld [vmem:[%s1 + $0x98] sm:$0xff]
      %v1271 = vld [vmem:[%s1 + $0xa0] sm:$0xff]
      %v1272 = vld [vmem:[%s1 + $0xa8] sm:$0xff]
      %v1273 = vld [vmem:[%s1 + $0xb0] sm:$0xff]
      %v1274 = vld [vmem:[%s1 + $0xb8] sm:$0xff]
      %v1275 = vld [vmem:[%s1 + $0xc0] sm:$0xff]
      %v1276 = vld [vmem:[%s1 + $0xc8] sm:$0xff]
      %v1277 = vld [vmem:[%s1 + $0xd0] sm:$0xff]
      %v1278 = vld [vmem:[%s1 + $0xd8] sm:$0xff]
      %v1279 = vld [vmem:[%s1 + $0xe0] sm:$0xff]
      %v1280 = vld [vmem:[%s1 + $0xe8] sm:$0xff]
      %v1281 = vld [vmem:[%s1 + $0xf0] sm:$0xff]
      %v1282 = vld [vmem:[%s1 + $0xf8] sm:$0xff]
      %v1283 = vld [vmem:[%s1 + $0x100] sm:$0xff]
      %v1284 = vld [vmem:[%s1 + $0x108] sm:$0xff]
      %v1285 = vld [vmem:[%s1 + $0x110] sm:$0xff]
      %v1286 = vld [vmem:[%s1 + $0x118] sm:$0xff]
      %v1287 = vld [vmem:[%s1 + $0x120] sm:$0xff]
      %v1288 = vld [vmem:[%s1 + $0x128] sm:$0xff]
      %v1289 = vld [vmem:[%s1 + $0x130] sm:$0xff]
      %v1290 = vld [vmem:[%s1 + $0x138] sm:$0xff]
      %v1291 = vld [vmem:[%s1 + $0x140] sm:$0xff]
      %v1292 = vld [vmem:[%s1 + $0x148] sm:$0xff]
      %v1293 = vld [vmem:[%s1 + $0x150] sm:$0xff]
      %v1294 = vld [vmem:[%s1 + $0x158] sm:$0xff]
      %v1295 = vld [vmem:[%s1 + $0x160] sm:$0xff]
      %v1296 = vld [vmem:[%s1 + $0x168] sm:$0xff]
      %v1297 = vld [vmem:[%s1 + $0x170] sm:$0xff]
      %v1298 = vld [vmem:[%s1 + $0x178] sm:$0xff]
      %v1299 = vld [vmem:[%s1 + $0x180] sm:$0xff]
      %v1300 = vld [vmem:[%s1 + $0x188] sm:$0xff]
      %v1301 = vld [vmem:[%s1 + $0x190] sm:$0xff]
      %v1302 = vld [vmem:[%s1 + $0x198] sm:$0xff]
      %v1303 = vld [vmem:[%s1 + $0x1a0] sm:$0xff]
      %v1304 = vld [vmem:[%s1 + $0x1a8] sm:$0xff]
      %v1305 = vld [vmem:[%s1 + $0x1b0] sm:$0xff]
      %v1306 = vld [vmem:[%s1 + $0x1b8] sm:$0xff]
      %v1307 = vld [vmem:[%s1 + $0x1c0] sm:$0xff]
      %v1308 = vld [vmem:[%s1 + $0x1c8] sm:$0xff]
      %v1309 = vld [vmem:[%s1 + $0x1d0] sm:$0xff]
      %v1310 = vld [vmem:[%s1 + $0x1d8] sm:$0xff]
      %v1311 = vld [vmem:[%s2] sm:$0x3]
      %v1313 = vperm.slane %v1311, 0
      %v1314 = vperm.slane %v1311, 1
      %vm1317 = vcmask 916480
      %v1319 = vsel %vm1317, %v721, 0
      %v1322 = vsel %vm1317, %v722, 0
      %v1325 = vsel %vm1317, %v723, 0
      %v1328 = vsel %vm1317, %v724, 0
      %v1331 = vsel %vm1317, %v725, 0
      %v1334 = vsel %vm1317, %v1248, 0
      %v1336 = vsel %vm1317, %v1182, 0
      %v1338 = vsel %vm1317, %v1186, 0
      %v1340 = vsel %vm1317, %v1190, 0
      %v1342 = vsel %vm1317, %v1194, 0
      %v1344 = vsel %vm1317, %v1198, 0
      %v1347 = vsel %vm1317, %v1013, 0
      %v1350 = vsel %vm1317, %v1014, 0
      %v1353 = vsel %vm1317, %v1015, 0
      %v1356 = vsel %vm1317, %v1016, 0
      %v1359 = vsel %vm1317, %v1017, 0
      %v1362 = vsel %vm1317, %v1250, 0
      %v1364 = vsel %vm1317, %v1223, 0
      %v1366 = vsel %vm1317, %v1227, 0
      %v1368 = vsel %vm1317, %v1231, 0
      %v1370 = vsel %vm1317, %v1235, 0
      %v1372 = vsel %vm1317, %v1239, 0
      %1374 = vmatpush.msra.mxu0 %v1281
      %1375 = vmatpush.msra.mxu0 %v1279
      %1376 = vmatpush.msra.mxu0 %v1277
      %1377 = vmatpush.msra.mxu0 %v1275
      %1378 = vmatpush.msra.mxu0 %v1273
      %1379 = vmatpush.msra.mxu0 %v1271
      %1380 = vmatpush.msra.mxu0 %v1269
      %1381 = vmatpush.msra.mxu0 %v1267
      %1382 = vmatpush.msra.mxu0 %v1265
      %1383 = vmatpush.msra.mxu0 %v1263
      %1384 = vmatpush.msra.mxu0 %v1261
      %1385 = vmatpush.msra.mxu0 %v1259
      %1386 = vmatpush.msra.mxu0 %v1257
      %1387 = vmatpush.msra.mxu0 %v1255
      %1388 = vmatpush.msra.mxu0 %v1253
      %1389 = vmatpush.msra.mxu0 %v1251
      %1390 = vmatmul.f32.gmra.mxu0 %v707
      %v1391 = vpop.f32.mrf.mxu0
      %v1392 = vadd.f32 %v1313, %v1391
      %1393 = vmatmul.f32.gmra.mxu0 %v708
      %v1394 = vpop.f32.mrf.mxu0
      %v1395 = vadd.f32 %v1313, %v1394
      %1396 = vmatmul.f32.gmra.mxu0 %v709
      %v1397 = vpop.f32.mrf.mxu0
      %v1398 = vadd.f32 %v1313, %v1397
      %1399 = vmatmul.f32.gmra.mxu0 %v710
      %v1400 = vpop.f32.mrf.mxu0
      %v1401 = vadd.f32 %v1313, %v1400
      %1402 = vmatmul.f32.gmra.mxu0 %v711
      %v1403 = vpop.f32.mrf.mxu0
      %v1404 = vadd.f32 %v1313, %v1403
      %1405 = vmatmul.f32.gmra.mxu0 %v1247
      %v1406 = vpop.f32.mrf.mxu0
      %v1407 = vadd.f32 %v1313, %v1406
      %1408 = vmatmul.f32.gmra.mxu0 %v1180
      %v1409 = vpop.f32.mrf.mxu0
      %v1410 = vadd.f32 %v1313, %v1409
      %1411 = vmatmul.f32.gmra.mxu0 %v1184
      %v1412 = vpop.f32.mrf.mxu0
      %v1413 = vadd.f32 %v1313, %v1412
      %1414 = vmatmul.f32.gmra.mxu0 %v1188
      %v1415 = vpop.f32.mrf.mxu0
      %v1416 = vadd.f32 %v1313, %v1415
      %1417 = vmatmul.f32.gmra.mxu0 %v1192
      %v1418 = vpop.f32.mrf.mxu0
      %v1419 = vadd.f32 %v1313, %v1418
      %1420 = vmatmul.f32.gmra.mxu0 %v1196
      %v1421 = vpop.f32.mrf.mxu0
      %v1422 = vadd.f32 %v1313, %v1421
      %1423 = vmatmul.f32.gmra.mxu0 %v1001
      %v1424 = vpop.f32.mrf.mxu0
      %v1425 = vadd.f32 %v1313, %v1424
      %1426 = vmatmul.f32.gmra.mxu0 %v1002
      %v1427 = vpop.f32.mrf.mxu0
      %v1428 = vadd.f32 %v1313, %v1427
      %1429 = vmatmul.f32.gmra.mxu0 %v1003
      %v1430 = vpop.f32.mrf.mxu0
      %v1431 = vadd.f32 %v1313, %v1430
      %1432 = vmatmul.f32.gmra.mxu0 %v1004
      %v1433 = vpop.f32.mrf.mxu0
      %v1434 = vadd.f32 %v1313, %v1433
      %1435 = vmatmul.f32.gmra.mxu0 %v1005
      %v1436 = vpop.f32.mrf.mxu0
      %v1437 = vadd.f32 %v1313, %v1436
      %1438 = vmatmul.f32.gmra.mxu0 %v1249
      %v1439 = vpop.f32.mrf.mxu0
      %v1440 = vadd.f32 %v1313, %v1439
      %1441 = vmatmul.f32.gmra.mxu0 %v1221
      %v1442 = vpop.f32.mrf.mxu0
      %v1443 = vadd.f32 %v1313, %v1442
      %1444 = vmatmul.f32.gmra.mxu0 %v1225
      %v1445 = vpop.f32.mrf.mxu0
      %v1446 = vadd.f32 %v1313, %v1445
      %1447 = vmatmul.f32.gmra.mxu0 %v1229
      %v1448 = vpop.f32.mrf.mxu0
      %v1449 = vadd.f32 %v1313, %v1448
      %1450 = vmatmul.f32.gmra.mxu0 %v1233
      %v1451 = vpop.f32.mrf.mxu0
      %v1452 = vadd.f32 %v1313, %v1451
      %1453 = vmatmul.f32.gmra.mxu0 %v1237
      %v1454 = vpop.f32.mrf.mxu0
      %v1455 = vadd.f32 %v1313, %v1454
      %1456 = vdwg.mxu0
      %1457 = vmatpush.msra.mxu0 0.0
      %1458 = vmatpush.msra.mxu0 0.0
      %1459 = vmatpush.msra.mxu0 %v1309
      %1460 = vmatpush.msra.mxu0 %v1307
      %1461 = vmatpush.msra.mxu0 %v1305
      %1462 = vmatpush.msra.mxu0 %v1303
      %1463 = vmatpush.msra.mxu0 %v1301
      %1464 = vmatpush.msra.mxu0 %v1299
      %1465 = vmatpush.msra.mxu0 %v1297
      %1466 = vmatpush.msra.mxu0 %v1295
      %1467 = vmatpush.msra.mxu0 %v1293
      %1468 = vmatpush.msra.mxu0 %v1291
      %1469 = vmatpush.msra.mxu0 %v1289
      %1470 = vmatpush.msra.mxu0 %v1287
      %1471 = vmatpush.msra.mxu0 %v1285
      %1472 = vmatpush.msra.mxu0 %v1283
      %1473 = vmatmul.f32.gmra.mxu0 %v1319
      %v1474 = vpop.f32.mrf.mxu0
      %v1475 = vadd.f32 %v1392, %v1474
      %1476 = vmatmul.f32.gmra.mxu0 %v1322
      %v1477 = vpop.f32.mrf.mxu0
      %v1478 = vadd.f32 %v1395, %v1477
      %1479 = vmatmul.f32.gmra.mxu0 %v1325
      %v1480 = vpop.f32.mrf.mxu0
      %v1481 = vadd.f32 %v1398, %v1480
      %1482 = vmatmul.f32.gmra.mxu0 %v1328
      %v1483 = vpop.f32.mrf.mxu0
      %v1484 = vadd.f32 %v1401, %v1483
      %1485 = vmatmul.f32.gmra.mxu0 %v1331
      %v1486 = vpop.f32.mrf.mxu0
      %v1487 = vadd.f32 %v1404, %v1486
      %1488 = vmatmul.f32.gmra.mxu0 %v1334
      %v1489 = vpop.f32.mrf.mxu0
      %v1490 = vadd.f32 %v1407, %v1489
      %1491 = vmatmul.f32.gmra.mxu0 %v1336
      %v1492 = vpop.f32.mrf.mxu0
      %v1493 = vadd.f32 %v1410, %v1492
      %1494 = vmatmul.f32.gmra.mxu0 %v1338
      %v1495 = vpop.f32.mrf.mxu0
      %v1496 = vadd.f32 %v1413, %v1495
      %1497 = vmatmul.f32.gmra.mxu0 %v1340
      %v1498 = vpop.f32.mrf.mxu0
      %v1499 = vadd.f32 %v1416, %v1498
      %1500 = vmatmul.f32.gmra.mxu0 %v1342
      %v1501 = vpop.f32.mrf.mxu0
      %v1502 = vadd.f32 %v1419, %v1501
      %1503 = vmatmul.f32.gmra.mxu0 %v1344
      %v1504 = vpop.f32.mrf.mxu0
      %v1505 = vadd.f32 %v1422, %v1504
      %1506 = vmatmul.f32.gmra.mxu0 %v1347
      %v1507 = vpop.f32.mrf.mxu0
      %v1508 = vadd.f32 %v1425, %v1507
      %1509 = vmatmul.f32.gmra.mxu0 %v1350
      %v1510 = vpop.f32.mrf.mxu0
      %v1511 = vadd.f32 %v1428, %v1510
      %1512 = vmatmul.f32.gmra.mxu0 %v1353
      %v1513 = vpop.f32.mrf.mxu0
      %v1514 = vadd.f32 %v1431, %v1513
      %1515 = vmatmul.f32.gmra.mxu0 %v1356
      %v1516 = vpop.f32.mrf.mxu0
      %v1517 = vadd.f32 %v1434, %v1516
      %1518 = vmatmul.f32.gmra.mxu0 %v1359
      %v1519 = vpop.f32.mrf.mxu0
      %v1520 = vadd.f32 %v1437, %v1519
      %1521 = vmatmul.f32.gmra.mxu0 %v1362
      %v1522 = vpop.f32.mrf.mxu0
      %v1523 = vadd.f32 %v1440, %v1522
      %1524 = vmatmul.f32.gmra.mxu0 %v1364
      %v1525 = vpop.f32.mrf.mxu0
      %v1526 = vadd.f32 %v1443, %v1525
      %1527 = vmatmul.f32.gmra.mxu0 %v1366
      %v1528 = vpop.f32.mrf.mxu0
      %v1529 = vadd.f32 %v1446, %v1528
      %1530 = vmatmul.f32.gmra.mxu0 %v1368
      %v1531 = vpop.f32.mrf.mxu0
      %v1532 = vadd.f32 %v1449, %v1531
      %1533 = vmatmul.f32.gmra.mxu0 %v1370
      %v1534 = vpop.f32.mrf.mxu0
      %v1535 = vadd.f32 %v1452, %v1534
      %1536 = vmatmul.f32.gmra.mxu0 %v1372
      %v1537 = vpop.f32.mrf.mxu0
      %v1538 = vadd.f32 %v1455, %v1537
      %1539 = vdwg.mxu0
      %1540 = vmatpush.msra.mxu0 %v1282
      %1541 = vmatpush.msra.mxu0 %v1280
      %1542 = vmatpush.msra.mxu0 %v1278
      %1543 = vmatpush.msra.mxu0 %v1276
      %1544 = vmatpush.msra.mxu0 %v1274
      %1545 = vmatpush.msra.mxu0 %v1272
      %1546 = vmatpush.msra.mxu0 %v1270
      %1547 = vmatpush.msra.mxu0 %v1268
      %1548 = vmatpush.msra.mxu0 %v1266
      %1549 = vmatpush.msra.mxu0 %v1264
      %1550 = vmatpush.msra.mxu0 %v1262
      %1551 = vmatpush.msra.mxu0 %v1260
      %1552 = vmatpush.msra.mxu0 %v1258
      %1553 = vmatpush.msra.mxu0 %v1256
      %1554 = vmatpush.msra.mxu0 %v1254
      %1555 = vmatpush.msra.mxu0 %v1252
      %1556 = vmatmul.f32.gmra.mxu0 %v707
      %v1557 = vpop.f32.mrf.mxu0
      %v1558 = vadd.f32 %v1314, %v1557
      %1559 = vmatmul.f32.gmra.mxu0 %v708
      %v1560 = vpop.f32.mrf.mxu0
      %v1561 = vadd.f32 %v1314, %v1560
      %1562 = vmatmul.f32.gmra.mxu0 %v709
      %v1563 = vpop.f32.mrf.mxu0
      %v1564 = vadd.f32 %v1314, %v1563
      %1565 = vmatmul.f32.gmra.mxu0 %v710
      %v1566 = vpop.f32.mrf.mxu0
      %v1567 = vadd.f32 %v1314, %v1566
      %1568 = vmatmul.f32.gmra.mxu0 %v711
      %v1569 = vpop.f32.mrf.mxu0
      %v1570 = vadd.f32 %v1314, %v1569
      %1571 = vmatmul.f32.gmra.mxu0 %v1247
      %v1572 = vpop.f32.mrf.mxu0
      %v1573 = vadd.f32 %v1314, %v1572
      %1574 = vmatmul.f32.gmra.mxu0 %v1180
      %v1575 = vpop.f32.mrf.mxu0
      %v1576 = vadd.f32 %v1314, %v1575
      %1577 = vmatmul.f32.gmra.mxu0 %v1184
      %v1578 = vpop.f32.mrf.mxu0
      %v1579 = vadd.f32 %v1314, %v1578
      %1580 = vmatmul.f32.gmra.mxu0 %v1188
      %v1581 = vpop.f32.mrf.mxu0
      %v1582 = vadd.f32 %v1314, %v1581
      %1583 = vmatmul.f32.gmra.mxu0 %v1192
      %v1584 = vpop.f32.mrf.mxu0
      %v1585 = vadd.f32 %v1314, %v1584
      %1586 = vmatmul.f32.gmra.mxu0 %v1196
      %v1587 = vpop.f32.mrf.mxu0
      %v1588 = vadd.f32 %v1314, %v1587
      %1589 = vmatmul.f32.gmra.mxu0 %v1001
      %v1590 = vpop.f32.mrf.mxu0
      %v1591 = vadd.f32 %v1314, %v1590
      %1592 = vmatmul.f32.gmra.mxu0 %v1002
      %v1593 = vpop.f32.mrf.mxu0
      %v1594 = vadd.f32 %v1314, %v1593
      %1595 = vmatmul.f32.gmra.mxu0 %v1003
      %v1596 = vpop.f32.mrf.mxu0
      %v1597 = vadd.f32 %v1314, %v1596
      %1598 = vmatmul.f32.gmra.mxu0 %v1004
      %v1599 = vpop.f32.mrf.mxu0
      %v1600 = vadd.f32 %v1314, %v1599
      %1601 = vmatmul.f32.gmra.mxu0 %v1005
      %v1602 = vpop.f32.mrf.mxu0
      %v1603 = vadd.f32 %v1314, %v1602
      %1604 = vmatmul.f32.gmra.mxu0 %v1249
      %v1605 = vpop.f32.mrf.mxu0
      %v1606 = vadd.f32 %v1314, %v1605
      %1607 = vmatmul.f32.gmra.mxu0 %v1221
      %v1608 = vpop.f32.mrf.mxu0
      %v1609 = vadd.f32 %v1314, %v1608
      %1610 = vmatmul.f32.gmra.mxu0 %v1225
      %v1611 = vpop.f32.mrf.mxu0
      %v1612 = vadd.f32 %v1314, %v1611
      %1613 = vmatmul.f32.gmra.mxu0 %v1229
      %v1614 = vpop.f32.mrf.mxu0
      %v1615 = vadd.f32 %v1314, %v1614
      %1616 = vmatmul.f32.gmra.mxu0 %v1233
      %v1617 = vpop.f32.mrf.mxu0
      %v1618 = vadd.f32 %v1314, %v1617
      %1619 = vmatmul.f32.gmra.mxu0 %v1237
      %v1620 = vpop.f32.mrf.mxu0
      %v1621 = vadd.f32 %v1314, %v1620
      %1622 = vdwg.mxu0
      %1623 = vmatpush.msra.mxu0 0.0
      %1624 = vmatpush.msra.mxu0 0.0
      %1625 = vmatpush.msra.mxu0 %v1310
      %1626 = vmatpush.msra.mxu0 %v1308
      %1627 = vmatpush.msra.mxu0 %v1306
      %1628 = vmatpush.msra.mxu0 %v1304
      %1629 = vmatpush.msra.mxu0 %v1302
      %1630 = vmatpush.msra.mxu0 %v1300
      %1631 = vmatpush.msra.mxu0 %v1298
      %1632 = vmatpush.msra.mxu0 %v1296
      %1633 = vmatpush.msra.mxu0 %v1294
      %1634 = vmatpush.msra.mxu0 %v1292
      %1635 = vmatpush.msra.mxu0 %v1290
      %1636 = vmatpush.msra.mxu0 %v1288
      %1637 = vmatpush.msra.mxu0 %v1286
      %1638 = vmatpush.msra.mxu0 %v1284
      %1639 = vmatmul.f32.gmra.mxu0 %v1319
      %v1640 = vpop.f32.mrf.mxu0
      %v1641 = vadd.f32 %v1558, %v1640
      %1642 = vmatmul.f32.gmra.mxu0 %v1322
      %v1643 = vpop.f32.mrf.mxu0
      %v1644 = vadd.f32 %v1561, %v1643
      %1645 = vmatmul.f32.gmra.mxu0 %v1325
      %v1646 = vpop.f32.mrf.mxu0
      %v1647 = vadd.f32 %v1564, %v1646
      %1648 = vmatmul.f32.gmra.mxu0 %v1328
      %v1649 = vpop.f32.mrf.mxu0
      %v1650 = vadd.f32 %v1567, %v1649
      %1651 = vmatmul.f32.gmra.mxu0 %v1331
      %v1652 = vpop.f32.mrf.mxu0
      %v1653 = vadd.f32 %v1570, %v1652
      %1654 = vmatmul.f32.gmra.mxu0 %v1334
      %v1655 = vpop.f32.mrf.mxu0
      %v1656 = vadd.f32 %v1573, %v1655
      %1657 = vmatmul.f32.gmra.mxu0 %v1336
      %v1658 = vpop.f32.mrf.mxu0
      %v1659 = vadd.f32 %v1576, %v1658
      %1660 = vmatmul.f32.gmra.mxu0 %v1338
      %v1661 = vpop.f32.mrf.mxu0
      %v1662 = vadd.f32 %v1579, %v1661
      %1663 = vmatmul.f32.gmra.mxu0 %v1340
      %v1664 = vpop.f32.mrf.mxu0
      %v1665 = vadd.f32 %v1582, %v1664
      %1666 = vmatmul.f32.gmra.mxu0 %v1342
      %v1667 = vpop.f32.mrf.mxu0
      %v1668 = vadd.f32 %v1585, %v1667
      %1669 = vmatmul.f32.gmra.mxu0 %v1344
      %v1670 = vpop.f32.mrf.mxu0
      %v1671 = vadd.f32 %v1588, %v1670
      %1672 = vmatmul.f32.gmra.mxu0 %v1347
      %v1673 = vpop.f32.mrf.mxu0
      %v1674 = vadd.f32 %v1591, %v1673
      %1675 = vmatmul.f32.gmra.mxu0 %v1350
      %v1676 = vpop.f32.mrf.mxu0
      %v1677 = vadd.f32 %v1594, %v1676
      %1678 = vmatmul.f32.gmra.mxu0 %v1353
      %v1679 = vpop.f32.mrf.mxu0
      %v1680 = vadd.f32 %v1597, %v1679
      %1681 = vmatmul.f32.gmra.mxu0 %v1356
      %v1682 = vpop.f32.mrf.mxu0
      %v1683 = vadd.f32 %v1600, %v1682
      %1684 = vmatmul.f32.gmra.mxu0 %v1359
      %v1685 = vpop.f32.mrf.mxu0
      %v1686 = vadd.f32 %v1603, %v1685
      %1687 = vmatmul.f32.gmra.mxu0 %v1362
      %v1688 = vpop.f32.mrf.mxu0
      %v1689 = vadd.f32 %v1606, %v1688
      %1690 = vmatmul.f32.gmra.mxu0 %v1364
      %v1691 = vpop.f32.mrf.mxu0
      %v1692 = vadd.f32 %v1609, %v1691
      %1693 = vmatmul.f32.gmra.mxu0 %v1366
      %v1694 = vpop.f32.mrf.mxu0
      %v1695 = vadd.f32 %v1612, %v1694
      %1696 = vmatmul.f32.gmra.mxu0 %v1368
      %v1697 = vpop.f32.mrf.mxu0
      %v1698 = vadd.f32 %v1615, %v1697
      %1699 = vmatmul.f32.gmra.mxu0 %v1370
      %v1700 = vpop.f32.mrf.mxu0
      %v1701 = vadd.f32 %v1618, %v1700
      %1702 = vmatmul.f32.gmra.mxu0 %v1372
      %v1703 = vpop.f32.mrf.mxu0
      %v1704 = vadd.f32 %v1621, %v1703
      %1705 = vdwg.mxu0
      %v1706 = vmax.f32 %v1475, 0.0
      %v1707 = vmax.f32 %v1641, 0.0
      %v1708 = vmax.f32 %v1478, 0.0
      %v1709 = vmax.f32 %v1644, 0.0
      %v1710 = vmax.f32 %v1481, 0.0
      %v1711 = vmax.f32 %v1647, 0.0
      %v1712 = vmax.f32 %v1484, 0.0
      %v1713 = vmax.f32 %v1650, 0.0
      %v1714 = vmax.f32 %v1487, 0.0
      %v1715 = vmax.f32 %v1653, 0.0
      %v1716 = vmax.f32 %v1490, 0.0
      %v1717 = vmax.f32 %v1656, 0.0
      %v1718 = vmax.f32 %v1493, 0.0
      %v1719 = vmax.f32 %v1659, 0.0
      %v1720 = vmax.f32 %v1496, 0.0
      %v1721 = vmax.f32 %v1662, 0.0
      %v1722 = vmax.f32 %v1499, 0.0
      %v1723 = vmax.f32 %v1665, 0.0
      %v1724 = vmax.f32 %v1502, 0.0
      %v1725 = vmax.f32 %v1668, 0.0
      %v1726 = vmax.f32 %v1505, 0.0
      %v1727 = vmax.f32 %v1671, 0.0
      %v1728 = vmax.f32 %v1508, 0.0
      %v1729 = vmax.f32 %v1674, 0.0
      %v1730 = vmax.f32 %v1511, 0.0
      %v1731 = vmax.f32 %v1677, 0.0
      %v1732 = vmax.f32 %v1514, 0.0
      %v1733 = vmax.f32 %v1680, 0.0
      %v1734 = vmax.f32 %v1517, 0.0
      %v1735 = vmax.f32 %v1683, 0.0
      %v1736 = vmax.f32 %v1520, 0.0
      %v1737 = vmax.f32 %v1686, 0.0
      %v1738 = vmax.f32 %v1523, 0.0
      %v1739 = vmax.f32 %v1689, 0.0
      %v1740 = vmax.f32 %v1526, 0.0
      %v1741 = vmax.f32 %v1692, 0.0
      %v1742 = vmax.f32 %v1529, 0.0
      %v1743 = vmax.f32 %v1695, 0.0
      %v1744 = vmax.f32 %v1532, 0.0
      %v1745 = vmax.f32 %v1698, 0.0
      %v1746 = vmax.f32 %v1535, 0.0
      %v1747 = vmax.f32 %v1701, 0.0
      %v1748 = vmax.f32 %v1538, 0.0
      %v1749 = vmax.f32 %v1704, 0.0
      %v1750 = vld [vmem:[%s3] sm:$0xff]
      %v1751 = vld [vmem:[%s3 + $0x8] sm:$0xff]
      %v1752 = vld [vmem:[%s3 + $0x10] sm:$0xff]
      %v1753 = vld [vmem:[%s3 + $0x18] sm:$0xff]
      %v1754 = vld [vmem:[%s3 + $0x20] sm:$0xff]
      %v1755 = vld [vmem:[%s3 + $0x28] sm:$0xff]
      %v1756 = vld [vmem:[%s3 + $0x30] sm:$0xff]
      %v1757 = vld [vmem:[%s3 + $0x38] sm:$0xff]
      %v1758 = vld [vmem:[%s3 + $0x40] sm:$0xff]
      %v1759 = vld [vmem:[%s3 + $0x48] sm:$0xff]
      %v1760 = vld [vmem:[%s3 + $0x50] sm:$0xff]
      %v1761 = vld [vmem:[%s3 + $0x58] sm:$0xff]
      %v1762 = vld [vmem:[%s3 + $0x60] sm:$0xff]
      %v1763 = vld [vmem:[%s3 + $0x68] sm:$0xff]
      %v1764 = vld [vmem:[%s3 + $0x70] sm:$0xff]
      %v1765 = vld [vmem:[%s3 + $0x78] sm:$0xff]
      %v1766 = vld [vmem:[%s3 + $0x80] sm:$0xff]
      %v1767 = vld [vmem:[%s3 + $0x88] sm:$0xff]
      %v1768 = vld [vmem:[%s3 + $0x90] sm:$0xff]
      %v1769 = vld [vmem:[%s3 + $0x98] sm:$0xff]
      %v1770 = vld [vmem:[%s3 + $0xa0] sm:$0xff]
      %v1771 = vld [vmem:[%s3 + $0xa8] sm:$0xff]
      %v1772 = vld [vmem:[%s3 + $0xb0] sm:$0xff]
      %v1773 = vld [vmem:[%s3 + $0xb8] sm:$0xff]
      %v1774 = vld [vmem:[%s3 + $0xc0] sm:$0xff]
      %v1775 = vld [vmem:[%s3 + $0xc8] sm:$0xff]
      %v1776 = vld [vmem:[%s3 + $0xd0] sm:$0xff]
      %v1777 = vld [vmem:[%s3 + $0xd8] sm:$0xff]
      %v1778 = vld [vmem:[%s3 + $0xe0] sm:$0xff]
      %v1779 = vld [vmem:[%s3 + $0xe8] sm:$0xff]
      %v1780 = vld [vmem:[%s3 + $0xf0] sm:$0xff]
      %v1781 = vld [vmem:[%s3 + $0xf8] sm:$0xff]
      %v1782 = vld [vmem:[%s3 + $0x100] sm:$0xf]
      %v1783 = vld [vmem:[%s3 + $0x108] sm:$0xf]
      %vm1784 = vcmask 31744
      %v1786 = vsel %vm1784, %v1707, 0
      %v1789 = vsel %vm1784, %v1709, 0
      %v1792 = vsel %vm1784, %v1711, 0
      %v1795 = vsel %vm1784, %v1713, 0
      %v1798 = vsel %vm1784, %v1715, 0
      %v1801 = vsel %vm1784, %v1717, 0
      %v1804 = vsel %vm1784, %v1719, 0
      %v1807 = vsel %vm1784, %v1721, 0
      %v1810 = vsel %vm1784, %v1723, 0
      %v1813 = vsel %vm1784, %v1725, 0
      %v1816 = vsel %vm1784, %v1727, 0
      %v1819 = vsel %vm1784, %v1729, 0
      %v1822 = vsel %vm1784, %v1731, 0
      %v1825 = vsel %vm1784, %v1733, 0
      %v1828 = vsel %vm1784, %v1735, 0
      %v1831 = vsel %vm1784, %v1737, 0
      %v1834 = vsel %vm1784, %v1739, 0
      %v1837 = vsel %vm1784, %v1741, 0
      %v1840 = vsel %vm1784, %v1743, 0
      %v1843 = vsel %vm1784, %v1745, 0
      %v1846 = vsel %vm1784, %v1747, 0
      %v1849 = vsel %vm1784, %v1749, 0
      %v1852 = vsel %vm669, %v1782, 0
      %v1855 = vsel %vm669, %v1783, 0
      %1857 = vmatpush.msra.mxu0 %v1780
      %1858 = vmatpush.msra.mxu0 %v1778
      %1859 = vmatpush.msra.mxu0 %v1776
      %1860 = vmatpush.msra.mxu0 %v1774
      %1861 = vmatpush.msra.mxu0 %v1772
      %1862 = vmatpush.msra.mxu0 %v1770
      %1863 = vmatpush.msra.mxu0 %v1768
      %1864 = vmatpush.msra.mxu0 %v1766
      %1865 = vmatpush.msra.mxu0 %v1764
      %1866 = vmatpush.msra.mxu0 %v1762
      %1867 = vmatpush.msra.mxu0 %v1760
      %1868 = vmatpush.msra.mxu0 %v1758
      %1869 = vmatpush.msra.mxu0 %v1756
      %1870 = vmatpush.msra.mxu0 %v1754
      %1871 = vmatpush.msra.mxu0 %v1752
      %1872 = vmatpush.msra.mxu0 %v1750
      %1873 = vmatmul.f32.gmra.mxu0 %v1706
      %v1874 = vpop.f32.mrf.mxu0
      %v1875 = vadd.f32 0.0, %v1874
      %1876 = vmatmul.f32.gmra.mxu0 %v1708
      %v1877 = vpop.f32.mrf.mxu0
      %v1878 = vadd.f32 0.0, %v1877
      %1879 = vmatmul.f32.gmra.mxu0 %v1710
      %v1880 = vpop.f32.mrf.mxu0
      %v1881 = vadd.f32 0.0, %v1880
      %1882 = vmatmul.f32.gmra.mxu0 %v1712
      %v1883 = vpop.f32.mrf.mxu0
      %v1884 = vadd.f32 0.0, %v1883
      %1885 = vmatmul.f32.gmra.mxu0 %v1714
      %v1886 = vpop.f32.mrf.mxu0
      %v1887 = vadd.f32 0.0, %v1886
      %1888 = vmatmul.f32.gmra.mxu0 %v1716
      %v1889 = vpop.f32.mrf.mxu0
      %v1890 = vadd.f32 0.0, %v1889
      %1891 = vmatmul.f32.gmra.mxu0 %v1718
      %v1892 = vpop.f32.mrf.mxu0
      %v1893 = vadd.f32 0.0, %v1892
      %1894 = vmatmul.f32.gmra.mxu0 %v1720
      %v1895 = vpop.f32.mrf.mxu0
      %v1896 = vadd.f32 0.0, %v1895
      %1897 = vmatmul.f32.gmra.mxu0 %v1722
      %v1898 = vpop.f32.mrf.mxu0
      %v1899 = vadd.f32 0.0, %v1898
      %1900 = vmatmul.f32.gmra.mxu0 %v1724
      %v1901 = vpop.f32.mrf.mxu0
      %v1902 = vadd.f32 0.0, %v1901
      %1903 = vmatmul.f32.gmra.mxu0 %v1726
      %v1904 = vpop.f32.mrf.mxu0
      %v1905 = vadd.f32 0.0, %v1904
      %1906 = vmatmul.f32.gmra.mxu0 %v1728
      %v1907 = vpop.f32.mrf.mxu0
      %v1908 = vadd.f32 0.0, %v1907
      %1909 = vmatmul.f32.gmra.mxu0 %v1730
      %v1910 = vpop.f32.mrf.mxu0
      %v1911 = vadd.f32 0.0, %v1910
      %1912 = vmatmul.f32.gmra.mxu0 %v1732
      %v1913 = vpop.f32.mrf.mxu0
      %v1914 = vadd.f32 0.0, %v1913
      %1915 = vmatmul.f32.gmra.mxu0 %v1734
      %v1916 = vpop.f32.mrf.mxu0
      %v1917 = vadd.f32 0.0, %v1916
      %1918 = vmatmul.f32.gmra.mxu0 %v1736
      %v1919 = vpop.f32.mrf.mxu0
      %v1920 = vadd.f32 0.0, %v1919
      %1921 = vmatmul.f32.gmra.mxu0 %v1738
      %v1922 = vpop.f32.mrf.mxu0
      %v1923 = vadd.f32 0.0, %v1922
      %1924 = vmatmul.f32.gmra.mxu0 %v1740
      %v1925 = vpop.f32.mrf.mxu0
      %v1926 = vadd.f32 0.0, %v1925
      %1927 = vmatmul.f32.gmra.mxu0 %v1742
      %v1928 = vpop.f32.mrf.mxu0
      %v1929 = vadd.f32 0.0, %v1928
      %1930 = vmatmul.f32.gmra.mxu0 %v1744
      %v1931 = vpop.f32.mrf.mxu0
      %v1932 = vadd.f32 0.0, %v1931
      %1933 = vmatmul.f32.gmra.mxu0 %v1746
      %v1934 = vpop.f32.mrf.mxu0
      %v1935 = vadd.f32 0.0, %v1934
      %1936 = vmatmul.f32.gmra.mxu0 %v1748
      %v1937 = vpop.f32.mrf.mxu0
      %v1938 = vadd.f32 0.0, %v1937
      %1939 = vdwg.mxu0
      %1940 = vmatpush.msra.mxu0 0.0
      %1941 = vmatpush.msra.mxu0 0.0
      %1942 = vmatpush.msra.mxu0 0.0
      %1943 = vmatpush.msra.mxu0 0.0
      %1944 = vmatpush.msra.mxu0 0.0
      %1945 = vmatpush.msra.mxu0 0.0
      %1946 = vmatpush.msra.mxu0 0.0
      %1947 = vmatpush.msra.mxu0 0.0
      %1948 = vmatpush.msra.mxu0 0.0
      %1949 = vmatpush.msra.mxu0 0.0
      %1950 = vmatpush.msra.mxu0 0.0
      %1951 = vmatpush.msra.mxu0 0.0
      %1952 = vmatpush.msra.mxu0 0.0
      %1953 = vmatpush.msra.mxu0 0.0
      %1954 = vmatpush.msra.mxu0 0.0
      %1955 = vmatpush.msra.mxu0 %v1852
      %1956 = vmatmul.f32.gmra.mxu0 %v1786
      %v1957 = vpop.f32.mrf.mxu0
      %v1958 = vadd.f32 %v1875, %v1957
      %1959 = vmatmul.f32.gmra.mxu0 %v1789
      %v1960 = vpop.f32.mrf.mxu0
      %v1961 = vadd.f32 %v1878, %v1960
      %1962 = vmatmul.f32.gmra.mxu0 %v1792
      %v1963 = vpop.f32.mrf.mxu0
      %v1964 = vadd.f32 %v1881, %v1963
      %1965 = vmatmul.f32.gmra.mxu0 %v1795
      %v1966 = vpop.f32.mrf.mxu0
      %v1967 = vadd.f32 %v1884, %v1966
      %1968 = vmatmul.f32.gmra.mxu0 %v1798
      %v1969 = vpop.f32.mrf.mxu0
      %v1970 = vadd.f32 %v1887, %v1969
      %1971 = vmatmul.f32.gmra.mxu0 %v1801
      %v1972 = vpop.f32.mrf.mxu0
      %v1973 = vadd.f32 %v1890, %v1972
      %1974 = vmatmul.f32.gmra.mxu0 %v1804
      %v1975 = vpop.f32.mrf.mxu0
      %v1976 = vadd.f32 %v1893, %v1975
      %1977 = vmatmul.f32.gmra.mxu0 %v1807
      %v1978 = vpop.f32.mrf.mxu0
      %v1979 = vadd.f32 %v1896, %v1978
      %1980 = vmatmul.f32.gmra.mxu0 %v1810
      %v1981 = vpop.f32.mrf.mxu0
      %v1982 = vadd.f32 %v1899, %v1981
      %1983 = vmatmul.f32.gmra.mxu0 %v1813
      %v1984 = vpop.f32.mrf.mxu0
      %v1985 = vadd.f32 %v1902, %v1984
      %1986 = vmatmul.f32.gmra.mxu0 %v1816
      %v1987 = vpop.f32.mrf.mxu0
      %v1988 = vadd.f32 %v1905, %v1987
      %1989 = vmatmul.f32.gmra.mxu0 %v1819
      %v1990 = vpop.f32.mrf.mxu0
      %v1991 = vadd.f32 %v1908, %v1990
      %1992 = vmatmul.f32.gmra.mxu0 %v1822
      %v1993 = vpop.f32.mrf.mxu0
      %v1994 = vadd.f32 %v1911, %v1993
      %1995 = vmatmul.f32.gmra.mxu0 %v1825
      %v1996 = vpop.f32.mrf.mxu0
      %v1997 = vadd.f32 %v1914, %v1996
      %1998 = vmatmul.f32.gmra.mxu0 %v1828
      %v1999 = vpop.f32.mrf.mxu0
      %v2000 = vadd.f32 %v1917, %v1999
      %2001 = vmatmul.f32.gmra.mxu0 %v1831
      %v2002 = vpop.f32.mrf.mxu0
      %v2003 = vadd.f32 %v1920, %v2002
      %2004 = vmatmul.f32.gmra.mxu0 %v1834
      %v2005 = vpop.f32.mrf.mxu0
      %v2006 = vadd.f32 %v1923, %v2005
      %2007 = vmatmul.f32.gmra.mxu0 %v1837
      %v2008 = vpop.f32.mrf.mxu0
      %v2009 = vadd.f32 %v1926, %v2008
      %2010 = vmatmul.f32.gmra.mxu0 %v1840
      %v2011 = vpop.f32.mrf.mxu0
      %v2012 = vadd.f32 %v1929, %v2011
      %2013 = vmatmul.f32.gmra.mxu0 %v1843
      %v2014 = vpop.f32.mrf.mxu0
      %v2015 = vadd.f32 %v1932, %v2014
      %2016 = vmatmul.f32.gmra.mxu0 %v1846
      %v2017 = vpop.f32.mrf.mxu0
      %v2018 = vadd.f32 %v1935, %v2017
      %2019 = vmatmul.f32.gmra.mxu0 %v1849
      %v2020 = vpop.f32.mrf.mxu0
      %v2021 = vadd.f32 %v1938, %v2020
      %2022 = vdwg.mxu0
      %2023 = vmatpush.msra.mxu0 %v1781
      %2024 = vmatpush.msra.mxu0 %v1779
      %2025 = vmatpush.msra.mxu0 %v1777
      %2026 = vmatpush.msra.mxu0 %v1775
      %2027 = vmatpush.msra.mxu0 %v1773
      %2028 = vmatpush.msra.mxu0 %v1771
      %2029 = vmatpush.msra.mxu0 %v1769
      %2030 = vmatpush.msra.mxu0 %v1767
      %2031 = vmatpush.msra.mxu0 %v1765
      %2032 = vmatpush.msra.mxu0 %v1763
      %2033 = vmatpush.msra.mxu0 %v1761
      %2034 = vmatpush.msra.mxu0 %v1759
      %2035 = vmatpush.msra.mxu0 %v1757
      %2036 = vmatpush.msra.mxu0 %v1755
      %2037 = vmatpush.msra.mxu0 %v1753
      %2038 = vmatpush.msra.mxu0 %v1751
      %2039 = vmatmul.f32.gmra.mxu0 %v1706
      %v2040 = vpop.f32.mrf.mxu0
      %v2041 = vadd.f32 0.0, %v2040
      %2042 = vmatmul.f32.gmra.mxu0 %v1708
      %v2043 = vpop.f32.mrf.mxu0
      %v2044 = vadd.f32 0.0, %v2043
      %2045 = vmatmul.f32.gmra.mxu0 %v1710
      %v2046 = vpop.f32.mrf.mxu0
      %v2047 = vadd.f32 0.0, %v2046
      %2048 = vmatmul.f32.gmra.mxu0 %v1712
      %v2049 = vpop.f32.mrf.mxu0
      %v2050 = vadd.f32 0.0, %v2049
      %2051 = vmatmul.f32.gmra.mxu0 %v1714
      %v2052 = vpop.f32.mrf.mxu0
      %v2053 = vadd.f32 0.0, %v2052
      %2054 = vmatmul.f32.gmra.mxu0 %v1716
      %v2055 = vpop.f32.mrf.mxu0
      %v2056 = vadd.f32 0.0, %v2055
      %2057 = vmatmul.f32.gmra.mxu0 %v1718
      %v2058 = vpop.f32.mrf.mxu0
      %v2059 = vadd.f32 0.0, %v2058
      %2060 = vmatmul.f32.gmra.mxu0 %v1720
      %v2061 = vpop.f32.mrf.mxu0
      %v2062 = vadd.f32 0.0, %v2061
      %2063 = vmatmul.f32.gmra.mxu0 %v1722
      %v2064 = vpop.f32.mrf.mxu0
      %v2065 = vadd.f32 0.0, %v2064
      %2066 = vmatmul.f32.gmra.mxu0 %v1724
      %v2067 = vpop.f32.mrf.mxu0
      %v2068 = vadd.f32 0.0, %v2067
      %2069 = vmatmul.f32.gmra.mxu0 %v1726
      %v2070 = vpop.f32.mrf.mxu0
      %v2071 = vadd.f32 0.0, %v2070
      %2072 = vmatmul.f32.gmra.mxu0 %v1728
      %v2073 = vpop.f32.mrf.mxu0
      %v2074 = vadd.f32 0.0, %v2073
      %2075 = vmatmul.f32.gmra.mxu0 %v1730
      %v2076 = vpop.f32.mrf.mxu0
      %v2077 = vadd.f32 0.0, %v2076
      %2078 = vmatmul.f32.gmra.mxu0 %v1732
      %v2079 = vpop.f32.mrf.mxu0
      %v2080 = vadd.f32 0.0, %v2079
      %2081 = vmatmul.f32.gmra.mxu0 %v1734
      %v2082 = vpop.f32.mrf.mxu0
      %v2083 = vadd.f32 0.0, %v2082
      %2084 = vmatmul.f32.gmra.mxu0 %v1736
      %v2085 = vpop.f32.mrf.mxu0
      %v2086 = vadd.f32 0.0, %v2085
      %2087 = vmatmul.f32.gmra.mxu0 %v1738
      %v2088 = vpop.f32.mrf.mxu0
      %v2089 = vadd.f32 0.0, %v2088
      %2090 = vmatmul.f32.gmra.mxu0 %v1740
      %v2091 = vpop.f32.mrf.mxu0
      %v2092 = vadd.f32 0.0, %v2091
      %2093 = vmatmul.f32.gmra.mxu0 %v1742
      %v2094 = vpop.f32.mrf.mxu0
      %v2095 = vadd.f32 0.0, %v2094
      %2096 = vmatmul.f32.gmra.mxu0 %v1744
      %v2097 = vpop.f32.mrf.mxu0
      %v2098 = vadd.f32 0.0, %v2097
      %2099 = vmatmul.f32.gmra.mxu0 %v1746
      %v2100 = vpop.f32.mrf.mxu0
      %v2101 = vadd.f32 0.0, %v2100
      %2102 = vmatmul.f32.gmra.mxu0 %v1748
      %v2103 = vpop.f32.mrf.mxu0
      %v2104 = vadd.f32 0.0, %v2103
      %2105 = vdwg.mxu0
      %2106 = vmatpush.msra.mxu0 0.0
      %2107 = vmatpush.msra.mxu0 0.0
      %2108 = vmatpush.msra.mxu0 0.0
      %2109 = vmatpush.msra.mxu0 0.0
      %2110 = vmatpush.msra.mxu0 0.0
      %2111 = vmatpush.msra.mxu0 0.0
      %2112 = vmatpush.msra.mxu0 0.0
      %2113 = vmatpush.msra.mxu0 0.0
      %2114 = vmatpush.msra.mxu0 0.0
      %2115 = vmatpush.msra.mxu0 0.0
      %2116 = vmatpush.msra.mxu0 0.0
      %2117 = vmatpush.msra.mxu0 0.0
      %2118 = vmatpush.msra.mxu0 0.0
      %2119 = vmatpush.msra.mxu0 0.0
      %2120 = vmatpush.msra.mxu0 0.0
      %2121 = vmatpush.msra.mxu0 %v1855
      %2122 = vmatmul.f32.gmra.mxu0 %v1786
      %v2123 = vpop.f32.mrf.mxu0
      %v2124 = vadd.f32 %v2041, %v2123
      %2125 = vmatmul.f32.gmra.mxu0 %v1789
      %v2126 = vpop.f32.mrf.mxu0
      %v2127 = vadd.f32 %v2044, %v2126
      %2128 = vmatmul.f32.gmra.mxu0 %v1792
      %v2129 = vpop.f32.mrf.mxu0
      %v2130 = vadd.f32 %v2047, %v2129
      %2131 = vmatmul.f32.gmra.mxu0 %v1795
      %v2132 = vpop.f32.mrf.mxu0
      %v2133 = vadd.f32 %v2050, %v2132
      %2134 = vmatmul.f32.gmra.mxu0 %v1798
      %v2135 = vpop.f32.mrf.mxu0
      %v2136 = vadd.f32 %v2053, %v2135
      %2137 = vmatmul.f32.gmra.mxu0 %v1801
      %v2138 = vpop.f32.mrf.mxu0
      %v2139 = vadd.f32 %v2056, %v2138
      %2140 = vmatmul.f32.gmra.mxu0 %v1804
      %v2141 = vpop.f32.mrf.mxu0
      %v2142 = vadd.f32 %v2059, %v2141
      %2143 = vmatmul.f32.gmra.mxu0 %v1807
      %v2144 = vpop.f32.mrf.mxu0
      %v2145 = vadd.f32 %v2062, %v2144
      %2146 = vmatmul.f32.gmra.mxu0 %v1810
      %v2147 = vpop.f32.mrf.mxu0
      %v2148 = vadd.f32 %v2065, %v2147
      %2149 = vmatmul.f32.gmra.mxu0 %v1813
      %v2150 = vpop.f32.mrf.mxu0
      %v2151 = vadd.f32 %v2068, %v2150
      %2152 = vmatmul.f32.gmra.mxu0 %v1816
      %v2153 = vpop.f32.mrf.mxu0
      %v2154 = vadd.f32 %v2071, %v2153
      %2155 = vmatmul.f32.gmra.mxu0 %v1819
      %v2156 = vpop.f32.mrf.mxu0
      %v2157 = vadd.f32 %v2074, %v2156
      %2158 = vmatmul.f32.gmra.mxu0 %v1822
      %v2159 = vpop.f32.mrf.mxu0
      %v2160 = vadd.f32 %v2077, %v2159
      %2161 = vmatmul.f32.gmra.mxu0 %v1825
      %v2162 = vpop.f32.mrf.mxu0
      %v2163 = vadd.f32 %v2080, %v2162
      %2164 = vmatmul.f32.gmra.mxu0 %v1828
      %v2165 = vpop.f32.mrf.mxu0
      %v2166 = vadd.f32 %v2083, %v2165
      %2167 = vmatmul.f32.gmra.mxu0 %v1831
      %v2168 = vpop.f32.mrf.mxu0
      %v2169 = vadd.f32 %v2086, %v2168
      %2170 = vmatmul.f32.gmra.mxu0 %v1834
      %v2171 = vpop.f32.mrf.mxu0
      %v2172 = vadd.f32 %v2089, %v2171
      %2173 = vmatmul.f32.gmra.mxu0 %v1837
      %v2174 = vpop.f32.mrf.mxu0
      %v2175 = vadd.f32 %v2092, %v2174
      %2176 = vmatmul.f32.gmra.mxu0 %v1840
      %v2177 = vpop.f32.mrf.mxu0
      %v2178 = vadd.f32 %v2095, %v2177
      %2179 = vmatmul.f32.gmra.mxu0 %v1843
      %v2180 = vpop.f32.mrf.mxu0
      %v2181 = vadd.f32 %v2098, %v2180
      %2182 = vmatmul.f32.gmra.mxu0 %v1846
      %v2183 = vpop.f32.mrf.mxu0
      %v2184 = vadd.f32 %v2101, %v2183
      %2185 = vmatmul.f32.gmra.mxu0 %v1849
      %v2186 = vpop.f32.mrf.mxu0
      %v2187 = vadd.f32 %v2104, %v2186
      %2188 = vdwg.mxu0
      %2233 = vrot.lane.b32.xlu0 %v1958, 62
      %v2234 = vpop.permute.xlu0 %2233
      %2235 = vrot.lane.b32.xlu0 %v2124, 62
      %v2236 = vpop.permute.xlu0 %2235
      %2237 = vrot.lane.b32.xlu0 %v1961, 62
      %v2238 = vpop.permute.xlu0 %2237
      %2239 = vrot.lane.b32.xlu0 %v2127, 62
      %v2240 = vpop.permute.xlu0 %2239
      %2241 = vrot.lane.b32.xlu0 %v1964, 62
      %v2242 = vpop.permute.xlu0 %2241
      %2243 = vrot.lane.b32.xlu0 %v2130, 62
      %v2244 = vpop.permute.xlu0 %2243
      %2245 = vrot.lane.b32.xlu0 %v1967, 62
      %v2246 = vpop.permute.xlu0 %2245
      %2247 = vrot.lane.b32.xlu0 %v2133, 62
      %v2248 = vpop.permute.xlu0 %2247
      %2249 = vrot.lane.b32.xlu0 %v1970, 62
      %v2250 = vpop.permute.xlu0 %2249
      %2251 = vrot.lane.b32.xlu0 %v2136, 62
      %v2252 = vpop.permute.xlu0 %2251
      %2253 = vrot.lane.b32.xlu0 %v1973, 62
      %v2254 = vpop.permute.xlu0 %2253
      %2255 = vrot.lane.b32.xlu0 %v2139, 62
      %v2256 = vpop.permute.xlu0 %2255
      %2257 = vrot.lane.b32.xlu0 %v1976, 62
      %v2258 = vpop.permute.xlu0 %2257
      %2259 = vrot.lane.b32.xlu0 %v2142, 62
      %v2260 = vpop.permute.xlu0 %2259
      %2261 = vrot.lane.b32.xlu0 %v1979, 62
      %v2262 = vpop.permute.xlu0 %2261
      %2263 = vrot.lane.b32.xlu0 %v2145, 62
      %v2264 = vpop.permute.xlu0 %2263
      %2265 = vrot.lane.b32.xlu0 %v1982, 62
      %v2266 = vpop.permute.xlu0 %2265
      %2267 = vrot.lane.b32.xlu0 %v2148, 62
      %v2268 = vpop.permute.xlu0 %2267
      %2269 = vrot.lane.b32.xlu0 %v1985, 62
      %v2270 = vpop.permute.xlu0 %2269
      %2271 = vrot.lane.b32.xlu0 %v2151, 62
      %v2272 = vpop.permute.xlu0 %2271
      %2273 = vrot.lane.b32.xlu0 %v1988, 62
      %v2274 = vpop.permute.xlu0 %2273
      %2275 = vrot.lane.b32.xlu0 %v2154, 62
      %v2276 = vpop.permute.xlu0 %2275
      %2277 = vrot.lane.b32.xlu0 %v1991, 62
      %v2278 = vpop.permute.xlu0 %2277
      %2279 = vrot.lane.b32.xlu0 %v2157, 62
      %v2280 = vpop.permute.xlu0 %2279
      %2281 = vrot.lane.b32.xlu0 %v1994, 62
      %v2282 = vpop.permute.xlu0 %2281
      %2283 = vrot.lane.b32.xlu0 %v2160, 62
      %v2284 = vpop.permute.xlu0 %2283
      %2285 = vrot.lane.b32.xlu0 %v1997, 62
      %v2286 = vpop.permute.xlu0 %2285
      %2287 = vrot.lane.b32.xlu0 %v2163, 62
      %v2288 = vpop.permute.xlu0 %2287
      %2289 = vrot.lane.b32.xlu0 %v2000, 62
      %v2290 = vpop.permute.xlu0 %2289
      %2291 = vrot.lane.b32.xlu0 %v2166, 62
      %v2292 = vpop.permute.xlu0 %2291
      %2293 = vrot.lane.b32.xlu0 %v2003, 62
      %v2294 = vpop.permute.xlu0 %2293
      %2295 = vrot.lane.b32.xlu0 %v2169, 62
      %v2296 = vpop.permute.xlu0 %2295
      %2297 = vrot.lane.b32.xlu0 %v2006, 62
      %v2298 = vpop.permute.xlu0 %2297
      %2299 = vrot.lane.b32.xlu0 %v2172, 62
      %v2300 = vpop.permute.xlu0 %2299
      %2301 = vrot.lane.b32.xlu0 %v2009, 62
      %v2302 = vpop.permute.xlu0 %2301
      %2303 = vrot.lane.b32.xlu0 %v2175, 62
      %v2304 = vpop.permute.xlu0 %2303
      %2305 = vrot.lane.b32.xlu0 %v2012, 62
      %v2306 = vpop.permute.xlu0 %2305
      %2307 = vrot.lane.b32.xlu0 %v2178, 62
      %v2308 = vpop.permute.xlu0 %2307
      %2309 = vrot.lane.b32.xlu0 %v2015, 62
      %v2310 = vpop.permute.xlu0 %2309
      %2311 = vrot.lane.b32.xlu0 %v2181, 62
      %v2312 = vpop.permute.xlu0 %2311
      %2313 = vrot.lane.b32.xlu0 %v2018, 62
      %v2314 = vpop.permute.xlu0 %2313
      %2315 = vrot.lane.b32.xlu0 %v2184, 62
      %v2316 = vpop.permute.xlu0 %2315
      %2317 = vrot.lane.b32.xlu0 %v2021, 62
      %v2318 = vpop.permute.xlu0 %2317
      %2319 = vrot.lane.b32.xlu0 %v2187, 62
      %v2320 = vpop.permute.xlu0 %2319
      %vm2321 = vcmask 506880
      %v2322 = vsel %vm2321, %v2234, %v2236
      %v2323 = vsel %vm2321, %v2238, %v2240
      %v2324 = vsel %vm2321, %v2242, %v2244
      %v2325 = vsel %vm2321, %v2246, %v2248
      %v2326 = vsel %vm2321, %v2250, %v2252
      %v2327 = vsel %vm2321, %v2254, %v2256
      %v2328 = vsel %vm2321, %v2258, %v2260
      %v2329 = vsel %vm2321, %v2262, %v2264
      %v2330 = vsel %vm2321, %v2266, %v2268
      %v2331 = vsel %vm2321, %v2270, %v2272
      %v2332 = vsel %vm2321, %v2274, %v2276
      %v2333 = vsel %vm2321, %v2278, %v2280
      %v2334 = vsel %vm2321, %v2282, %v2284
      %v2335 = vsel %vm2321, %v2286, %v2288
      %v2336 = vsel %vm2321, %v2290, %v2292
      %v2337 = vsel %vm2321, %v2294, %v2296
      %v2338 = vsel %vm2321, %v2298, %v2300
      %v2339 = vsel %vm2321, %v2302, %v2304
      %v2340 = vsel %vm2321, %v2306, %v2308
      %v2341 = vsel %vm2321, %v2310, %v2312
      %v2342 = vsel %vm2321, %v2314, %v2316
      %v2343 = vsel %vm2321, %v2318, %v2320
      %v2366 = vmax.f32 %v1958, %v2322
      %v2367 = vmax.f32 %v1961, %v2323
      %v2368 = vmax.f32 %v1964, %v2324
      %v2369 = vmax.f32 %v1967, %v2325
      %v2370 = vmax.f32 %v1970, %v2326
      %v2371 = vmax.f32 %v1973, %v2327
      %v2372 = vmax.f32 %v1976, %v2328
      %v2373 = vmax.f32 %v1979, %v2329
      %v2374 = vmax.f32 %v1982, %v2330
      %v2375 = vmax.f32 %v1985, %v2331
      %v2376 = vmax.f32 %v1988, %v2332
      %v2377 = vmax.f32 %v1991, %v2333
      %v2378 = vmax.f32 %v1994, %v2334
      %v2379 = vmax.f32 %v1997, %v2335
      %v2380 = vmax.f32 %v2000, %v2336
      %v2381 = vmax.f32 %v2003, %v2337
      %v2382 = vmax.f32 %v2006, %v2338
      %v2383 = vmax.f32 %v2009, %v2339
      %v2384 = vmax.f32 %v2012, %v2340
      %v2385 = vmax.f32 %v2015, %v2341
      %v2386 = vmax.f32 %v2018, %v2342
      %v2387 = vmax.f32 %v2021, %v2343
      %v2388 = vld [vmem:[%s4] sm:$0xff]
      %v2389 = vld [vmem:[%s4 + $0x8] sm:$0xff]
      %v2390 = vld [vmem:[%s4 + $0x10] sm:$0xff]
      %v2391 = vld [vmem:[%s4 + $0x18] sm:$0xff]
      %v2392 = vld [vmem:[%s4 + $0x20] sm:$0xff]
      %v2393 = vld [vmem:[%s4 + $0x28] sm:$0xff]
      %v2394 = vld [vmem:[%s4 + $0x30] sm:$0xff]
      %v2395 = vld [vmem:[%s4 + $0x38] sm:$0xff]
      %v2396 = vld [vmem:[%s4 + $0x40] sm:$0xff]
      %v2397 = vld [vmem:[%s4 + $0x48] sm:$0xff]
      %v2398 = vld [vmem:[%s4 + $0x50] sm:$0xff]
      %v2399 = vld [vmem:[%s4 + $0x58] sm:$0xff]
      %v2400 = vld [vmem:[%s4 + $0x60] sm:$0xff]
      %v2401 = vld [vmem:[%s4 + $0x68] sm:$0xff]
      %v2402 = vld [vmem:[%s4 + $0x70] sm:$0xff]
      %v2403 = vld [vmem:[%s4 + $0x78] sm:$0xff]
      %v2404 = vld [vmem:[%s4 + $0x80] sm:$0xff]
      %v2405 = vld [vmem:[%s4 + $0x88] sm:$0xff]
      %v2406 = vld [vmem:[%s4 + $0x90] sm:$0xff]
      %v2407 = vld [vmem:[%s4 + $0x98] sm:$0xff]
      %v2408 = vld [vmem:[%s4 + $0xa0] sm:$0xff]
      %v2409 = vld [vmem:[%s4 + $0xa8] sm:$0xff]
      %v2410 = vld [vmem:[%s4 + $0xb0] sm:$0xff]
      %v2411 = vld [vmem:[%s4 + $0xb8] sm:$0xff]
      %v2412 = vld [vmem:[%s4 + $0xc0] sm:$0xff]
      %v2413 = vld [vmem:[%s4 + $0xc8] sm:$0xff]
      %v2414 = vld [vmem:[%s4 + $0xd0] sm:$0xff]
      %v2415 = vld [vmem:[%s4 + $0xd8] sm:$0xff]
      %v2416 = vld [vmem:[%s4 + $0xe0] sm:$0xff]
      %v2417 = vld [vmem:[%s4 + $0xe8] sm:$0xff]
      %v2418 = vld [vmem:[%s4 + $0xf0] sm:$0xff]
      %v2419 = vld [vmem:[%s4 + $0xf8] sm:$0xff]
      %v2420 = vld [vmem:[%s4 + $0x100] sm:$0xff]
      %v2421 = vld [vmem:[%s4 + $0x108] sm:$0xff]
      %v2422 = vld [vmem:[%s4 + $0x110] sm:$0xff]
      %v2423 = vld [vmem:[%s4 + $0x118] sm:$0xff]
      %v2424 = vld [vmem:[%s4 + $0x120] sm:$0xff]
      %v2425 = vld [vmem:[%s4 + $0x128] sm:$0xff]
      %v2426 = vld [vmem:[%s4 + $0x130] sm:$0xff]
      %v2427 = vld [vmem:[%s4 + $0x138] sm:$0xff]
      %v2428 = vld [vmem:[%s4 + $0x140] sm:$0xff]
      %v2429 = vld [vmem:[%s4 + $0x148] sm:$0xff]
      %v2430 = vld [vmem:[%s4 + $0x150] sm:$0xff]
      %v2431 = vld [vmem:[%s4 + $0x158] sm:$0xff]
      %v2433 = vsel %vm699, %v2389, 0
      %v2436 = vsel %vm699, %v2391, 0
      %v2439 = vsel %vm699, %v2393, 0
      %v2442 = vsel %vm699, %v2395, 0
      %v2445 = vsel %vm699, %v2397, 0
      %v2448 = vsel %vm699, %v2399, 0
      %v2451 = vsel %vm699, %v2401, 0
      %v2454 = vsel %vm699, %v2403, 0
      %v2457 = vsel %vm699, %v2405, 0
      %v2460 = vsel %vm699, %v2407, 0
      %v2463 = vsel %vm699, %v2409, 0
      %v2466 = vsel %vm699, %v2411, 0
      %v2469 = vsel %vm699, %v2413, 0
      %v2472 = vsel %vm699, %v2415, 0
      %v2475 = vsel %vm699, %v2417, 0
      %v2478 = vsel %vm699, %v2419, 0
      %v2481 = vsel %vm699, %v2421, 0
      %v2484 = vsel %vm699, %v2423, 0
      %v2487 = vsel %vm699, %v2425, 0
      %v2490 = vsel %vm699, %v2427, 0
      %v2493 = vsel %vm699, %v2429, 0
      %v2496 = vsel %vm699, %v2431, 0
      %2498 = vmatpush.msra.mxu0 %v2381
      %2499 = vmatpush.msra.mxu0 %v2380
      %2500 = vmatpush.msra.mxu0 %v2379
      %2501 = vmatpush.msra.mxu0 %v2378
      %2502 = vmatpush.msra.mxu0 %v2377
      %2503 = vmatpush.msra.mxu0 %v2376
      %2504 = vmatpush.msra.mxu0 %v2375
      %2505 = vmatpush.msra.mxu0 %v2374
      %2506 = vmatpush.msra.mxu0 %v2373
      %2507 = vmatpush.msra.mxu0 %v2372
      %2508 = vmatpush.msra.mxu0 %v2371
      %2509 = vmatpush.msra.mxu0 %v2370
      %2510 = vmatpush.msra.mxu0 %v2369
      %2511 = vmatpush.msra.mxu0 %v2368
      %2512 = vmatpush.msra.mxu0 %v2367
      %2513 = vmatpush.msra.mxu0 %v2366
      %2514 = vmatmul.f32.gmra.mxu0 %v2388
      %v2515 = vpop.f32.mrf.mxu0
      %v2516 = vadd.f32 0.0, %v2515
      %2517 = vmatmul.f32.gmra.mxu0 %v2390
      %v2518 = vpop.f32.mrf.mxu0
      %v2519 = vadd.f32 0.0, %v2518
      %2520 = vmatmul.f32.gmra.mxu0 %v2392
      %v2521 = vpop.f32.mrf.mxu0
      %v2522 = vadd.f32 0.0, %v2521
      %2523 = vmatmul.f32.gmra.mxu0 %v2394
      %v2524 = vpop.f32.mrf.mxu0
      %v2525 = vadd.f32 0.0, %v2524
      %2526 = vmatmul.f32.gmra.mxu0 %v2396
      %v2527 = vpop.f32.mrf.mxu0
      %v2528 = vadd.f32 0.0, %v2527
      %2529 = vmatmul.f32.gmra.mxu0 %v2398
      %v2530 = vpop.f32.mrf.mxu0
      %v2531 = vadd.f32 0.0, %v2530
      %2532 = vmatmul.f32.gmra.mxu0 %v2400
      %v2533 = vpop.f32.mrf.mxu0
      %v2534 = vadd.f32 0.0, %v2533
      %2535 = vmatmul.f32.gmra.mxu0 %v2402
      %v2536 = vpop.f32.mrf.mxu0
      %v2537 = vadd.f32 0.0, %v2536
      %2538 = vmatmul.f32.gmra.mxu0 %v2404
      %v2539 = vpop.f32.mrf.mxu0
      %v2540 = vadd.f32 0.0, %v2539
      %2541 = vmatmul.f32.gmra.mxu0 %v2406
      %v2542 = vpop.f32.mrf.mxu0
      %v2543 = vadd.f32 0.0, %v2542
      %2544 = vmatmul.f32.gmra.mxu0 %v2408
      %v2545 = vpop.f32.mrf.mxu0
      %v2546 = vadd.f32 0.0, %v2545
      %2547 = vmatmul.f32.gmra.mxu0 %v2410
      %v2548 = vpop.f32.mrf.mxu0
      %v2549 = vadd.f32 0.0, %v2548
      %2550 = vmatmul.f32.gmra.mxu0 %v2412
      %v2551 = vpop.f32.mrf.mxu0
      %v2552 = vadd.f32 0.0, %v2551
      %2553 = vmatmul.f32.gmra.mxu0 %v2414
      %v2554 = vpop.f32.mrf.mxu0
      %v2555 = vadd.f32 0.0, %v2554
      %2556 = vmatmul.f32.gmra.mxu0 %v2416
      %v2557 = vpop.f32.mrf.mxu0
      %v2558 = vadd.f32 0.0, %v2557
      %2559 = vmatmul.f32.gmra.mxu0 %v2418
      %v2560 = vpop.f32.mrf.mxu0
      %v2561 = vadd.f32 0.0, %v2560
      %2562 = vmatmul.f32.gmra.mxu0 %v2420
      %v2563 = vpop.f32.mrf.mxu0
      %v2564 = vadd.f32 0.0, %v2563
      %2565 = vmatmul.f32.gmra.mxu0 %v2422
      %v2566 = vpop.f32.mrf.mxu0
      %v2567 = vadd.f32 0.0, %v2566
      %2568 = vmatmul.f32.gmra.mxu0 %v2424
      %v2569 = vpop.f32.mrf.mxu0
      %v2570 = vadd.f32 0.0, %v2569
      %2571 = vmatmul.f32.gmra.mxu0 %v2426
      %v2572 = vpop.f32.mrf.mxu0
      %v2573 = vadd.f32 0.0, %v2572
      %2574 = vmatmul.f32.gmra.mxu0 %v2428
      %v2575 = vpop.f32.mrf.mxu0
      %v2576 = vadd.f32 0.0, %v2575
      %2577 = vmatmul.f32.gmra.mxu0 %v2430
      %v2578 = vpop.f32.mrf.mxu0
      %v2579 = vadd.f32 0.0, %v2578
      %2580 = vdwg.mxu0
      %2581 = vmatpush.msra.mxu0 0.0
      %2582 = vmatpush.msra.mxu0 0.0
      %2583 = vmatpush.msra.mxu0 0.0
      %2584 = vmatpush.msra.mxu0 0.0
      %2585 = vmatpush.msra.mxu0 0.0
      %2586 = vmatpush.msra.mxu0 0.0
      %2587 = vmatpush.msra.mxu0 0.0
      %2588 = vmatpush.msra.mxu0 0.0
      %2589 = vmatpush.msra.mxu0 0.0
      %2590 = vmatpush.msra.mxu0 0.0
      %2591 = vmatpush.msra.mxu0 %v2387
      %2592 = vmatpush.msra.mxu0 %v2386
      %2593 = vmatpush.msra.mxu0 %v2385
      %2594 = vmatpush.msra.mxu0 %v2384
      %2595 = vmatpush.msra.mxu0 %v2383
      %2596 = vmatpush.msra.mxu0 %v2382
      %2597 = vmatmul.f32.gmra.mxu0 %v2433
      %v2598 = vpop.f32.mrf.mxu0
      %v2599 = vadd.f32 %v2516, %v2598
      %2600 = vmatmul.f32.gmra.mxu0 %v2436
      %v2601 = vpop.f32.mrf.mxu0
      %v2602 = vadd.f32 %v2519, %v2601
      %2603 = vmatmul.f32.gmra.mxu0 %v2439
      %v2604 = vpop.f32.mrf.mxu0
      %v2605 = vadd.f32 %v2522, %v2604
      %2606 = vmatmul.f32.gmra.mxu0 %v2442
      %v2607 = vpop.f32.mrf.mxu0
      %v2608 = vadd.f32 %v2525, %v2607
      %2609 = vmatmul.f32.gmra.mxu0 %v2445
      %v2610 = vpop.f32.mrf.mxu0
      %v2611 = vadd.f32 %v2528, %v2610
      %2612 = vmatmul.f32.gmra.mxu0 %v2448
      %v2613 = vpop.f32.mrf.mxu0
      %v2614 = vadd.f32 %v2531, %v2613
      %2615 = vmatmul.f32.gmra.mxu0 %v2451
      %v2616 = vpop.f32.mrf.mxu0
      %v2617 = vadd.f32 %v2534, %v2616
      %2618 = vmatmul.f32.gmra.mxu0 %v2454
      %v2619 = vpop.f32.mrf.mxu0
      %v2620 = vadd.f32 %v2537, %v2619
      %2621 = vmatmul.f32.gmra.mxu0 %v2457
      %v2622 = vpop.f32.mrf.mxu0
      %v2623 = vadd.f32 %v2540, %v2622
      %2624 = vmatmul.f32.gmra.mxu0 %v2460
      %v2625 = vpop.f32.mrf.mxu0
      %v2626 = vadd.f32 %v2543, %v2625
      %2627 = vmatmul.f32.gmra.mxu0 %v2463
      %v2628 = vpop.f32.mrf.mxu0
      %v2629 = vadd.f32 %v2546, %v2628
      %2630 = vmatmul.f32.gmra.mxu0 %v2466
      %v2631 = vpop.f32.mrf.mxu0
      %v2632 = vadd.f32 %v2549, %v2631
      %2633 = vmatmul.f32.gmra.mxu0 %v2469
      %v2634 = vpop.f32.mrf.mxu0
      %v2635 = vadd.f32 %v2552, %v2634
      %2636 = vmatmul.f32.gmra.mxu0 %v2472
      %v2637 = vpop.f32.mrf.mxu0
      %v2638 = vadd.f32 %v2555, %v2637
      %2639 = vmatmul.f32.gmra.mxu0 %v2475
      %v2640 = vpop.f32.mrf.mxu0
      %v2641 = vadd.f32 %v2558, %v2640
      %2642 = vmatmul.f32.gmra.mxu0 %v2478
      %v2643 = vpop.f32.mrf.mxu0
      %v2644 = vadd.f32 %v2561, %v2643
      %2645 = vmatmul.f32.gmra.mxu0 %v2481
      %v2646 = vpop.f32.mrf.mxu0
      %v2647 = vadd.f32 %v2564, %v2646
      %2648 = vmatmul.f32.gmra.mxu0 %v2484
      %v2649 = vpop.f32.mrf.mxu0
      %v2650 = vadd.f32 %v2567, %v2649
      %2651 = vmatmul.f32.gmra.mxu0 %v2487
      %v2652 = vpop.f32.mrf.mxu0
      %v2653 = vadd.f32 %v2570, %v2652
      %2654 = vmatmul.f32.gmra.mxu0 %v2490
      %v2655 = vpop.f32.mrf.mxu0
      %v2656 = vadd.f32 %v2573, %v2655
      %2657 = vmatmul.f32.gmra.mxu0 %v2493
      %v2658 = vpop.f32.mrf.mxu0
      %v2659 = vadd.f32 %v2576, %v2658
      %2660 = vmatmul.f32.gmra.mxu0 %v2496
      %v2661 = vpop.f32.mrf.mxu0
      %v2662 = vadd.f32 %v2579, %v2661
      %2663 = vdwg.mxu0
      %v2664 = vmax.f32 %v2599, %v2632
      %v2665 = vmax.f32 %v2602, %v2635
      %v2666 = vmax.f32 %v2605, %v2638
      %v2667 = vmax.f32 %v2608, %v2641
      %v2668 = vmax.f32 %v2611, %v2644
      %v2669 = vmax.f32 %v2614, %v2647
      %v2670 = vmax.f32 %v2617, %v2650
      %v2671 = vmax.f32 %v2620, %v2653
      %v2672 = vmax.f32 %v2623, %v2656
      %v2673 = vmax.f32 %v2626, %v2659
      %v2674 = vmax.f32 %v2629, %v2662
      %v2678 = vrot.slane %v2664, 1
      %v2679 = vrot.slane %v2665, 1
      %v2680 = vsel %vm579, %v2678, %v2679
      %v2681 = vrot.slane %v2666, 1
      %v2682 = vsel %vm579, %v2679, %v2681
      %2683 = vrot.lane.b32.xlu0 %v2680, 22
      %v2684 = vpop.permute.xlu0 %2683
      %2685 = vrot.lane.b32.xlu0 %v2682, 22
      %v2686 = vpop.permute.xlu0 %2685
      %2687 = vrot.lane.b32.xlu0 %v2681, 22
      %v2688 = vpop.permute.xlu0 %2687
      %v2692 = vrot.slane %v2664, 2
      %v2693 = vrot.slane %v2665, 2
      %v2694 = vsel %vm609, %v2692, %v2693
      %v2695 = vrot.slane %v2666, 2
      %v2696 = vsel %vm609, %v2693, %v2695
      %2697 = vrot.lane.b32.xlu0 %v2694, 44
      %v2698 = vpop.permute.xlu0 %2697
      %2699 = vrot.lane.b32.xlu0 %v2696, 44
      %v2700 = vpop.permute.xlu0 %2699
      %2701 = vrot.lane.b32.xlu0 %v2695, 44
      %v2702 = vpop.permute.xlu0 %2701
      %2706 = vrot.lane.b32.xlu0 %v2664, 44
      %v2707 = vpop.permute.xlu0 %2706
      %2708 = vrot.lane.b32.xlu0 %v2665, 44
      %v2709 = vpop.permute.xlu0 %2708
      %2710 = vrot.lane.b32.xlu0 %v2666, 44
      %v2711 = vpop.permute.xlu0 %2710
      %2715 = vrot.lane.b32.xlu0 %v2680, 66
      %v2716 = vpop.permute.xlu0 %2715
      %2717 = vrot.lane.b32.xlu0 %v2682, 66
      %v2718 = vpop.permute.xlu0 %2717
      %2719 = vrot.lane.b32.xlu0 %v2681, 66
      %v2720 = vpop.permute.xlu0 %2719
      %2724 = vrot.lane.b32.xlu0 %v2694, 88
      %v2725 = vpop.permute.xlu0 %2724
      %2726 = vrot.lane.b32.xlu0 %v2696, 88
      %v2727 = vpop.permute.xlu0 %2726
      %2728 = vrot.lane.b32.xlu0 %v2695, 88
      %v2729 = vpop.permute.xlu0 %2728
      %2733 = vrot.lane.b32.xlu0 %v2664, 88
      %v2734 = vpop.permute.xlu0 %2733
      %2735 = vrot.lane.b32.xlu0 %v2665, 88
      %v2736 = vpop.permute.xlu0 %2735
      %2737 = vrot.lane.b32.xlu0 %v2666, 88
      %v2738 = vpop.permute.xlu0 %2737
      %2742 = vrot.lane.b32.xlu0 %v2680, 110
      %v2743 = vpop.permute.xlu0 %2742
      %2744 = vrot.lane.b32.xlu0 %v2682, 110
      %v2745 = vpop.permute.xlu0 %2744
      %2746 = vrot.lane.b32.xlu0 %v2681, 110
      %v2747 = vpop.permute.xlu0 %2746
      %2751 = vrot.lane.b32.xlu0 %v2694, 4
      %v2752 = vpop.permute.xlu0 %2751
      %2753 = vrot.lane.b32.xlu0 %v2696, 4
      %v2754 = vpop.permute.xlu0 %2753
      %2755 = vrot.lane.b32.xlu0 %v2695, 4
      %v2756 = vpop.permute.xlu0 %2755
      %vm2760 = vcmask 179200
      %v2761 = vsel %vm2760, %v2664, %v2684
      %v2762 = vsel %vm2760, %v2665, %v2686
      %v2763 = vsel %vm2760, %v2666, %v2688
      %vm2764 = vcmask 359424
      %v2765 = vsel %vm2764, %v2761, %v2698
      %v2766 = vsel %vm2764, %v2762, %v2700
      %v2767 = vsel %vm2764, %v2763, %v2702
      %vm2768 = vcmask 539648
      %v2769 = vsel %vm2768, %v2765, %v2707
      %v2770 = vsel %vm2768, %v2766, %v2709
      %v2771 = vsel %vm2768, %v2767, %v2711
      %vm2772 = vcmask 719872
      %v2773 = vsel %vm2772, %v2769, %v2716
      %v2774 = vsel %vm2772, %v2770, %v2718
      %v2775 = vsel %vm2772, %v2771, %v2720
      %vm2776 = vcmask 900096
      %v2777 = vsel %vm2776, %v2773, %v2725
      %v2778 = vsel %vm2776, %v2774, %v2727
      %v2779 = vsel %vm2776, %v2775, %v2729
      %v2780 = vsel %vm1784, %v2725, %v2734
      %v2781 = vsel %vm1784, %v2727, %v2736
      %v2782 = vsel %vm1784, %v2729, %v2738
      %vm2783 = vcmask 211968
      %v2784 = vsel %vm2783, %v2780, %v2743
      %v2785 = vsel %vm2783, %v2781, %v2745
      %v2786 = vsel %vm2783, %v2782, %v2747
      %v2787 = vsel %vm699, %v2784, %v2752
      %v2788 = vsel %vm699, %v2785, %v2754
      %v2789 = vsel %vm699, %v2786, %v2756
      %v2793 = vrot.slane %v2667, 1
      %v2794 = vsel %vm579, %v2681, %v2793
      %v2795 = vrot.slane %v2668, 1
      %v2796 = vsel %vm579, %v2793, %v2795
      %v2797 = vrot.slane %v2669, 1
      %v2798 = vsel %vm579, %v2795, %v2797
      %2799 = vrot.lane.b32.xlu0 %v2794, 22
      %v2800 = vpop.permute.xlu0 %2799
      %2801 = vrot.lane.b32.xlu0 %v2796, 22
      %v2802 = vpop.permute.xlu0 %2801
      %2803 = vrot.lane.b32.xlu0 %v2798, 22
      %v2804 = vpop.permute.xlu0 %2803
      %2805 = vrot.lane.b32.xlu0 %v2797, 22
      %v2806 = vpop.permute.xlu0 %2805
      %v2811 = vrot.slane %v2667, 2
      %v2812 = vrot.slane %v2668, 2
      %v2813 = vsel %vm609, %v2811, %v2812
      %v2814 = vrot.slane %v2669, 2
      %v2815 = vsel %vm609, %v2812, %v2814
      %2816 = vrot.lane.b32.xlu0 %v2811, 44
      %v2817 = vpop.permute.xlu0 %2816
      %2818 = vrot.lane.b32.xlu0 %v2813, 44
      %v2819 = vpop.permute.xlu0 %2818
      %2820 = vrot.lane.b32.xlu0 %v2815, 44
      %v2821 = vpop.permute.xlu0 %2820
      %2822 = vrot.lane.b32.xlu0 %v2814, 44
      %v2823 = vpop.permute.xlu0 %2822
      %2828 = vrot.lane.b32.xlu0 %v2667, 44
      %v2829 = vpop.permute.xlu0 %2828
      %2830 = vrot.lane.b32.xlu0 %v2668, 44
      %v2831 = vpop.permute.xlu0 %2830
      %2832 = vrot.lane.b32.xlu0 %v2669, 44
      %v2833 = vpop.permute.xlu0 %2832
      %2837 = vrot.lane.b32.xlu0 %v2794, 66
      %v2838 = vpop.permute.xlu0 %2837
      %2839 = vrot.lane.b32.xlu0 %v2796, 66
      %v2840 = vpop.permute.xlu0 %2839
      %2841 = vrot.lane.b32.xlu0 %v2798, 66
      %v2842 = vpop.permute.xlu0 %2841
      %2843 = vrot.lane.b32.xlu0 %v2797, 66
      %v2844 = vpop.permute.xlu0 %2843
      %2849 = vrot.lane.b32.xlu0 %v2811, 88
      %v2850 = vpop.permute.xlu0 %2849
      %2851 = vrot.lane.b32.xlu0 %v2813, 88
      %v2852 = vpop.permute.xlu0 %2851
      %2853 = vrot.lane.b32.xlu0 %v2815, 88
      %v2854 = vpop.permute.xlu0 %2853
      %2855 = vrot.lane.b32.xlu0 %v2814, 88
      %v2856 = vpop.permute.xlu0 %2855
      %2861 = vrot.lane.b32.xlu0 %v2667, 88
      %v2862 = vpop.permute.xlu0 %2861
      %2863 = vrot.lane.b32.xlu0 %v2668, 88
      %v2864 = vpop.permute.xlu0 %2863
      %2865 = vrot.lane.b32.xlu0 %v2669, 88
      %v2866 = vpop.permute.xlu0 %2865
      %2870 = vrot.lane.b32.xlu0 %v2794, 110
      %v2871 = vpop.permute.xlu0 %2870
      %2872 = vrot.lane.b32.xlu0 %v2796, 110
      %v2873 = vpop.permute.xlu0 %2872
      %2874 = vrot.lane.b32.xlu0 %v2798, 110
      %v2875 = vpop.permute.xlu0 %2874
      %2876 = vrot.lane.b32.xlu0 %v2797, 110
      %v2877 = vpop.permute.xlu0 %2876
      %2882 = vrot.lane.b32.xlu0 %v2811, 4
      %v2883 = vpop.permute.xlu0 %2882
      %2884 = vrot.lane.b32.xlu0 %v2813, 4
      %v2885 = vpop.permute.xlu0 %2884
      %2886 = vrot.lane.b32.xlu0 %v2815, 4
      %v2887 = vpop.permute.xlu0 %2886
      %2888 = vrot.lane.b32.xlu0 %v2814, 4
      %v2889 = vpop.permute.xlu0 %2888
      %v2894 = vsel %vm2760, %v2666, %v2800
      %v2895 = vsel %vm2760, %v2667, %v2802
      %v2896 = vsel %vm2760, %v2668, %v2804
      %v2897 = vsel %vm2760, %v2669, %v2806
      %v2898 = vsel %vm2764, %v2894, %v2817
      %v2899 = vsel %vm2764, %v2895, %v2819
      %v2900 = vsel %vm2764, %v2896, %v2821
      %v2901 = vsel %vm2764, %v2897, %v2823
      %v2902 = vsel %vm2768, %v2898, %v2711
      %v2903 = vsel %vm2768, %v2899, %v2829
      %v2904 = vsel %vm2768, %v2900, %v2831
      %v2905 = vsel %vm2768, %v2901, %v2833
      %v2906 = vsel %vm2772, %v2902, %v2838
      %v2907 = vsel %vm2772, %v2903, %v2840
      %v2908 = vsel %vm2772, %v2904, %v2842
      %v2909 = vsel %vm2772, %v2905, %v2844
      %v2910 = vsel %vm2776, %v2906, %v2850
      %v2911 = vsel %vm2776, %v2907, %v2852
      %v2912 = vsel %vm2776, %v2908, %v2854
      %v2913 = vsel %vm2776, %v2909, %v2856
      %v2914 = vsel %vm1784, %v2850, %v2738
      %v2915 = vsel %vm1784, %v2852, %v2862
      %v2916 = vsel %vm1784, %v2854, %v2864
      %v2917 = vsel %vm1784, %v2856, %v2866
      %v2918 = vsel %vm2783, %v2914, %v2871
      %v2919 = vsel %vm2783, %v2915, %v2873
      %v2920 = vsel %vm2783, %v2916, %v2875
      %v2921 = vsel %vm2783, %v2917, %v2877
      %v2922 = vsel %vm699, %v2918, %v2883
      %v2923 = vsel %vm699, %v2919, %v2885
      %v2924 = vsel %vm699, %v2920, %v2887
      %v2925 = vsel %vm699, %v2921, %v2889
      %v2929 = vrot.slane %v2670, 1
      %v2930 = vsel %vm579, %v2797, %v2929
      %v2931 = vrot.slane %v2671, 1
      %v2932 = vsel %vm579, %v2929, %v2931
      %v2933 = vrot.slane %v2672, 1
      %v2934 = vsel %vm579, %v2931, %v2933
      %2935 = vrot.lane.b32.xlu0 %v2930, 22
      %v2936 = vpop.permute.xlu0 %2935
      %2937 = vrot.lane.b32.xlu0 %v2932, 22
      %v2938 = vpop.permute.xlu0 %2937
      %2939 = vrot.lane.b32.xlu0 %v2934, 22
      %v2940 = vpop.permute.xlu0 %2939
      %v2944 = vrot.slane %v2670, 2
      %v2945 = vsel %vm609, %v2814, %v2944
      %v2946 = vrot.slane %v2671, 2
      %v2947 = vsel %vm609, %v2944, %v2946
      %v2948 = vrot.slane %v2672, 2
      %v2949 = vsel %vm609, %v2946, %v2948
      %2950 = vrot.lane.b32.xlu0 %v2945, 44
      %v2951 = vpop.permute.xlu0 %2950
      %2952 = vrot.lane.b32.xlu0 %v2947, 44
      %v2953 = vpop.permute.xlu0 %2952
      %2954 = vrot.lane.b32.xlu0 %v2949, 44
      %v2955 = vpop.permute.xlu0 %2954
      %2959 = vrot.lane.b32.xlu0 %v2670, 44
      %v2960 = vpop.permute.xlu0 %2959
      %2961 = vrot.lane.b32.xlu0 %v2671, 44
      %v2962 = vpop.permute.xlu0 %2961
      %2965 = vrot.lane.b32.xlu0 %v2930, 66
      %v2966 = vpop.permute.xlu0 %2965
      %2967 = vrot.lane.b32.xlu0 %v2932, 66
      %v2968 = vpop.permute.xlu0 %2967
      %2969 = vrot.lane.b32.xlu0 %v2934, 66
      %v2970 = vpop.permute.xlu0 %2969
      %2974 = vrot.lane.b32.xlu0 %v2945, 88
      %v2975 = vpop.permute.xlu0 %2974
      %2976 = vrot.lane.b32.xlu0 %v2947, 88
      %v2977 = vpop.permute.xlu0 %2976
      %2978 = vrot.lane.b32.xlu0 %v2949, 88
      %v2979 = vpop.permute.xlu0 %2978
      %2983 = vrot.lane.b32.xlu0 %v2670, 88
      %v2984 = vpop.permute.xlu0 %2983
      %2985 = vrot.lane.b32.xlu0 %v2671, 88
      %v2986 = vpop.permute.xlu0 %2985
      %2989 = vrot.lane.b32.xlu0 %v2930, 110
      %v2990 = vpop.permute.xlu0 %2989
      %2991 = vrot.lane.b32.xlu0 %v2932, 110
      %v2992 = vpop.permute.xlu0 %2991
      %2993 = vrot.lane.b32.xlu0 %v2934, 110
      %v2994 = vpop.permute.xlu0 %2993
      %2998 = vrot.lane.b32.xlu0 %v2945, 4
      %v2999 = vpop.permute.xlu0 %2998
      %3000 = vrot.lane.b32.xlu0 %v2947, 4
      %v3001 = vpop.permute.xlu0 %3000
      %3002 = vrot.lane.b32.xlu0 %v2949, 4
      %v3003 = vpop.permute.xlu0 %3002
      %v3007 = vsel %vm2760, %v2669, %v2936
      %v3008 = vsel %vm2760, %v2670, %v2938
      %v3009 = vsel %vm2760, %v2671, %v2940
      %v3010 = vsel %vm2764, %v3007, %v2951
      %v3011 = vsel %vm2764, %v3008, %v2953
      %v3012 = vsel %vm2764, %v3009, %v2955
      %v3013 = vsel %vm2768, %v3010, %v2833
      %v3014 = vsel %vm2768, %v3011, %v2960
      %v3015 = vsel %vm2768, %v3012, %v2962
      %v3016 = vsel %vm2772, %v3013, %v2966
      %v3017 = vsel %vm2772, %v3014, %v2968
      %v3018 = vsel %vm2772, %v3015, %v2970
      %v3019 = vsel %vm2776, %v3016, %v2975
      %v3020 = vsel %vm2776, %v3017, %v2977
      %v3021 = vsel %vm2776, %v3018, %v2979
      %v3022 = vsel %vm1784, %v2975, %v2866
      %v3023 = vsel %vm1784, %v2977, %v2984
      %v3024 = vsel %vm1784, %v2979, %v2986
      %v3025 = vsel %vm2783, %v3022, %v2990
      %v3026 = vsel %vm2783, %v3023, %v2992
      %v3027 = vsel %vm2783, %v3024, %v2994
      %v3028 = vsel %vm699, %v3025, %v2999
      %v3029 = vsel %vm699, %v3026, %v3001
      %v3030 = vsel %vm699, %v3027, %v3003
      %v3033 = vrot.slane %v2673, 1
      %v3034 = vsel %vm579, %v2933, %v3033
      %v3035 = vrot.slane %v2674, 1
      %v3036 = vsel %vm579, %v3033, %v3035
      %3037 = vrot.lane.b32.xlu0 %v3034, 22
      %v3038 = vpop.permute.xlu0 %3037
      %3039 = vrot.lane.b32.xlu0 %v3036, 22
      %v3040 = vpop.permute.xlu0 %3039
      %3041 = vrot.lane.b32.xlu0 %v3035, 22
      %v3042 = vpop.permute.xlu0 %3041
      %v3046 = vrot.slane %v2673, 2
      %v3047 = vsel %vm609, %v2948, %v3046
      %v3048 = vrot.slane %v2674, 2
      %v3049 = vsel %vm609, %v3046, %v3048
      %3050 = vrot.lane.b32.xlu0 %v3047, 44
      %v3051 = vpop.permute.xlu0 %3050
      %3052 = vrot.lane.b32.xlu0 %v3049, 44
      %v3053 = vpop.permute.xlu0 %3052
      %3054 = vrot.lane.b32.xlu0 %v3048, 44
      %v3055 = vpop.permute.xlu0 %3054
      %3059 = vrot.lane.b32.xlu0 %v2672, 44
      %v3060 = vpop.permute.xlu0 %3059
      %3061 = vrot.lane.b32.xlu0 %v2673, 44
      %v3062 = vpop.permute.xlu0 %3061
      %3063 = vrot.lane.b32.xlu0 %v2674, 44
      %v3064 = vpop.permute.xlu0 %3063
      %3068 = vrot.lane.b32.xlu0 %v3034, 66
      %v3069 = vpop.permute.xlu0 %3068
      %3070 = vrot.lane.b32.xlu0 %v3036, 66
      %v3071 = vpop.permute.xlu0 %3070
      %3072 = vrot.lane.b32.xlu0 %v3035, 66
      %v3073 = vpop.permute.xlu0 %3072
      %3077 = vrot.lane.b32.xlu0 %v3047, 88
      %v3078 = vpop.permute.xlu0 %3077
      %3079 = vrot.lane.b32.xlu0 %v3049, 88
      %v3080 = vpop.permute.xlu0 %3079
      %3081 = vrot.lane.b32.xlu0 %v3048, 88
      %v3082 = vpop.permute.xlu0 %3081
      %3086 = vrot.lane.b32.xlu0 %v2672, 88
      %v3087 = vpop.permute.xlu0 %3086
      %3088 = vrot.lane.b32.xlu0 %v2673, 88
      %v3089 = vpop.permute.xlu0 %3088
      %3090 = vrot.lane.b32.xlu0 %v2674, 88
      %v3091 = vpop.permute.xlu0 %3090
      %3095 = vrot.lane.b32.xlu0 %v3034, 110
      %v3096 = vpop.permute.xlu0 %3095
      %3097 = vrot.lane.b32.xlu0 %v3036, 110
      %v3098 = vpop.permute.xlu0 %3097
      %3099 = vrot.lane.b32.xlu0 %v3035, 110
      %v3100 = vpop.permute.xlu0 %3099
      %3104 = vrot.lane.b32.xlu0 %v3047, 4
      %v3105 = vpop.permute.xlu0 %3104
      %3106 = vrot.lane.b32.xlu0 %v3049, 4
      %v3107 = vpop.permute.xlu0 %3106
      %3108 = vrot.lane.b32.xlu0 %v3048, 4
      %v3109 = vpop.permute.xlu0 %3108
      %v3113 = vsel %vm2760, %v2672, %v3038
      %v3114 = vsel %vm2760, %v2673, %v3040
      %v3115 = vsel %vm2760, %v2674, %v3042
      %v3116 = vsel %vm2764, %v3113, %v3051
      %v3117 = vsel %vm2764, %v3114, %v3053
      %v3118 = vsel %vm2764, %v3115, %v3055
      %v3119 = vsel %vm2768, %v3116, %v3060
      %v3120 = vsel %vm2768, %v3117, %v3062
      %v3121 = vsel %vm2768, %v3118, %v3064
      %v3122 = vsel %vm2772, %v3119, %v3069
      %v3123 = vsel %vm2772, %v3120, %v3071
      %v3124 = vsel %vm2772, %v3121, %v3073
      %v3125 = vsel %vm2776, %v3122, %v3078
      %v3126 = vsel %vm2776, %v3123, %v3080
      %v3127 = vsel %vm2776, %v3124, %v3082
      %v3128 = vsel %vm1784, %v3078, %v3087
      %v3129 = vsel %vm1784, %v3080, %v3089
      %v3130 = vsel %vm1784, %v3082, %v3091
      %v3131 = vsel %vm2783, %v3128, %v3096
      %v3132 = vsel %vm2783, %v3129, %v3098
      %v3133 = vsel %vm2783, %v3130, %v3100
      %v3134 = vsel %vm699, %v3131, %v3105
      %v3135 = vsel %vm699, %v3132, %v3107
      %v3136 = vsel %vm699, %v3133, %v3109
      %v3145 = vrot.slane %v2910, 2
      %v3146 = vrot.slane %v2911, 2
      %v3147 = vsel %vm609, %v3145, %v3146
      %v3148 = vrot.slane %v2922, 2
      %v3149 = vrot.slane %v2923, 2
      %v3150 = vsel %vm609, %v3148, %v3149
      %v3151 = vrot.slane %v2912, 2
      %v3152 = vsel %vm609, %v3146, %v3151
      %v3153 = vrot.slane %v2924, 2
      %v3154 = vsel %vm609, %v3149, %v3153
      %v3155 = vrot.slane %v2913, 2
      %v3156 = vsel %vm609, %v3151, %v3155
      %v3157 = vrot.slane %v2925, 2
      %v3158 = vsel %vm609, %v3153, %v3157
      %v3169 = vrot.slane %v3019, 4
      %v3170 = vrot.slane %v3020, 4
      %v3171 = vsel %vm669, %v3169, %v3170
      %v3172 = vrot.slane %v3028, 4
      %v3173 = vrot.slane %v3029, 4
      %v3174 = vsel %vm669, %v3172, %v3173
      %v3175 = vrot.slane %v3021, 4
      %v3176 = vsel %vm669, %v3170, %v3175
      %v3177 = vrot.slane %v3030, 4
      %v3178 = vsel %vm669, %v3173, %v3177
      %vm3189 = vcmask 1041408
      %v3190 = vrot.slane %v3125, 6
      %v3191 = vrot.slane %v3134, 6
      %v3192 = vrot.slane %v3126, 6
      %v3193 = vsel %vm3189, %v3190, %v3192
      %v3194 = vrot.slane %v3135, 6
      %v3195 = vsel %vm3189, %v3191, %v3194
      %v3196 = vrot.slane %v3127, 6
      %v3197 = vsel %vm3189, %v3192, %v3196
      %v3198 = vrot.slane %v3136, 6
      %v3199 = vsel %vm3189, %v3194, %v3198
      %v3204 = vsel %vm669, %v2779, %v3147
      %v3205 = vsel %vm669, %v2789, %v3150
      %v3206 = vsel %vm669, %v3175, %v3190
      %v3207 = vsel %vm669, %v3177, %v3191
      %v3208 = vld [vmem:[%s5] sm:$0xff]
      %v3209 = vld [vmem:[%s5 + $0x8] sm:$0xff]
      %v3210 = vld [vmem:[%s5 + $0x10] sm:$0xff]
      %v3211 = vld [vmem:[%s5 + $0x18] sm:$0xff]
      %v3212 = vld [vmem:[%s5 + $0x20] sm:$0xff]
      %v3213 = vld [vmem:[%s5 + $0x28] sm:$0xff]
      %v3214 = vld [vmem:[%s5 + $0x30] sm:$0xff]
      %v3215 = vld [vmem:[%s5 + $0x38] sm:$0xff]
      %v3216 = vld [vmem:[%s5 + $0x40] sm:$0xff]
      %v3217 = vld [vmem:[%s5 + $0x48] sm:$0xff]
      %v3218 = vld [vmem:[%s5 + $0x50] sm:$0xff]
      %v3219 = vld [vmem:[%s5 + $0x58] sm:$0xff]
      %v3220 = vld [vmem:[%s5 + $0x60] sm:$0xff]
      %v3221 = vld [vmem:[%s5 + $0x68] sm:$0xff]
      %v3222 = vld [vmem:[%s5 + $0x70] sm:$0xff]
      %v3223 = vld [vmem:[%s5 + $0x78] sm:$0xff]
      %v3224 = vld [vmem:[%s5 + $0x80] sm:$0xff]
      %v3225 = vld [vmem:[%s5 + $0x88] sm:$0xff]
      %v3226 = vld [vmem:[%s5 + $0x90] sm:$0xff]
      %v3227 = vld [vmem:[%s5 + $0x98] sm:$0xff]
      %v3228 = vld [vmem:[%s5 + $0xa0] sm:$0xff]
      %v3229 = vld [vmem:[%s5 + $0xa8] sm:$0xff]
      %v3230 = vld [vmem:[%s5 + $0xb0] sm:$0xff]
      %v3231 = vld [vmem:[%s5 + $0xb8] sm:$0xff]
      %v3232 = vld [vmem:[%s5 + $0xc0] sm:$0xff]
      %v3233 = vld [vmem:[%s5 + $0xc8] sm:$0xff]
      %v3234 = vld [vmem:[%s5 + $0xd0] sm:$0xff]
      %v3235 = vld [vmem:[%s5 + $0xd8] sm:$0xff]
      %v3236 = vld [vmem:[%s5 + $0xe0] sm:$0xff]
      %v3237 = vld [vmem:[%s5 + $0xe8] sm:$0xff]
      %v3238 = vld [vmem:[%s5 + $0xf0] sm:$0xff]
      %v3239 = vld [vmem:[%s5 + $0xf8] sm:$0xff]
      %v3240 = vld [vmem:[%s5 + $0x100] sm:$0xff]
      %v3241 = vld [vmem:[%s5 + $0x108] sm:$0xff]
      %v3242 = vld [vmem:[%s5 + $0x110] sm:$0xff]
      %v3243 = vld [vmem:[%s5 + $0x118] sm:$0xff]
      %v3244 = vld [vmem:[%s5 + $0x120] sm:$0xff]
      %v3245 = vld [vmem:[%s5 + $0x128] sm:$0xff]
      %v3246 = vld [vmem:[%s5 + $0x130] sm:$0xff]
      %v3247 = vld [vmem:[%s5 + $0x138] sm:$0xff]
      %v3248 = vld [vmem:[%s5 + $0x140] sm:$0xff]
      %v3249 = vld [vmem:[%s5 + $0x148] sm:$0xff]
      %v3250 = vld [vmem:[%s5 + $0x150] sm:$0xff]
      %v3251 = vld [vmem:[%s5 + $0x158] sm:$0xff]
      %v3252 = vld [vmem:[%s5 + $0x160] sm:$0xff]
      %v3253 = vld [vmem:[%s5 + $0x168] sm:$0xff]
      %v3254 = vld [vmem:[%s5 + $0x170] sm:$0xff]
      %v3255 = vld [vmem:[%s5 + $0x178] sm:$0xff]
      %v3256 = vld [vmem:[%s5 + $0x180] sm:$0x3f]
      %v3257 = vld [vmem:[%s5 + $0x188] sm:$0x3f]
      %v3258 = vld [vmem:[%s6] sm:$0x3]
      %v3260 = vperm.slane %v3258, 0
      %v3261 = vperm.slane %v3258, 1
      %vm3264 = vcmask 572416
      %v3266 = vsel %vm3264, %v2787, 0
      %v3269 = vsel %vm3264, %v2788, 0
      %v3272 = vsel %vm3264, %v3205, 0
      %v3274 = vsel %vm3264, %v3154, 0
      %v3276 = vsel %vm3264, %v3158, 0
      %v3278 = vsel %vm3264, %v3174, 0
      %v3280 = vsel %vm3264, %v3178, 0
      %v3283 = vsel %vm3264, %v3207, 0
      %v3285 = vsel %vm3264, %v3195, 0
      %v3287 = vsel %vm3264, %v3199, 0
      %v3290 = vsel %vm609, %v3256, 0
      %v3293 = vsel %vm609, %v3257, 0
      %3295 = vmatpush.msra.mxu0 %v3238
      %3296 = vmatpush.msra.mxu0 %v3236
      %3297 = vmatpush.msra.mxu0 %v3234
      %3298 = vmatpush.msra.mxu0 %v3232
      %3299 = vmatpush.msra.mxu0 %v3230
      %3300 = vmatpush.msra.mxu0 %v3228
      %3301 = vmatpush.msra.mxu0 %v3226
      %3302 = vmatpush.msra.mxu0 %v3224
      %3303 = vmatpush.msra.mxu0 %v3222
      %3304 = vmatpush.msra.mxu0 %v3220
      %3305 = vmatpush.msra.mxu0 %v3218
      %3306 = vmatpush.msra.mxu0 %v3216
      %3307 = vmatpush.msra.mxu0 %v3214
      %3308 = vmatpush.msra.mxu0 %v3212
      %3309 = vmatpush.msra.mxu0 %v3210
      %3310 = vmatpush.msra.mxu0 %v3208
      %3311 = vmatmul.f32.gmra.mxu0 %v2777
      %v3312 = vpop.f32.mrf.mxu0
      %v3313 = vadd.f32 %v3260, %v3312
      %3314 = vmatmul.f32.gmra.mxu0 %v2778
      %v3315 = vpop.f32.mrf.mxu0
      %v3316 = vadd.f32 %v3260, %v3315
      %3317 = vmatmul.f32.gmra.mxu0 %v3204
      %v3318 = vpop.f32.mrf.mxu0
      %v3319 = vadd.f32 %v3260, %v3318
      %3320 = vmatmul.f32.gmra.mxu0 %v3152
      %v3321 = vpop.f32.mrf.mxu0
      %v3322 = vadd.f32 %v3260, %v3321
      %3323 = vmatmul.f32.gmra.mxu0 %v3156
      %v3324 = vpop.f32.mrf.mxu0
      %v3325 = vadd.f32 %v3260, %v3324
      %3326 = vmatmul.f32.gmra.mxu0 %v3171
      %v3327 = vpop.f32.mrf.mxu0
      %v3328 = vadd.f32 %v3260, %v3327
      %3329 = vmatmul.f32.gmra.mxu0 %v3176
      %v3330 = vpop.f32.mrf.mxu0
      %v3331 = vadd.f32 %v3260, %v3330
      %3332 = vmatmul.f32.gmra.mxu0 %v3206
      %v3333 = vpop.f32.mrf.mxu0
      %v3334 = vadd.f32 %v3260, %v3333
      %3335 = vmatmul.f32.gmra.mxu0 %v3193
      %v3336 = vpop.f32.mrf.mxu0
      %v3337 = vadd.f32 %v3260, %v3336
      %3338 = vmatmul.f32.gmra.mxu0 %v3197
      %v3339 = vpop.f32.mrf.mxu0
      %v3340 = vadd.f32 %v3260, %v3339
      %3341 = vdwg.mxu0
      %3342 = vmatpush.msra.mxu0 0.0
      %3343 = vmatpush.msra.mxu0 0.0
      %3344 = vmatpush.msra.mxu0 0.0
      %3345 = vmatpush.msra.mxu0 0.0
      %3346 = vmatpush.msra.mxu0 0.0
      %3347 = vmatpush.msra.mxu0 0.0
      %3348 = vmatpush.msra.mxu0 0.0
      %3349 = vmatpush.msra.mxu0 %v3290
      %3350 = vmatpush.msra.mxu0 %v3254
      %3351 = vmatpush.msra.mxu0 %v3252
      %3352 = vmatpush.msra.mxu0 %v3250
      %3353 = vmatpush.msra.mxu0 %v3248
      %3354 = vmatpush.msra.mxu0 %v3246
      %3355 = vmatpush.msra.mxu0 %v3244
      %3356 = vmatpush.msra.mxu0 %v3242
      %3357 = vmatpush.msra.mxu0 %v3240
      %3358 = vmatmul.f32.gmra.mxu0 %v3266
      %v3359 = vpop.f32.mrf.mxu0
      %v3360 = vadd.f32 %v3313, %v3359
      %3361 = vmatmul.f32.gmra.mxu0 %v3269
      %v3362 = vpop.f32.mrf.mxu0
      %v3363 = vadd.f32 %v3316, %v3362
      %3364 = vmatmul.f32.gmra.mxu0 %v3272
      %v3365 = vpop.f32.mrf.mxu0
      %v3366 = vadd.f32 %v3319, %v3365
      %3367 = vmatmul.f32.gmra.mxu0 %v3274
      %v3368 = vpop.f32.mrf.mxu0
      %v3369 = vadd.f32 %v3322, %v3368
      %3370 = vmatmul.f32.gmra.mxu0 %v3276
      %v3371 = vpop.f32.mrf.mxu0
      %v3372 = vadd.f32 %v3325, %v3371
      %3373 = vmatmul.f32.gmra.mxu0 %v3278
      %v3374 = vpop.f32.mrf.mxu0
      %v3375 = vadd.f32 %v3328, %v3374
      %3376 = vmatmul.f32.gmra.mxu0 %v3280
      %v3377 = vpop.f32.mrf.mxu0
      %v3378 = vadd.f32 %v3331, %v3377
      %3379 = vmatmul.f32.gmra.mxu0 %v3283
      %v3380 = vpop.f32.mrf.mxu0
      %v3381 = vadd.f32 %v3334, %v3380
      %3382 = vmatmul.f32.gmra.mxu0 %v3285
      %v3383 = vpop.f32.mrf.mxu0
      %v3384 = vadd.f32 %v3337, %v3383
      %3385 = vmatmul.f32.gmra.mxu0 %v3287
      %v3386 = vpop.f32.mrf.mxu0
      %v3387 = vadd.f32 %v3340, %v3386
      %3388 = vdwg.mxu0
      %3389 = vmatpush.msra.mxu0 %v3239
      %3390 = vmatpush.msra.mxu0 %v3237
      %3391 = vmatpush.msra.mxu0 %v3235
      %3392 = vmatpush.msra.mxu0 %v3233
      %3393 = vmatpush.msra.mxu0 %v3231
      %3394 = vmatpush.msra.mxu0 %v3229
      %3395 = vmatpush.msra.mxu0 %v3227
      %3396 = vmatpush.msra.mxu0 %v3225
      %3397 = vmatpush.msra.mxu0 %v3223
      %3398 = vmatpush.msra.mxu0 %v3221
      %3399 = vmatpush.msra.mxu0 %v3219
      %3400 = vmatpush.msra.mxu0 %v3217
      %3401 = vmatpush.msra.mxu0 %v3215
      %3402 = vmatpush.msra.mxu0 %v3213
      %3403 = vmatpush.msra.mxu0 %v3211
      %3404 = vmatpush.msra.mxu0 %v3209
      %3405 = vmatmul.f32.gmra.mxu0 %v2777
      %v3406 = vpop.f32.mrf.mxu0
      %v3407 = vadd.f32 %v3261, %v3406
      %3408 = vmatmul.f32.gmra.mxu0 %v2778
      %v3409 = vpop.f32.mrf.mxu0
      %v3410 = vadd.f32 %v3261, %v3409
      %3411 = vmatmul.f32.gmra.mxu0 %v3204
      %v3412 = vpop.f32.mrf.mxu0
      %v3413 = vadd.f32 %v3261, %v3412
      %3414 = vmatmul.f32.gmra.mxu0 %v3152
      %v3415 = vpop.f32.mrf.mxu0
      %v3416 = vadd.f32 %v3261, %v3415
      %3417 = vmatmul.f32.gmra.mxu0 %v3156
      %v3418 = vpop.f32.mrf.mxu0
      %v3419 = vadd.f32 %v3261, %v3418
      %3420 = vmatmul.f32.gmra.mxu0 %v3171
      %v3421 = vpop.f32.mrf.mxu0
      %v3422 = vadd.f32 %v3261, %v3421
      %3423 = vmatmul.f32.gmra.mxu0 %v3176
      %v3424 = vpop.f32.mrf.mxu0
      %v3425 = vadd.f32 %v3261, %v3424
      %3426 = vmatmul.f32.gmra.mxu0 %v3206
      %v3427 = vpop.f32.mrf.mxu0
      %v3428 = vadd.f32 %v3261, %v3427
      %3429 = vmatmul.f32.gmra.mxu0 %v3193
      %v3430 = vpop.f32.mrf.mxu0
      %v3431 = vadd.f32 %v3261, %v3430
      %3432 = vmatmul.f32.gmra.mxu0 %v3197
      %v3433 = vpop.f32.mrf.mxu0
      %v3434 = vadd.f32 %v3261, %v3433
      %3435 = vdwg.mxu0
      %3436 = vmatpush.msra.mxu0 0.0
      %3437 = vmatpush.msra.mxu0 0.0
      %3438 = vmatpush.msra.mxu0 0.0
      %3439 = vmatpush.msra.mxu0 0.0
      %3440 = vmatpush.msra.mxu0 0.0
      %3441 = vmatpush.msra.mxu0 0.0
      %3442 = vmatpush.msra.mxu0 0.0
      %3443 = vmatpush.msra.mxu0 %v3293
      %3444 = vmatpush.msra.mxu0 %v3255
      %3445 = vmatpush.msra.mxu0 %v3253
      %3446 = vmatpush.msra.mxu0 %v3251
      %3447 = vmatpush.msra.mxu0 %v3249
      %3448 = vmatpush.msra.mxu0 %v3247
      %3449 = vmatpush.msra.mxu0 %v3245
      %3450 = vmatpush.msra.mxu0 %v3243
      %3451 = vmatpush.msra.mxu0 %v3241
      %3452 = vmatmul.f32.gmra.mxu0 %v3266
      %v3453 = vpop.f32.mrf.mxu0
      %v3454 = vadd.f32 %v3407, %v3453
      %3455 = vmatmul.f32.gmra.mxu0 %v3269
      %v3456 = vpop.f32.mrf.mxu0
      %v3457 = vadd.f32 %v3410, %v3456
      %3458 = vmatmul.f32.gmra.mxu0 %v3272
      %v3459 = vpop.f32.mrf.mxu0
      %v3460 = vadd.f32 %v3413, %v3459
      %3461 = vmatmul.f32.gmra.mxu0 %v3274
      %v3462 = vpop.f32.mrf.mxu0
      %v3463 = vadd.f32 %v3416, %v3462
      %3464 = vmatmul.f32.gmra.mxu0 %v3276
      %v3465 = vpop.f32.mrf.mxu0
      %v3466 = vadd.f32 %v3419, %v3465
      %3467 = vmatmul.f32.gmra.mxu0 %v3278
      %v3468 = vpop.f32.mrf.mxu0
      %v3469 = vadd.f32 %v3422, %v3468
      %3470 = vmatmul.f32.gmra.mxu0 %v3280
      %v3471 = vpop.f32.mrf.mxu0
      %v3472 = vadd.f32 %v3425, %v3471
      %3473 = vmatmul.f32.gmra.mxu0 %v3283
      %v3474 = vpop.f32.mrf.mxu0
      %v3475 = vadd.f32 %v3428, %v3474
      %3476 = vmatmul.f32.gmra.mxu0 %v3285
      %v3477 = vpop.f32.mrf.mxu0
      %v3478 = vadd.f32 %v3431, %v3477
      %3479 = vmatmul.f32.gmra.mxu0 %v3287
      %v3480 = vpop.f32.mrf.mxu0
      %v3481 = vadd.f32 %v3434, %v3480
      %3482 = vdwg.mxu0
      %v3483 = vmax.f32 %v3360, 0.0
      %v3484 = vmax.f32 %v3454, 0.0
      %v3485 = vmax.f32 %v3363, 0.0
      %v3486 = vmax.f32 %v3457, 0.0
      %v3487 = vmax.f32 %v3366, 0.0
      %v3488 = vmax.f32 %v3460, 0.0
      %v3489 = vmax.f32 %v3369, 0.0
      %v3490 = vmax.f32 %v3463, 0.0
      %v3491 = vmax.f32 %v3372, 0.0
      %v3492 = vmax.f32 %v3466, 0.0
      %v3493 = vmax.f32 %v3375, 0.0
      %v3494 = vmax.f32 %v3469, 0.0
      %v3495 = vmax.f32 %v3378, 0.0
      %v3496 = vmax.f32 %v3472, 0.0
      %v3497 = vmax.f32 %v3381, 0.0
      %v3498 = vmax.f32 %v3475, 0.0
      %v3499 = vmax.f32 %v3384, 0.0
      %v3500 = vmax.f32 %v3478, 0.0
      %v3501 = vmax.f32 %v3387, 0.0
      %v3502 = vmax.f32 %v3481, 0.0
      %v3503 = vld [vmem:[%s7] sm:$0xff]
      %v3504 = vld [vmem:[%s7 + $0x8] sm:$0xff]
      %v3505 = vld [vmem:[%s7 + $0x10] sm:$0xff]
      %v3506 = vld [vmem:[%s7 + $0x18] sm:$0xff]
      %v3507 = vld [vmem:[%s7 + $0x20] sm:$0xff]
      %v3508 = vld [vmem:[%s7 + $0x28] sm:$0xff]
      %v3509 = vld [vmem:[%s7 + $0x30] sm:$0xff]
      %v3510 = vld [vmem:[%s7 + $0x38] sm:$0xff]
      %v3511 = vld [vmem:[%s7 + $0x40] sm:$0xff]
      %v3512 = vld [vmem:[%s7 + $0x48] sm:$0xff]
      %v3513 = vld [vmem:[%s7 + $0x50] sm:$0xff]
      %v3514 = vld [vmem:[%s7 + $0x58] sm:$0xff]
      %v3515 = vld [vmem:[%s7 + $0x60] sm:$0xff]
      %v3516 = vld [vmem:[%s7 + $0x68] sm:$0xff]
      %v3517 = vld [vmem:[%s7 + $0x70] sm:$0xff]
      %v3518 = vld [vmem:[%s7 + $0x78] sm:$0xff]
      %v3519 = vld [vmem:[%s7 + $0x80] sm:$0xff]
      %v3520 = vld [vmem:[%s7 + $0x88] sm:$0xff]
      %v3521 = vld [vmem:[%s7 + $0x90] sm:$0xff]
      %v3522 = vld [vmem:[%s7 + $0x98] sm:$0xff]
      %v3523 = vld [vmem:[%s7 + $0xa0] sm:$0xff]
      %v3524 = vld [vmem:[%s7 + $0xa8] sm:$0xff]
      %v3525 = vld [vmem:[%s7 + $0xb0] sm:$0xff]
      %v3526 = vld [vmem:[%s7 + $0xb8] sm:$0xff]
      %v3527 = vld [vmem:[%s7 + $0xc0] sm:$0xff]
      %v3528 = vld [vmem:[%s7 + $0xc8] sm:$0xff]
      %v3529 = vld [vmem:[%s7 + $0xd0] sm:$0xff]
      %v3530 = vld [vmem:[%s7 + $0xd8] sm:$0xff]
      %v3531 = vld [vmem:[%s7 + $0xe0] sm:$0xff]
      %v3532 = vld [vmem:[%s7 + $0xe8] sm:$0xff]
      %v3533 = vld [vmem:[%s7 + $0xf0] sm:$0xff]
      %v3534 = vld [vmem:[%s7 + $0xf8] sm:$0xff]
      %v3535 = vld [vmem:[%s7 + $0x100] sm:$0xff]
      %v3536 = vld [vmem:[%s7 + $0x108] sm:$0xff]
      %v3537 = vld [vmem:[%s7 + $0x110] sm:$0xf]
      %v3538 = vld [vmem:[%s7 + $0x118] sm:$0xf]
      %vm3539 = vcmask 97280
      %v3541 = vsel %vm3539, %v3484, 0
      %v3544 = vsel %vm3539, %v3486, 0
      %v3547 = vsel %vm3539, %v3488, 0
      %v3550 = vsel %vm3539, %v3490, 0
      %v3553 = vsel %vm3539, %v3492, 0
      %v3556 = vsel %vm3539, %v3494, 0
      %v3559 = vsel %vm3539, %v3496, 0
      %v3562 = vsel %vm3539, %v3498, 0
      %v3565 = vsel %vm3539, %v3500, 0
      %v3568 = vsel %vm3539, %v3502, 0
      %v3571 = vsel %vm669, %v3537, 0
      %v3574 = vsel %vm669, %v3538, 0
      %3576 = vmatpush.msra.mxu0 %v3533
      %3577 = vmatpush.msra.mxu0 %v3531
      %3578 = vmatpush.msra.mxu0 %v3529
      %3579 = vmatpush.msra.mxu0 %v3527
      %3580 = vmatpush.msra.mxu0 %v3525
      %3581 = vmatpush.msra.mxu0 %v3523
      %3582 = vmatpush.msra.mxu0 %v3521
      %3583 = vmatpush.msra.mxu0 %v3519
      %3584 = vmatpush.msra.mxu0 %v3517
      %3585 = vmatpush.msra.mxu0 %v3515
      %3586 = vmatpush.msra.mxu0 %v3513
      %3587 = vmatpush.msra.mxu0 %v3511
      %3588 = vmatpush.msra.mxu0 %v3509
      %3589 = vmatpush.msra.mxu0 %v3507
      %3590 = vmatpush.msra.mxu0 %v3505
      %3591 = vmatpush.msra.mxu0 %v3503
      %3592 = vmatmul.f32.gmra.mxu0 %v3483
      %v3593 = vpop.f32.mrf.mxu0
      %v3594 = vadd.f32 0.0, %v3593
      %3595 = vmatmul.f32.gmra.mxu0 %v3485
      %v3596 = vpop.f32.mrf.mxu0
      %v3597 = vadd.f32 0.0, %v3596
      %3598 = vmatmul.f32.gmra.mxu0 %v3487
      %v3599 = vpop.f32.mrf.mxu0
      %v3600 = vadd.f32 0.0, %v3599
      %3601 = vmatmul.f32.gmra.mxu0 %v3489
      %v3602 = vpop.f32.mrf.mxu0
      %v3603 = vadd.f32 0.0, %v3602
      %3604 = vmatmul.f32.gmra.mxu0 %v3491
      %v3605 = vpop.f32.mrf.mxu0
      %v3606 = vadd.f32 0.0, %v3605
      %3607 = vmatmul.f32.gmra.mxu0 %v3493
      %v3608 = vpop.f32.mrf.mxu0
      %v3609 = vadd.f32 0.0, %v3608
      %3610 = vmatmul.f32.gmra.mxu0 %v3495
      %v3611 = vpop.f32.mrf.mxu0
      %v3612 = vadd.f32 0.0, %v3611
      %3613 = vmatmul.f32.gmra.mxu0 %v3497
      %v3614 = vpop.f32.mrf.mxu0
      %v3615 = vadd.f32 0.0, %v3614
      %3616 = vmatmul.f32.gmra.mxu0 %v3499
      %v3617 = vpop.f32.mrf.mxu0
      %v3618 = vadd.f32 0.0, %v3617
      %3619 = vmatmul.f32.gmra.mxu0 %v3501
      %v3620 = vpop.f32.mrf.mxu0
      %v3621 = vadd.f32 0.0, %v3620
      %3622 = vdwg.mxu0
      %3623 = vmatpush.msra.mxu0 0.0
      %3624 = vmatpush.msra.mxu0 0.0
      %3625 = vmatpush.msra.mxu0 0.0
      %3626 = vmatpush.msra.mxu0 0.0
      %3627 = vmatpush.msra.mxu0 0.0
      %3628 = vmatpush.msra.mxu0 0.0
      %3629 = vmatpush.msra.mxu0 0.0
      %3630 = vmatpush.msra.mxu0 0.0
      %3631 = vmatpush.msra.mxu0 0.0
      %3632 = vmatpush.msra.mxu0 0.0
      %3633 = vmatpush.msra.mxu0 0.0
      %3634 = vmatpush.msra.mxu0 0.0
      %3635 = vmatpush.msra.mxu0 0.0
      %3636 = vmatpush.msra.mxu0 0.0
      %3637 = vmatpush.msra.mxu0 %v3571
      %3638 = vmatpush.msra.mxu0 %v3535
      %3639 = vmatmul.f32.gmra.mxu0 %v3541
      %v3640 = vpop.f32.mrf.mxu0
      %v3641 = vadd.f32 %v3594, %v3640
      %3642 = vmatmul.f32.gmra.mxu0 %v3544
      %v3643 = vpop.f32.mrf.mxu0
      %v3644 = vadd.f32 %v3597, %v3643
      %3645 = vmatmul.f32.gmra.mxu0 %v3547
      %v3646 = vpop.f32.mrf.mxu0
      %v3647 = vadd.f32 %v3600, %v3646
      %3648 = vmatmul.f32.gmra.mxu0 %v3550
      %v3649 = vpop.f32.mrf.mxu0
      %v3650 = vadd.f32 %v3603, %v3649
      %3651 = vmatmul.f32.gmra.mxu0 %v3553
      %v3652 = vpop.f32.mrf.mxu0
      %v3653 = vadd.f32 %v3606, %v3652
      %3654 = vmatmul.f32.gmra.mxu0 %v3556
      %v3655 = vpop.f32.mrf.mxu0
      %v3656 = vadd.f32 %v3609, %v3655
      %3657 = vmatmul.f32.gmra.mxu0 %v3559
      %v3658 = vpop.f32.mrf.mxu0
      %v3659 = vadd.f32 %v3612, %v3658
      %3660 = vmatmul.f32.gmra.mxu0 %v3562
      %v3661 = vpop.f32.mrf.mxu0
      %v3662 = vadd.f32 %v3615, %v3661
      %3663 = vmatmul.f32.gmra.mxu0 %v3565
      %v3664 = vpop.f32.mrf.mxu0
      %v3665 = vadd.f32 %v3618, %v3664
      %3666 = vmatmul.f32.gmra.mxu0 %v3568
      %v3667 = vpop.f32.mrf.mxu0
      %v3668 = vadd.f32 %v3621, %v3667
      %3669 = vdwg.mxu0
      %3670 = vmatpush.msra.mxu0 %v3534
      %3671 = vmatpush.msra.mxu0 %v3532
      %3672 = vmatpush.msra.mxu0 %v3530
      %3673 = vmatpush.msra.mxu0 %v3528
      %3674 = vmatpush.msra.mxu0 %v3526
      %3675 = vmatpush.msra.mxu0 %v3524
      %3676 = vmatpush.msra.mxu0 %v3522
      %3677 = vmatpush.msra.mxu0 %v3520
      %3678 = vmatpush.msra.mxu0 %v3518
      %3679 = vmatpush.msra.mxu0 %v3516
      %3680 = vmatpush.msra.mxu0 %v3514
      %3681 = vmatpush.msra.mxu0 %v3512
      %3682 = vmatpush.msra.mxu0 %v3510
      %3683 = vmatpush.msra.mxu0 %v3508
      %3684 = vmatpush.msra.mxu0 %v3506
      %3685 = vmatpush.msra.mxu0 %v3504
      %3686 = vmatmul.f32.gmra.mxu0 %v3483
      %v3687 = vpop.f32.mrf.mxu0
      %v3688 = vadd.f32 0.0, %v3687
      %3689 = vmatmul.f32.gmra.mxu0 %v3485
      %v3690 = vpop.f32.mrf.mxu0
      %v3691 = vadd.f32 0.0, %v3690
      %3692 = vmatmul.f32.gmra.mxu0 %v3487
      %v3693 = vpop.f32.mrf.mxu0
      %v3694 = vadd.f32 0.0, %v3693
      %3695 = vmatmul.f32.gmra.mxu0 %v3489
      %v3696 = vpop.f32.mrf.mxu0
      %v3697 = vadd.f32 0.0, %v3696
      %3698 = vmatmul.f32.gmra.mxu0 %v3491
      %v3699 = vpop.f32.mrf.mxu0
      %v3700 = vadd.f32 0.0, %v3699
      %3701 = vmatmul.f32.gmra.mxu0 %v3493
      %v3702 = vpop.f32.mrf.mxu0
      %v3703 = vadd.f32 0.0, %v3702
      %3704 = vmatmul.f32.gmra.mxu0 %v3495
      %v3705 = vpop.f32.mrf.mxu0
      %v3706 = vadd.f32 0.0, %v3705
      %3707 = vmatmul.f32.gmra.mxu0 %v3497
      %v3708 = vpop.f32.mrf.mxu0
      %v3709 = vadd.f32 0.0, %v3708
      %3710 = vmatmul.f32.gmra.mxu0 %v3499
      %v3711 = vpop.f32.mrf.mxu0
      %v3712 = vadd.f32 0.0, %v3711
      %3713 = vmatmul.f32.gmra.mxu0 %v3501
      %v3714 = vpop.f32.mrf.mxu0
      %v3715 = vadd.f32 0.0, %v3714
      %3716 = vdwg.mxu0
      %3717 = vmatpush.msra.mxu0 0.0
      %3718 = vmatpush.msra.mxu0 0.0
      %3719 = vmatpush.msra.mxu0 0.0
      %3720 = vmatpush.msra.mxu0 0.0
      %3721 = vmatpush.msra.mxu0 0.0
      %3722 = vmatpush.msra.mxu0 0.0
      %3723 = vmatpush.msra.mxu0 0.0
      %3724 = vmatpush.msra.mxu0 0.0
      %3725 = vmatpush.msra.mxu0 0.0
      %3726 = vmatpush.msra.mxu0 0.0
      %3727 = vmatpush.msra.mxu0 0.0
      %3728 = vmatpush.msra.mxu0 0.0
      %3729 = vmatpush.msra.mxu0 0.0
      %3730 = vmatpush.msra.mxu0 0.0
      %3731 = vmatpush.msra.mxu0 %v3574
      %3732 = vmatpush.msra.mxu0 %v3536
      %3733 = vmatmul.f32.gmra.mxu0 %v3541
      %v3734 = vpop.f32.mrf.mxu0
      %v3735 = vadd.f32 %v3688, %v3734
      %3736 = vmatmul.f32.gmra.mxu0 %v3544
      %v3737 = vpop.f32.mrf.mxu0
      %v3738 = vadd.f32 %v3691, %v3737
      %3739 = vmatmul.f32.gmra.mxu0 %v3547
      %v3740 = vpop.f32.mrf.mxu0
      %v3741 = vadd.f32 %v3694, %v3740
      %3742 = vmatmul.f32.gmra.mxu0 %v3550
      %v3743 = vpop.f32.mrf.mxu0
      %v3744 = vadd.f32 %v3697, %v3743
      %3745 = vmatmul.f32.gmra.mxu0 %v3553
      %v3746 = vpop.f32.mrf.mxu0
      %v3747 = vadd.f32 %v3700, %v3746
      %3748 = vmatmul.f32.gmra.mxu0 %v3556
      %v3749 = vpop.f32.mrf.mxu0
      %v3750 = vadd.f32 %v3703, %v3749
      %3751 = vmatmul.f32.gmra.mxu0 %v3559
      %v3752 = vpop.f32.mrf.mxu0
      %v3753 = vadd.f32 %v3706, %v3752
      %3754 = vmatmul.f32.gmra.mxu0 %v3562
      %v3755 = vpop.f32.mrf.mxu0
      %v3756 = vadd.f32 %v3709, %v3755
      %3757 = vmatmul.f32.gmra.mxu0 %v3565
      %v3758 = vpop.f32.mrf.mxu0
      %v3759 = vadd.f32 %v3712, %v3758
      %3760 = vmatmul.f32.gmra.mxu0 %v3568
      %v3761 = vpop.f32.mrf.mxu0
      %v3762 = vadd.f32 %v3715, %v3761
      %3763 = vdwg.mxu0
      %3784 = vrot.lane.b32.xlu0 %v3641, 58
      %v3785 = vpop.permute.xlu0 %3784
      %3786 = vrot.lane.b32.xlu0 %v3735, 58
      %v3787 = vpop.permute.xlu0 %3786
      %3788 = vrot.lane.b32.xlu0 %v3644, 58
      %v3789 = vpop.permute.xlu0 %3788
      %3790 = vrot.lane.b32.xlu0 %v3738, 58
      %v3791 = vpop.permute.xlu0 %3790
      %3792 = vrot.lane.b32.xlu0 %v3647, 58
      %v3793 = vpop.permute.xlu0 %3792
      %3794 = vrot.lane.b32.xlu0 %v3741, 58
      %v3795 = vpop.permute.xlu0 %3794
      %3796 = vrot.lane.b32.xlu0 %v3650, 58
      %v3797 = vpop.permute.xlu0 %3796
      %3798 = vrot.lane.b32.xlu0 %v3744, 58
      %v3799 = vpop.permute.xlu0 %3798
      %3800 = vrot.lane.b32.xlu0 %v3653, 58
      %v3801 = vpop.permute.xlu0 %3800
      %3802 = vrot.lane.b32.xlu0 %v3747, 58
      %v3803 = vpop.permute.xlu0 %3802
      %3804 = vrot.lane.b32.xlu0 %v3656, 58
      %v3805 = vpop.permute.xlu0 %3804
      %3806 = vrot.lane.b32.xlu0 %v3750, 58
      %v3807 = vpop.permute.xlu0 %3806
      %3808 = vrot.lane.b32.xlu0 %v3659, 58
      %v3809 = vpop.permute.xlu0 %3808
      %3810 = vrot.lane.b32.xlu0 %v3753, 58
      %v3811 = vpop.permute.xlu0 %3810
      %3812 = vrot.lane.b32.xlu0 %v3662, 58
      %v3813 = vpop.permute.xlu0 %3812
      %3814 = vrot.lane.b32.xlu0 %v3756, 58
      %v3815 = vpop.permute.xlu0 %3814
      %3816 = vrot.lane.b32.xlu0 %v3665, 58
      %v3817 = vpop.permute.xlu0 %3816
      %3818 = vrot.lane.b32.xlu0 %v3759, 58
      %v3819 = vpop.permute.xlu0 %3818
      %3820 = vrot.lane.b32.xlu0 %v3668, 58
      %v3821 = vpop.permute.xlu0 %3820
      %3822 = vrot.lane.b32.xlu0 %v3762, 58
      %v3823 = vpop.permute.xlu0 %3822
      %vm3824 = vcmask 474112
      %v3825 = vsel %vm3824, %v3785, %v3787
      %v3826 = vsel %vm3824, %v3789, %v3791
      %v3827 = vsel %vm3824, %v3793, %v3795
      %v3828 = vsel %vm3824, %v3797, %v3799
      %v3829 = vsel %vm3824, %v3801, %v3803
      %v3830 = vsel %vm3824, %v3805, %v3807
      %v3831 = vsel %vm3824, %v3809, %v3811
      %v3832 = vsel %vm3824, %v3813, %v3815
      %v3833 = vsel %vm3824, %v3817, %v3819
      %v3834 = vsel %vm3824, %v3821, %v3823
      %v3845 = vmax.f32 %v3641, %v3825
      %v3846 = vmax.f32 %v3644, %v3826
      %v3847 = vmax.f32 %v3647, %v3827
      %v3848 = vmax.f32 %v3650, %v3828
      %v3849 = vmax.f32 %v3653, %v3829
      %v3850 = vmax.f32 %v3656, %v3830
      %v3851 = vmax.f32 %v3659, %v3831
      %v3852 = vmax.f32 %v3662, %v3832
      %v3853 = vmax.f32 %v3665, %v3833
      %v3854 = vmax.f32 %v3668, %v3834
      %v3855 = vld [vmem:[%s8] sm:$0xff]
      %v3856 = vld [vmem:[%s8 + $0x8] sm:$0xff]
      %v3857 = vld [vmem:[%s8 + $0x10] sm:$0xff]
      %v3858 = vld [vmem:[%s8 + $0x18] sm:$0xff]
      %v3859 = vld [vmem:[%s8 + $0x20] sm:$0xff]
      %v3860 = vld [vmem:[%s8 + $0x28] sm:$0xff]
      %v3861 = vld [vmem:[%s8 + $0x30] sm:$0xff]
      %v3862 = vld [vmem:[%s8 + $0x38] sm:$0xff]
      %v3863 = vld [vmem:[%s8 + $0x40] sm:$0xff]
      %v3864 = vld [vmem:[%s8 + $0x48] sm:$0xff]
      %vm3865 = vcmask 654336
      %v3867 = vsel %vm3865, %v3855, 0
      %v3870 = vsel %vm3865, %v3856, 0
      %v3873 = vsel %vm3865, %v3857, 0
      %v3876 = vsel %vm3865, %v3858, 0
      %v3879 = vsel %vm3865, %v3859, 0
      %v3882 = vsel %vm3865, %v3860, 0
      %v3885 = vsel %vm3865, %v3861, 0
      %v3888 = vsel %vm3865, %v3862, 0
      %v3891 = vsel %vm3865, %v3863, 0
      %v3894 = vsel %vm3865, %v3864, 0
      %3896 = vmatpush.msra.mxu0 0.0
      %3897 = vmatpush.msra.mxu0 0.0
      %3898 = vmatpush.msra.mxu0 0.0
      %3899 = vmatpush.msra.mxu0 0.0
      %3900 = vmatpush.msra.mxu0 0.0
      %3901 = vmatpush.msra.mxu0 0.0
      %3902 = vmatpush.msra.mxu0 %v3854
      %3903 = vmatpush.msra.mxu0 %v3853
      %3904 = vmatpush.msra.mxu0 %v3852
      %3905 = vmatpush.msra.mxu0 %v3851
      %3906 = vmatpush.msra.mxu0 %v3850
      %3907 = vmatpush.msra.mxu0 %v3849
      %3908 = vmatpush.msra.mxu0 %v3848
      %3909 = vmatpush.msra.mxu0 %v3847
      %3910 = vmatpush.msra.mxu0 %v3846
      %3911 = vmatpush.msra.mxu0 %v3845
      %3912 = vmatmul.f32.gmra.mxu0 %v3867
      %v3913 = vpop.f32.mrf.mxu0
      %v3914 = vadd.f32 0.0, %v3913
      %3915 = vmatmul.f32.gmra.mxu0 %v3870
      %v3916 = vpop.f32.mrf.mxu0
      %v3917 = vadd.f32 0.0, %v3916
      %3918 = vmatmul.f32.gmra.mxu0 %v3873
      %v3919 = vpop.f32.mrf.mxu0
      %v3920 = vadd.f32 0.0, %v3919
      %3921 = vmatmul.f32.gmra.mxu0 %v3876
      %v3922 = vpop.f32.mrf.mxu0
      %v3923 = vadd.f32 0.0, %v3922
      %3924 = vmatmul.f32.gmra.mxu0 %v3879
      %v3925 = vpop.f32.mrf.mxu0
      %v3926 = vadd.f32 0.0, %v3925
      %3927 = vmatmul.f32.gmra.mxu0 %v3882
      %v3928 = vpop.f32.mrf.mxu0
      %v3929 = vadd.f32 0.0, %v3928
      %3930 = vmatmul.f32.gmra.mxu0 %v3885
      %v3931 = vpop.f32.mrf.mxu0
      %v3932 = vadd.f32 0.0, %v3931
      %3933 = vmatmul.f32.gmra.mxu0 %v3888
      %v3934 = vpop.f32.mrf.mxu0
      %v3935 = vadd.f32 0.0, %v3934
      %3936 = vmatmul.f32.gmra.mxu0 %v3891
      %v3937 = vpop.f32.mrf.mxu0
      %v3938 = vadd.f32 0.0, %v3937
      %3939 = vmatmul.f32.gmra.mxu0 %v3894
      %v3940 = vpop.f32.mrf.mxu0
      %v3941 = vadd.f32 0.0, %v3940
      %3942 = vdwg.mxu0
      %v3943 = vmax.f32 %v3914, %v3929
      %v3944 = vmax.f32 %v3917, %v3932
      %v3945 = vmax.f32 %v3920, %v3935
      %v3946 = vmax.f32 %v3923, %v3938
      %v3947 = vmax.f32 %v3926, %v3941
      %v3950 = vrot.slane %v3943, 1
      %v3951 = vrot.slane %v3944, 1
      %v3952 = vsel %vm579, %v3950, %v3951
      %3953 = vrot.lane.b32.xlu0 %v3952, 10
      %v3954 = vpop.permute.xlu0 %3953
      %v3956 = vrot.slane %v3943, 2
      %v3957 = vrot.slane %v3944, 2
      %v3958 = vsel %vm609, %v3956, %v3957
      %3959 = vrot.lane.b32.xlu0 %v3958, 20
      %v3960 = vpop.permute.xlu0 %3959
      %3962 = vrot.lane.b32.xlu0 %v3943, 20
      %v3963 = vpop.permute.xlu0 %3962
      %3965 = vrot.lane.b32.xlu0 %v3952, 30
      %v3966 = vpop.permute.xlu0 %3965
      %3968 = vrot.lane.b32.xlu0 %v3958, 40
      %v3969 = vpop.permute.xlu0 %3968
      %3971 = vrot.lane.b32.xlu0 %v3943, 40
      %v3972 = vpop.permute.xlu0 %3971
      %3974 = vrot.lane.b32.xlu0 %v3952, 50
      %v3975 = vpop.permute.xlu0 %3974
      %3977 = vrot.lane.b32.xlu0 %v3958, 60
      %v3978 = vpop.permute.xlu0 %3977
      %3980 = vrot.lane.b32.xlu0 %v3943, 60
      %v3981 = vpop.permute.xlu0 %3980
      %3983 = vrot.lane.b32.xlu0 %v3952, 70
      %v3984 = vpop.permute.xlu0 %3983
      %3986 = vrot.lane.b32.xlu0 %v3958, 80
      %v3987 = vpop.permute.xlu0 %3986
      %3989 = vrot.lane.b32.xlu0 %v3943, 80
      %v3990 = vpop.permute.xlu0 %3989
      %3992 = vrot.lane.b32.xlu0 %v3952, 90
      %v3993 = vpop.permute.xlu0 %3992
      %3995 = vrot.lane.b32.xlu0 %v3958, 100
      %v3996 = vpop.permute.xlu0 %3995
      %3998 = vrot.lane.b32.xlu0 %v3943, 100
      %v3999 = vpop.permute.xlu0 %3998
      %vm4001 = vcmask 80896
      %v4002 = vsel %vm4001, %v3943, %v3954
      %vm4003 = vcmask 162816
      %v4004 = vsel %vm4003, %v4002, %v3960
      %vm4005 = vcmask 244736
      %v4006 = vsel %vm4005, %v4004, %v3963
      %vm4007 = vcmask 326656
      %v4008 = vsel %vm4007, %v4006, %v3966
      %vm4009 = vcmask 408576
      %v4010 = vsel %vm4009, %v4008, %v3969
      %vm4011 = vcmask 490496
      %v4012 = vsel %vm4011, %v4010, %v3972
      %v4013 = vsel %vm3264, %v4012, %v3975
      %v4014 = vsel %vm3865, %v4013, %v3978
      %vm4015 = vcmask 736256
      %v4016 = vsel %vm4015, %v4014, %v3981
      %vm4017 = vcmask 818176
      %v4018 = vsel %vm4017, %v4016, %v3984
      %v4019 = vsel %vm2776, %v4018, %v3987
      %vm4020 = vcmask 982016
      %v4021 = vsel %vm4020, %v4019, %v3990
      %vm4022 = vcmask 15360
      %v4023 = vsel %vm4022, %v3990, %v3993
      %v4024 = vsel %vm3539, %v4023, %v3996
      %v4025 = vsel %vm2760, %v4024, %v3999
      %4026 = vrot.lane.b32.xlu0 %v3943, 78
      %v4027 = vpop.permute.xlu0 %4026
      %4028 = vrot.lane.b32.xlu0 %v3944, 78
      %v4029 = vpop.permute.xlu0 %4028
      %4032 = vrot.lane.b32.xlu0 %v3952, 88
      %v4033 = vpop.permute.xlu0 %4032
      %4034 = vrot.lane.b32.xlu0 %v3951, 88
      %v4035 = vpop.permute.xlu0 %4034
      %v4038 = vrot.slane %v3943, 7
      %4039 = vrot.lane.b32.xlu0 %v4038, 88
      %v4040 = vpop.permute.xlu0 %4039
      %4042 = vrot.lane.b32.xlu0 %v3943, 98
      %v4043 = vpop.permute.xlu0 %4042
      %4044 = vrot.lane.b32.xlu0 %v3944, 98
      %v4045 = vpop.permute.xlu0 %4044
      %4048 = vrot.lane.b32.xlu0 %v3952, 108
      %v4049 = vpop.permute.xlu0 %4048
      %4050 = vrot.lane.b32.xlu0 %v3951, 108
      %v4051 = vpop.permute.xlu0 %4050
      %v4054 = vsel %vm4001, %v4027, %v4033
      %v4055 = vsel %vm4001, %v4029, %v4035
      %v4056 = vsel %vm4003, %v4054, %v4040
      %v4057 = vsel %vm4003, %v4055, %v4040
      %v4058 = vsel %vm4005, %v4056, %v4043
      %v4059 = vsel %vm4005, %v4057, %v4045
      %v4060 = vsel %vm4007, %v4058, %v4049
      %v4061 = vsel %vm4007, %v4059, %v4051
      %v4064 = vrot.slane %v4060, 1
      %v4065 = vrot.slane %v4061, 1
      %v4066 = vsel %vm579, %v4064, %v4065
      %4067 = vrot.lane.b32.xlu0 %v4066, 32
      %v4068 = vpop.permute.xlu0 %4067
      %vm4070 = vcmask 261120
      %v4071 = vsel %vm4070, %v4025, %v4068
      %v4073 = vrot.slane %v3945, 1
      %v4074 = vsel %vm579, %v3951, %v4073
      %4075 = vrot.lane.b32.xlu0 %v4074, 10
      %v4076 = vpop.permute.xlu0 %4075
      %4077 = vrot.lane.b32.xlu0 %v4073, 10
      %v4078 = vpop.permute.xlu0 %4077
      %v4081 = vrot.slane %v3945, 2
      %v4082 = vsel %vm609, %v3957, %v4081
      %4083 = vrot.lane.b32.xlu0 %v4082, 20
      %v4084 = vpop.permute.xlu0 %4083
      %4085 = vrot.lane.b32.xlu0 %v4081, 20
      %v4086 = vpop.permute.xlu0 %4085
      %4089 = vrot.lane.b32.xlu0 %v3944, 20
      %v4090 = vpop.permute.xlu0 %4089
      %4091 = vrot.lane.b32.xlu0 %v3945, 20
      %v4092 = vpop.permute.xlu0 %4091
      %4095 = vrot.lane.b32.xlu0 %v4074, 30
      %v4096 = vpop.permute.xlu0 %4095
      %4097 = vrot.lane.b32.xlu0 %v4073, 30
      %v4098 = vpop.permute.xlu0 %4097
      %4101 = vrot.lane.b32.xlu0 %v4082, 40
      %v4102 = vpop.permute.xlu0 %4101
      %4103 = vrot.lane.b32.xlu0 %v4081, 40
      %v4104 = vpop.permute.xlu0 %4103
      %4107 = vrot.lane.b32.xlu0 %v3944, 40
      %v4108 = vpop.permute.xlu0 %4107
      %4109 = vrot.lane.b32.xlu0 %v3945, 40
      %v4110 = vpop.permute.xlu0 %4109
      %4113 = vrot.lane.b32.xlu0 %v4074, 50
      %v4114 = vpop.permute.xlu0 %4113
      %4115 = vrot.lane.b32.xlu0 %v4073, 50
      %v4116 = vpop.permute.xlu0 %4115
      %4119 = vrot.lane.b32.xlu0 %v4082, 60
      %v4120 = vpop.permute.xlu0 %4119
      %4121 = vrot.lane.b32.xlu0 %v4081, 60
      %v4122 = vpop.permute.xlu0 %4121
      %4125 = vrot.lane.b32.xlu0 %v3944, 60
      %v4126 = vpop.permute.xlu0 %4125
      %4127 = vrot.lane.b32.xlu0 %v3945, 60
      %v4128 = vpop.permute.xlu0 %4127
      %4131 = vrot.lane.b32.xlu0 %v4074, 70
      %v4132 = vpop.permute.xlu0 %4131
      %4133 = vrot.lane.b32.xlu0 %v4073, 70
      %v4134 = vpop.permute.xlu0 %4133
      %4137 = vrot.lane.b32.xlu0 %v4082, 80
      %v4138 = vpop.permute.xlu0 %4137
      %4139 = vrot.lane.b32.xlu0 %v4081, 80
      %v4140 = vpop.permute.xlu0 %4139
      %4143 = vrot.lane.b32.xlu0 %v3944, 80
      %v4144 = vpop.permute.xlu0 %4143
      %4145 = vrot.lane.b32.xlu0 %v3945, 80
      %v4146 = vpop.permute.xlu0 %4145
      %4149 = vrot.lane.b32.xlu0 %v4074, 90
      %v4150 = vpop.permute.xlu0 %4149
      %4151 = vrot.lane.b32.xlu0 %v4073, 90
      %v4152 = vpop.permute.xlu0 %4151
      %4155 = vrot.lane.b32.xlu0 %v4082, 100
      %v4156 = vpop.permute.xlu0 %4155
      %4157 = vrot.lane.b32.xlu0 %v4081, 100
      %v4158 = vpop.permute.xlu0 %4157
      %4161 = vrot.lane.b32.xlu0 %v3944, 100
      %v4162 = vpop.permute.xlu0 %4161
      %4163 = vrot.lane.b32.xlu0 %v3945, 100
      %v4164 = vpop.permute.xlu0 %4163
      %v4167 = vsel %vm4001, %v3944, %v4076
      %v4168 = vsel %vm4001, %v3945, %v4078
      %v4169 = vsel %vm4003, %v4167, %v4084
      %v4170 = vsel %vm4003, %v4168, %v4086
      %v4171 = vsel %vm4005, %v4169, %v4090
      %v4172 = vsel %vm4005, %v4170, %v4092
      %v4173 = vsel %vm4007, %v4171, %v4096
      %v4174 = vsel %vm4007, %v4172, %v4098
      %v4175 = vsel %vm4009, %v4173, %v4102
      %v4176 = vsel %vm4009, %v4174, %v4104
      %v4177 = vsel %vm4011, %v4175, %v4108
      %v4178 = vsel %vm4011, %v4176, %v4110
      %v4179 = vsel %vm3264, %v4177, %v4114
      %v4180 = vsel %vm3264, %v4178, %v4116
      %v4181 = vsel %vm3865, %v4179, %v4120
      %v4182 = vsel %vm3865, %v4180, %v4122
      %v4183 = vsel %vm4015, %v4181, %v4126
      %v4184 = vsel %vm4015, %v4182, %v4128
      %v4185 = vsel %vm4017, %v4183, %v4132
      %v4186 = vsel %vm4017, %v4184, %v4134
      %v4187 = vsel %vm2776, %v4185, %v4138
      %v4188 = vsel %vm2776, %v4186, %v4140
      %v4189 = vsel %vm4020, %v4187, %v4144
      %v4190 = vsel %vm4020, %v4188, %v4146
      %v4191 = vsel %vm4022, %v4144, %v4150
      %v4192 = vsel %vm4022, %v4146, %v4152
      %v4193 = vsel %vm3539, %v4191, %v4156
      %v4194 = vsel %vm3539, %v4192, %v4158
      %v4195 = vsel %vm2760, %v4193, %v4162
      %v4196 = vsel %vm2760, %v4194, %v4164
      %4197 = vrot.lane.b32.xlu0 %v3945, 78
      %v4198 = vpop.permute.xlu0 %4197
      %4200 = vrot.lane.b32.xlu0 %v4074, 88
      %v4201 = vpop.permute.xlu0 %4200
      %4202 = vrot.lane.b32.xlu0 %v4073, 88
      %v4203 = vpop.permute.xlu0 %4202
      %vm4206 = vcmask 1040384
      %v4207 = vrot.slane %v3944, 7
      %v4208 = vrot.slane %v3945, 7
      %v4209 = vsel %vm4206, %v4207, %v4208
      %4210 = vrot.lane.b32.xlu0 %v4207, 88
      %v4211 = vpop.permute.xlu0 %4210
      %4212 = vrot.lane.b32.xlu0 %v4209, 88
      %v4213 = vpop.permute.xlu0 %4212
      %4216 = vrot.lane.b32.xlu0 %v3945, 98
      %v4217 = vpop.permute.xlu0 %4216
      %4219 = vrot.lane.b32.xlu0 %v4074, 108
      %v4220 = vpop.permute.xlu0 %4219
      %4221 = vrot.lane.b32.xlu0 %v4073, 108
      %v4222 = vpop.permute.xlu0 %4221
      %v4225 = vsel %vm4001, %v4029, %v4201
      %v4226 = vsel %vm4001, %v4198, %v4203
      %v4227 = vsel %vm4003, %v4225, %v4211
      %v4228 = vsel %vm4003, %v4226, %v4213
      %v4229 = vsel %vm4005, %v4227, %v4045
      %v4230 = vsel %vm4005, %v4228, %v4217
      %v4231 = vsel %vm4007, %v4229, %v4220
      %v4232 = vsel %vm4007, %v4230, %v4222
      %v4235 = vrot.slane %v4231, 1
      %v4236 = vrot.slane %v4232, 1
      %v4237 = vsel %vm579, %v4235, %v4236
      %4238 = vrot.lane.b32.xlu0 %v4237, 32
      %v4239 = vpop.permute.xlu0 %4238
      %4240 = vrot.lane.b32.xlu0 %v4236, 32
      %v4241 = vpop.permute.xlu0 %4240
      %v4244 = vsel %vm4070, %v4195, %v4239
      %v4245 = vsel %vm4070, %v4196, %v4241
      %v4247 = vrot.slane %v3946, 1
      %v4248 = vsel %vm579, %v4073, %v4247
      %4249 = vrot.lane.b32.xlu0 %v4248, 10
      %v4250 = vpop.permute.xlu0 %4249
      %4251 = vrot.lane.b32.xlu0 %v4247, 10
      %v4252 = vpop.permute.xlu0 %4251
      %v4255 = vrot.slane %v3946, 2
      %v4256 = vsel %vm609, %v4081, %v4255
      %4257 = vrot.lane.b32.xlu0 %v4256, 20
      %v4258 = vpop.permute.xlu0 %4257
      %4259 = vrot.lane.b32.xlu0 %v4255, 20
      %v4260 = vpop.permute.xlu0 %4259
      %4263 = vrot.lane.b32.xlu0 %v3946, 20
      %v4264 = vpop.permute.xlu0 %4263
      %4266 = vrot.lane.b32.xlu0 %v4248, 30
      %v4267 = vpop.permute.xlu0 %4266
      %4268 = vrot.lane.b32.xlu0 %v4247, 30
      %v4269 = vpop.permute.xlu0 %4268
      %4272 = vrot.lane.b32.xlu0 %v4256, 40
      %v4273 = vpop.permute.xlu0 %4272
      %4274 = vrot.lane.b32.xlu0 %v4255, 40
      %v4275 = vpop.permute.xlu0 %4274
      %4278 = vrot.lane.b32.xlu0 %v3946, 40
      %v4279 = vpop.permute.xlu0 %4278
      %4281 = vrot.lane.b32.xlu0 %v4248, 50
      %v4282 = vpop.permute.xlu0 %4281
      %4283 = vrot.lane.b32.xlu0 %v4247, 50
      %v4284 = vpop.permute.xlu0 %4283
      %4287 = vrot.lane.b32.xlu0 %v4256, 60
      %v4288 = vpop.permute.xlu0 %4287
      %4289 = vrot.lane.b32.xlu0 %v4255, 60
      %v4290 = vpop.permute.xlu0 %4289
      %4293 = vrot.lane.b32.xlu0 %v3946, 60
      %v4294 = vpop.permute.xlu0 %4293
      %4296 = vrot.lane.b32.xlu0 %v4248, 70
      %v4297 = vpop.permute.xlu0 %4296
      %4298 = vrot.lane.b32.xlu0 %v4247, 70
      %v4299 = vpop.permute.xlu0 %4298
      %4302 = vrot.lane.b32.xlu0 %v4256, 80
      %v4303 = vpop.permute.xlu0 %4302
      %4304 = vrot.lane.b32.xlu0 %v4255, 80
      %v4305 = vpop.permute.xlu0 %4304
      %4308 = vrot.lane.b32.xlu0 %v3946, 80
      %v4309 = vpop.permute.xlu0 %4308
      %4311 = vrot.lane.b32.xlu0 %v4248, 90
      %v4312 = vpop.permute.xlu0 %4311
      %4313 = vrot.lane.b32.xlu0 %v4247, 90
      %v4314 = vpop.permute.xlu0 %4313
      %4317 = vrot.lane.b32.xlu0 %v4256, 100
      %v4318 = vpop.permute.xlu0 %4317
      %4319 = vrot.lane.b32.xlu0 %v4255, 100
      %v4320 = vpop.permute.xlu0 %4319
      %4323 = vrot.lane.b32.xlu0 %v3946, 100
      %v4324 = vpop.permute.xlu0 %4323
      %v4326 = vsel %vm4001, %v3945, %v4250
      %v4327 = vsel %vm4001, %v3946, %v4252
      %v4328 = vsel %vm4003, %v4326, %v4258
      %v4329 = vsel %vm4003, %v4327, %v4260
      %v4330 = vsel %vm4005, %v4328, %v4092
      %v4331 = vsel %vm4005, %v4329, %v4264
      %v4332 = vsel %vm4007, %v4330, %v4267
      %v4333 = vsel %vm4007, %v4331, %v4269
      %v4334 = vsel %vm4009, %v4332, %v4273
      %v4335 = vsel %vm4009, %v4333, %v4275
      %v4336 = vsel %vm4011, %v4334, %v4110
      %v4337 = vsel %vm4011, %v4335, %v4279
      %v4338 = vsel %vm3264, %v4336, %v4282
      %v4339 = vsel %vm3264, %v4337, %v4284
      %v4340 = vsel %vm3865, %v4338, %v4288
      %v4341 = vsel %vm3865, %v4339, %v4290
      %v4342 = vsel %vm4015, %v4340, %v4128
      %v4343 = vsel %vm4015, %v4341, %v4294
      %v4344 = vsel %vm4017, %v4342, %v4297
      %v4345 = vsel %vm4017, %v4343, %v4299
      %v4346 = vsel %vm2776, %v4344, %v4303
      %v4347 = vsel %vm2776, %v4345, %v4305
      %v4348 = vsel %vm4020, %v4346, %v4146
      %v4349 = vsel %vm4020, %v4347, %v4309
      %v4350 = vsel %vm4022, %v4146, %v4312
      %v4351 = vsel %vm4022, %v4309, %v4314
      %v4352 = vsel %vm3539, %v4350, %v4318
      %v4353 = vsel %vm3539, %v4351, %v4320
      %v4354 = vsel %vm2760, %v4352, %v4164
      %v4355 = vsel %vm2760, %v4353, %v4324
      %4356 = vrot.lane.b32.xlu0 %v3946, 78
      %v4357 = vpop.permute.xlu0 %4356
      %4359 = vrot.lane.b32.xlu0 %v4248, 88
      %v4360 = vpop.permute.xlu0 %4359
      %4361 = vrot.lane.b32.xlu0 %v4247, 88
      %v4362 = vpop.permute.xlu0 %4361
      %v4365 = vrot.slane %v3946, 7
      %v4366 = vsel %vm4206, %v4208, %v4365
      %4367 = vrot.lane.b32.xlu0 %v4208, 88
      %v4368 = vpop.permute.xlu0 %4367
      %4369 = vrot.lane.b32.xlu0 %v4366, 88
      %v4370 = vpop.permute.xlu0 %4369
      %4373 = vrot.lane.b32.xlu0 %v3946, 98
      %v4374 = vpop.permute.xlu0 %4373
      %4376 = vrot.lane.b32.xlu0 %v4248, 108
      %v4377 = vpop.permute.xlu0 %4376
      %4378 = vrot.lane.b32.xlu0 %v4247, 108
      %v4379 = vpop.permute.xlu0 %4378
      %v4382 = vsel %vm4001, %v4198, %v4360
      %v4383 = vsel %vm4001, %v4357, %v4362
      %v4384 = vsel %vm4003, %v4382, %v4368
      %v4385 = vsel %vm4003, %v4383, %v4370
      %v4386 = vsel %vm4005, %v4384, %v4217
      %v4387 = vsel %vm4005, %v4385, %v4374
      %v4388 = vsel %vm4007, %v4386, %v4377
      %v4389 = vsel %vm4007, %v4387, %v4379
      %v4392 = vrot.slane %v4388, 1
      %v4393 = vrot.slane %v4389, 1
      %v4394 = vsel %vm579, %v4392, %v4393
      %4395 = vrot.lane.b32.xlu0 %v4394, 32
      %v4396 = vpop.permute.xlu0 %4395
      %4397 = vrot.lane.b32.xlu0 %v4393, 32
      %v4398 = vpop.permute.xlu0 %4397
      %v4401 = vsel %vm4070, %v4354, %v4396
      %v4402 = vsel %vm4070, %v4355, %v4398
      %v4404 = vrot.slane %v3947, 1
      %v4405 = vsel %vm579, %v4247, %v4404
      %4406 = vrot.lane.b32.xlu0 %v4405, 10
      %v4407 = vpop.permute.xlu0 %4406
      %4408 = vrot.lane.b32.xlu0 %v4404, 10
      %v4409 = vpop.permute.xlu0 %4408
      %v4412 = vrot.slane %v3947, 2
      %4413 = vrot.lane.b32.xlu0 %v4412, 20
      %v4414 = vpop.permute.xlu0 %4413
      %4416 = vrot.lane.b32.xlu0 %v3947, 20
      %v4417 = vpop.permute.xlu0 %4416
      %4419 = vrot.lane.b32.xlu0 %v4405, 30
      %v4420 = vpop.permute.xlu0 %4419
      %4421 = vrot.lane.b32.xlu0 %v4404, 30
      %v4422 = vpop.permute.xlu0 %4421
      %4425 = vrot.lane.b32.xlu0 %v4412, 40
      %v4426 = vpop.permute.xlu0 %4425
      %4428 = vrot.lane.b32.xlu0 %v3947, 40
      %v4429 = vpop.permute.xlu0 %4428
      %4431 = vrot.lane.b32.xlu0 %v4405, 50
      %v4432 = vpop.permute.xlu0 %4431
      %4433 = vrot.lane.b32.xlu0 %v4404, 50
      %v4434 = vpop.permute.xlu0 %4433
      %4437 = vrot.lane.b32.xlu0 %v4412, 60
      %v4438 = vpop.permute.xlu0 %4437
      %4440 = vrot.lane.b32.xlu0 %v3947, 60
      %v4441 = vpop.permute.xlu0 %4440
      %4443 = vrot.lane.b32.xlu0 %v4405, 70
      %v4444 = vpop.permute.xlu0 %4443
      %4445 = vrot.lane.b32.xlu0 %v4404, 70
      %v4446 = vpop.permute.xlu0 %4445
      %4449 = vrot.lane.b32.xlu0 %v4412, 80
      %v4450 = vpop.permute.xlu0 %4449
      %4452 = vrot.lane.b32.xlu0 %v3947, 80
      %v4453 = vpop.permute.xlu0 %4452
      %4455 = vrot.lane.b32.xlu0 %v4405, 90
      %v4456 = vpop.permute.xlu0 %4455
      %4457 = vrot.lane.b32.xlu0 %v4404, 90
      %v4458 = vpop.permute.xlu0 %4457
      %4461 = vrot.lane.b32.xlu0 %v4412, 100
      %v4462 = vpop.permute.xlu0 %4461
      %4464 = vrot.lane.b32.xlu0 %v3947, 100
      %v4465 = vpop.permute.xlu0 %4464
      %v4467 = vsel %vm4001, %v3946, %v4407
      %v4468 = vsel %vm4001, %v3947, %v4409
      %v4469 = vsel %vm4003, %v4467, %v4414
      %v4470 = vsel %vm4003, %v4468, %v4414
      %v4471 = vsel %vm4005, %v4469, %v4264
      %v4472 = vsel %vm4005, %v4470, %v4417
      %v4473 = vsel %vm4007, %v4471, %v4420
      %v4474 = vsel %vm4007, %v4472, %v4422
      %v4475 = vsel %vm4009, %v4473, %v4426
      %v4476 = vsel %vm4009, %v4474, %v4426
      %v4477 = vsel %vm4011, %v4475, %v4279
      %v4478 = vsel %vm4011, %v4476, %v4429
      %v4479 = vsel %vm3264, %v4477, %v4432
      %v4480 = vsel %vm3264, %v4478, %v4434
      %v4481 = vsel %vm3865, %v4479, %v4438
      %v4482 = vsel %vm3865, %v4480, %v4438
      %v4483 = vsel %vm4015, %v4481, %v4294
      %v4484 = vsel %vm4015, %v4482, %v4441
      %v4485 = vsel %vm4017, %v4483, %v4444
      %v4486 = vsel %vm4017, %v4484, %v4446
      %v4487 = vsel %vm2776, %v4485, %v4450
      %v4488 = vsel %vm2776, %v4486, %v4450
      %v4489 = vsel %vm4020, %v4487, %v4309
      %v4490 = vsel %vm4020, %v4488, %v4453
      %v4491 = vsel %vm4022, %v4309, %v4456
      %v4492 = vsel %vm4022, %v4453, %v4458
      %v4493 = vsel %vm3539, %v4491, %v4462
      %v4494 = vsel %vm3539, %v4492, %v4462
      %v4495 = vsel %vm2760, %v4493, %v4324
      %v4496 = vsel %vm2760, %v4494, %v4465
      %4497 = vrot.lane.b32.xlu0 %v3947, 78
      %v4498 = vpop.permute.xlu0 %4497
      %4500 = vrot.lane.b32.xlu0 %v4404, 88
      %v4501 = vpop.permute.xlu0 %4500
      %v4503 = vrot.slane %v3947, 7
      %v4504 = vsel %vm4206, %v4365, %v4503
      %4505 = vrot.lane.b32.xlu0 %v4365, 88
      %v4506 = vpop.permute.xlu0 %4505
      %4507 = vrot.lane.b32.xlu0 %v4504, 88
      %v4508 = vpop.permute.xlu0 %4507
      %4511 = vrot.lane.b32.xlu0 %v3947, 98
      %v4512 = vpop.permute.xlu0 %4511
      %4514 = vrot.lane.b32.xlu0 %v4404, 108
      %v4515 = vpop.permute.xlu0 %4514
      %v4517 = vsel %vm4001, %v4357, %v4501
      %v4518 = vsel %vm4001, %v4498, %v4501
      %v4519 = vsel %vm4003, %v4517, %v4506
      %v4520 = vsel %vm4003, %v4518, %v4508
      %v4521 = vsel %vm4005, %v4519, %v4374
      %v4522 = vsel %vm4005, %v4520, %v4512
      %v4523 = vsel %vm4007, %v4521, %v4515
      %v4524 = vsel %vm4007, %v4522, %v4515
      %v4527 = vrot.slane %v4523, 1
      %v4528 = vrot.slane %v4524, 1
      %v4529 = vsel %vm579, %v4527, %v4528
      %4530 = vrot.lane.b32.xlu0 %v4529, 32
      %v4531 = vpop.permute.xlu0 %4530
      %4532 = vrot.lane.b32.xlu0 %v4528, 32
      %v4533 = vpop.permute.xlu0 %4532
      %v4536 = vsel %vm4070, %v4495, %v4531
      %v4537 = vsel %vm4070, %v4496, %v4533
      %v4542 = vrot.slane %v4189, 2
      %v4543 = vrot.slane %v4190, 2
      %v4544 = vsel %vm609, %v4542, %v4543
      %v4545 = vrot.slane %v4244, 2
      %v4546 = vrot.slane %v4245, 2
      %v4547 = vsel %vm609, %v4545, %v4546
      %v4553 = vrot.slane %v4348, 4
      %v4554 = vrot.slane %v4349, 4
      %v4555 = vsel %vm669, %v4553, %v4554
      %v4556 = vrot.slane %v4401, 4
      %v4557 = vrot.slane %v4402, 4
      %v4558 = vsel %vm669, %v4556, %v4557
      %v4564 = vrot.slane %v4489, 6
      %v4565 = vrot.slane %v4490, 6
      %v4566 = vsel %vm3189, %v4564, %v4565
      %v4567 = vrot.slane %v4536, 6
      %v4568 = vrot.slane %v4537, 6
      %v4569 = vsel %vm3189, %v4567, %v4568
      %v4571 = vld [vmem:[%s9] sm:$0xff]
      %v4572 = vld [vmem:[%s9 + $0x8] sm:$0xff]
      %v4573 = vld [vmem:[%s9 + $0x10] sm:$0xff]
      %v4574 = vld [vmem:[%s9 + $0x18] sm:$0xff]
      %v4575 = vld [vmem:[%s9 + $0x20] sm:$0xff]
      %v4576 = vld [vmem:[%s9 + $0x28] sm:$0xff]
      %v4577 = vld [vmem:[%s9 + $0x30] sm:$0xff]
      %v4578 = vld [vmem:[%s9 + $0x38] sm:$0xff]
      %v4579 = vld [vmem:[%s9 + $0x40] sm:$0xff]
      %v4580 = vld [vmem:[%s9 + $0x48] sm:$0xff]
      %v4581 = vld [vmem:[%s9 + $0x50] sm:$0xff]
      %v4582 = vld [vmem:[%s9 + $0x58] sm:$0xff]
      %v4583 = vld [vmem:[%s9 + $0x60] sm:$0xff]
      %v4584 = vld [vmem:[%s9 + $0x68] sm:$0xff]
      %v4585 = vld [vmem:[%s9 + $0x70] sm:$0xff]
      %v4586 = vld [vmem:[%s9 + $0x78] sm:$0xff]
      %v4587 = vld [vmem:[%s9 + $0x80] sm:$0xff]
      %v4588 = vld [vmem:[%s9 + $0x88] sm:$0xff]
      %v4589 = vld [vmem:[%s9 + $0x90] sm:$0xff]
      %v4590 = vld [vmem:[%s9 + $0x98] sm:$0xff]
      %v4591 = vld [vmem:[%s9 + $0xa0] sm:$0xff]
      %v4592 = vld [vmem:[%s9 + $0xa8] sm:$0xff]
      %v4593 = vld [vmem:[%s9 + $0xb0] sm:$0xff]
      %v4594 = vld [vmem:[%s9 + $0xb8] sm:$0xff]
      %v4595 = vld [vmem:[%s9 + $0xc0] sm:$0xff]
      %v4596 = vld [vmem:[%s9 + $0xc8] sm:$0xff]
      %v4597 = vld [vmem:[%s9 + $0xd0] sm:$0x3]
      %v4598 = vld [vmem:[%s10] sm:$0x1]
      %v4600 = vperm.slane %v4598, 0
      %vm4602 = vcmask 670720
      %v4604 = vsel %vm4602, %v4071, 0
      %v4606 = vsel %vm4602, %v4547, 0
      %v4608 = vsel %vm4602, %v4558, 0
      %v4610 = vsel %vm4602, %v4569, 0
      %v4613 = vsel %vm3189, %v4597, 0
      %4615 = vmatpush.msra.mxu0 %v4586
      %4616 = vmatpush.msra.mxu0 %v4585
      %4617 = vmatpush.msra.mxu0 %v4584
      %4618 = vmatpush.msra.mxu0 %v4583
      %4619 = vmatpush.msra.mxu0 %v4582
      %4620 = vmatpush.msra.mxu0 %v4581
      %4621 = vmatpush.msra.mxu0 %v4580
      %4622 = vmatpush.msra.mxu0 %v4579
      %4623 = vmatpush.msra.mxu0 %v4578
      %4624 = vmatpush.msra.mxu0 %v4577
      %4625 = vmatpush.msra.mxu0 %v4576
      %4626 = vmatpush.msra.mxu0 %v4575
      %4627 = vmatpush.msra.mxu0 %v4574
      %4628 = vmatpush.msra.mxu0 %v4573
      %4629 = vmatpush.msra.mxu0 %v4572
      %4630 = vmatpush.msra.mxu0 %v4571
      %4631 = vmatmul.f32.gmra.mxu0 %v4021
      %v4632 = vpop.f32.mrf.mxu0
      %v4633 = vadd.f32 %v4600, %v4632
      %4634 = vmatmul.f32.gmra.mxu0 %v4544
      %v4635 = vpop.f32.mrf.mxu0
      %v4636 = vadd.f32 %v4600, %v4635
      %4637 = vmatmul.f32.gmra.mxu0 %v4555
      %v4638 = vpop.f32.mrf.mxu0
      %v4639 = vadd.f32 %v4600, %v4638
      %4640 = vmatmul.f32.gmra.mxu0 %v4566
      %v4641 = vpop.f32.mrf.mxu0
      %v4642 = vadd.f32 %v4600, %v4641
      %4643 = vdwg.mxu0
      %4644 = vmatpush.msra.mxu0 0.0
      %4645 = vmatpush.msra.mxu0 0.0
      %4646 = vmatpush.msra.mxu0 0.0
      %4647 = vmatpush.msra.mxu0 0.0
      %4648 = vmatpush.msra.mxu0 0.0
      %4649 = vmatpush.msra.mxu0 %v4613
      %4650 = vmatpush.msra.mxu0 %v4596
      %4651 = vmatpush.msra.mxu0 %v4595
      %4652 = vmatpush.msra.mxu0 %v4594
      %4653 = vmatpush.msra.mxu0 %v4593
      %4654 = vmatpush.msra.mxu0 %v4592
      %4655 = vmatpush.msra.mxu0 %v4591
      %4656 = vmatpush.msra.mxu0 %v4590
      %4657 = vmatpush.msra.mxu0 %v4589
      %4658 = vmatpush.msra.mxu0 %v4588
      %4659 = vmatpush.msra.mxu0 %v4587
      %4660 = vmatmul.f32.gmra.mxu0 %v4604
      %v4661 = vpop.f32.mrf.mxu0
      %v4662 = vadd.f32 %v4633, %v4661
      %4663 = vmatmul.f32.gmra.mxu0 %v4606
      %v4664 = vpop.f32.mrf.mxu0
      %v4665 = vadd.f32 %v4636, %v4664
      %4666 = vmatmul.f32.gmra.mxu0 %v4608
      %v4667 = vpop.f32.mrf.mxu0
      %v4668 = vadd.f32 %v4639, %v4667
      %4669 = vmatmul.f32.gmra.mxu0 %v4610
      %v4670 = vpop.f32.mrf.mxu0
      %v4671 = vadd.f32 %v4642, %v4670
      %4672 = vdwg.mxu0
      %v4673 = vmax.f32 %v4662, 0.0
      %v4674 = vmax.f32 %v4665, 0.0
      %v4675 = vmax.f32 %v4668, 0.0
      %v4676 = vmax.f32 %v4671, 0.0
      %v4677 = vld [vmem:[%s11] sm:$0xff]
      %v4678 = vld [vmem:[%s11 + $0x8] sm:$0xff]
      %v4679 = vld [vmem:[%s11 + $0x10] sm:$0xff]
      %v4680 = vld [vmem:[%s11 + $0x18] sm:$0xff]
      %v4681 = vld [vmem:[%s11 + $0x20] sm:$0xff]
      %v4682 = vld [vmem:[%s11 + $0x28] sm:$0xff]
      %v4683 = vld [vmem:[%s11 + $0x30] sm:$0xff]
      %v4684 = vld [vmem:[%s11 + $0x38] sm:$0xff]
      %v4685 = vld [vmem:[%s11 + $0x40] sm:$0xff]
      %v4686 = vld [vmem:[%s11 + $0x48] sm:$0xff]
      %v4687 = vld [vmem:[%s11 + $0x50] sm:$0xff]
      %v4688 = vld [vmem:[%s11 + $0x58] sm:$0xff]
      %v4690 = vsel %vm706, %v4673, 0
      %v4693 = vsel %vm706, %v4674, 0
      %v4696 = vsel %vm706, %v4675, 0
      %v4699 = vsel %vm706, %v4676, 0
      %4701 = vmatpush.msra.mxu0 0.0
      %4702 = vmatpush.msra.mxu0 0.0
      %4703 = vmatpush.msra.mxu0 0.0
      %4704 = vmatpush.msra.mxu0 0.0
      %4705 = vmatpush.msra.mxu0 %v4688
      %4706 = vmatpush.msra.mxu0 %v4687
      %4707 = vmatpush.msra.mxu0 %v4686
      %4708 = vmatpush.msra.mxu0 %v4685
      %4709 = vmatpush.msra.mxu0 %v4684
      %4710 = vmatpush.msra.mxu0 %v4683
      %4711 = vmatpush.msra.mxu0 %v4682
      %4712 = vmatpush.msra.mxu0 %v4681
      %4713 = vmatpush.msra.mxu0 %v4680
      %4714 = vmatpush.msra.mxu0 %v4679
      %4715 = vmatpush.msra.mxu0 %v4678
      %4716 = vmatpush.msra.mxu0 %v4677
      %4717 = vmatmul.f32.gmra.mxu0 %v4690
      %v4718 = vpop.f32.mrf.mxu0
      %v4719 = vadd.f32 0.0, %v4718
      %4720 = vmatmul.f32.gmra.mxu0 %v4693
      %v4721 = vpop.f32.mrf.mxu0
      %v4722 = vadd.f32 0.0, %v4721
      %4723 = vmatmul.f32.gmra.mxu0 %v4696
      %v4724 = vpop.f32.mrf.mxu0
      %v4725 = vadd.f32 0.0, %v4724
      %4726 = vmatmul.f32.gmra.mxu0 %v4699
      %v4727 = vpop.f32.mrf.mxu0
      %v4728 = vadd.f32 0.0, %v4727
      %4729 = vdwg.mxu0
      %4734 = vrot.lane.b32.xlu0 %v4719, 80
      %v4735 = vpop.permute.xlu0 %4734
      %4736 = vrot.lane.b32.xlu0 %v4722, 80
      %v4737 = vpop.permute.xlu0 %4736
      %4738 = vrot.lane.b32.xlu0 %v4725, 80
      %v4739 = vpop.permute.xlu0 %4738
      %4740 = vrot.lane.b32.xlu0 %v4728, 80
      %v4741 = vpop.permute.xlu0 %4740
      %v4746 = vmax.f32 %v4719, %v4735
      %v4747 = vmax.f32 %v4722, %v4737
      %v4748 = vmax.f32 %v4725, %v4739
      %v4749 = vmax.f32 %v4728, %v4741
      %v4750 = vld [vmem:[%s12] sm:$0xff]
      %v4751 = vld [vmem:[%s12 + $0x8] sm:$0xff]
      %v4752 = vld [vmem:[%s12 + $0x10] sm:$0xff]
      %v4753 = vld [vmem:[%s12 + $0x18] sm:$0xff]
      %v4755 = vsel %vm4070, %v4750, 0
      %v4758 = vsel %vm4070, %v4751, 0
      %v4761 = vsel %vm4070, %v4752, 0
      %v4764 = vsel %vm4070, %v4753, 0
      %4766 = vmatpush.msra.mxu0 0.0
      %4767 = vmatpush.msra.mxu0 0.0
      %4768 = vmatpush.msra.mxu0 0.0
      %4769 = vmatpush.msra.mxu0 0.0
      %4770 = vmatpush.msra.mxu0 0.0
      %4771 = vmatpush.msra.mxu0 0.0
      %4772 = vmatpush.msra.mxu0 0.0
      %4773 = vmatpush.msra.mxu0 0.0
      %4774 = vmatpush.msra.mxu0 0.0
      %4775 = vmatpush.msra.mxu0 0.0
      %4776 = vmatpush.msra.mxu0 0.0
      %4777 = vmatpush.msra.mxu0 0.0
      %4778 = vmatpush.msra.mxu0 %v4749
      %4779 = vmatpush.msra.mxu0 %v4748
      %4780 = vmatpush.msra.mxu0 %v4747
      %4781 = vmatpush.msra.mxu0 %v4746
      %4782 = vmatmul.f32.gmra.mxu0 %v4755
      %v4783 = vpop.f32.mrf.mxu0
      %v4784 = vadd.f32 0.0, %v4783
      %4785 = vmatmul.f32.gmra.mxu0 %v4758
      %v4786 = vpop.f32.mrf.mxu0
      %v4787 = vadd.f32 0.0, %v4786
      %4788 = vmatmul.f32.gmra.mxu0 %v4761
      %v4789 = vpop.f32.mrf.mxu0
      %v4790 = vadd.f32 0.0, %v4789
      %4791 = vmatmul.f32.gmra.mxu0 %v4764
      %v4792 = vpop.f32.mrf.mxu0
      %v4793 = vadd.f32 0.0, %v4792
      %4794 = vdwg.mxu0
      %v4795 = vmax.f32 %v4784, %v4790
      %v4796 = vmax.f32 %v4787, %v4793
      %v4798 = vrot.slane %v4795, 4
      %4799 = vrot.lane.b32.xlu0 %v4798, 48
      %v4800 = vpop.permute.xlu0 %4799
      %4803 = vrot.lane.b32.xlu0 %v4796, 96
      %v4804 = vpop.permute.xlu0 %4803
      %v4806 = vrot.slane %v4796, 4
      %4807 = vrot.lane.b32.xlu0 %v4806, 16
      %v4808 = vpop.permute.xlu0 %4807
      %v4810 = vsel %vm699, %v4795, %v4800
      %v4811 = vsel %vm706, %v4810, %v4804
      %v4812 = vsel %vm713, %v4804, %v4808
      %v4813 = vld [vmem:[%s13] sm:$0xff]
      %v4814 = vld [vmem:[%s13 + $0x8] sm:$0xff]
      %v4815 = vld [vmem:[%s13 + $0x10] sm:$0xff]
      %v4816 = vld [vmem:[%s13 + $0x18] sm:$0xff]
      %v4817 = vld [vmem:[%s13 + $0x20] sm:$0xff]
      %v4818 = vld [vmem:[%s13 + $0x28] sm:$0xff]
      %v4819 = vld [vmem:[%s13 + $0x30] sm:$0xff]
      %v4820 = vld [vmem:[%s13 + $0x38] sm:$0xff]
      %v4821 = vld [vmem:[%s13 + $0x40] sm:$0xff]
      %v4822 = vld [vmem:[%s13 + $0x48] sm:$0xff]
      %v4823 = vld [vmem:[%s13 + $0x50] sm:$0xff]
      %v4824 = vld [vmem:[%s13 + $0x58] sm:$0xff]
      %v4825 = vld [vmem:[%s13 + $0x60] sm:$0xff]
      %v4826 = vld [vmem:[%s13 + $0x68] sm:$0xff]
      %v4827 = vld [vmem:[%s13 + $0x70] sm:$0xff]
      %v4828 = vld [vmem:[%s13 + $0x78] sm:$0xff]
      %v4829 = vld [vmem:[%s13 + $0x80] sm:$0xff]
      %v4830 = vld [vmem:[%s13 + $0x88] sm:$0xff]
      %v4831 = vld [vmem:[%s13 + $0x90] sm:$0xff]
      %v4832 = vld [vmem:[%s13 + $0x98] sm:$0xff]
      %v4833 = vld [vmem:[%s13 + $0xa0] sm:$0xff]
      %v4834 = vld [vmem:[%s13 + $0xa8] sm:$0xff]
      %v4835 = vld [vmem:[%s13 + $0xb0] sm:$0xff]
      %v4836 = vld [vmem:[%s13 + $0xb8] sm:$0xff]
      %v4837 = vld [vmem:[%s14] sm:$0x1]
      %v4839 = vperm.slane %v4837, 0
      %v4842 = vsel %vm720, %v4812, 0
      %4844 = vmatpush.msra.mxu0 %v4828
      %4845 = vmatpush.msra.mxu0 %v4827
      %4846 = vmatpush.msra.mxu0 %v4826
      %4847 = vmatpush.msra.mxu0 %v4825
      %4848 = vmatpush.msra.mxu0 %v4824
      %4849 = vmatpush.msra.mxu0 %v4823
      %4850 = vmatpush.msra.mxu0 %v4822
      %4851 = vmatpush.msra.mxu0 %v4821
      %4852 = vmatpush.msra.mxu0 %v4820
      %4853 = vmatpush.msra.mxu0 %v4819
      %4854 = vmatpush.msra.mxu0 %v4818
      %4855 = vmatpush.msra.mxu0 %v4817
      %4856 = vmatpush.msra.mxu0 %v4816
      %4857 = vmatpush.msra.mxu0 %v4815
      %4858 = vmatpush.msra.mxu0 %v4814
      %4859 = vmatpush.msra.mxu0 %v4813
      %4860 = vmatmul.f32.gmra.mxu0 %v4811
      %v4861 = vpop.f32.mrf.mxu0
      %v4862 = vadd.f32 %v4839, %v4861
      %4863 = vdwg.mxu0
      %4864 = vmatpush.msra.mxu0 0.0
      %4865 = vmatpush.msra.mxu0 0.0
      %4866 = vmatpush.msra.mxu0 0.0
      %4867 = vmatpush.msra.mxu0 0.0
      %4868 = vmatpush.msra.mxu0 0.0
      %4869 = vmatpush.msra.mxu0 0.0
      %4870 = vmatpush.msra.mxu0 0.0
      %4871 = vmatpush.msra.mxu0 0.0
      %4872 = vmatpush.msra.mxu0 %v4836
      %4873 = vmatpush.msra.mxu0 %v4835
      %4874 = vmatpush.msra.mxu0 %v4834
      %4875 = vmatpush.msra.mxu0 %v4833
      %4876 = vmatpush.msra.mxu0 %v4832
      %4877 = vmatpush.msra.mxu0 %v4831
      %4878 = vmatpush.msra.mxu0 %v4830
      %4879 = vmatpush.msra.mxu0 %v4829
      %4880 = vmatmul.f32.gmra.mxu0 %v4842
      %v4881 = vpop.f32.mrf.mxu0
      %v4882 = vadd.f32 %v4862, %v4881
      %4883 = vdwg.mxu0
      %v4884 = vmax.f32 %v4882, 0.0
      %v4885 = vld [vmem:[%s15] sm:$0xff]
      %v4886 = vld [vmem:[%s15 + $0x8] sm:$0xff]
      %v4887 = vld [vmem:[%s15 + $0x10] sm:$0xff]
      %v4888 = vld [vmem:[%s15 + $0x18] sm:$0xff]
      %v4889 = vld [vmem:[%s15 + $0x20] sm:$0xff]
      %v4890 = vld [vmem:[%s16] sm:$0x1]
      %v4892 = vperm.slane %v4890, 0
      %v4895 = vsel %vm4007, %v4884, 0
      %4897 = vmatpush.msra.mxu0 0.0
      %4898 = vmatpush.msra.mxu0 0.0
      %4899 = vmatpush.msra.mxu0 0.0
      %4900 = vmatpush.msra.mxu0 0.0
      %4901 = vmatpush.msra.mxu0 0.0
      %4902 = vmatpush.msra.mxu0 0.0
      %4903 = vmatpush.msra.mxu0 0.0
      %4904 = vmatpush.msra.mxu0 0.0
      %4905 = vmatpush.msra.mxu0 0.0
      %4906 = vmatpush.msra.mxu0 0.0
      %4907 = vmatpush.msra.mxu0 0.0
      %4908 = vmatpush.msra.mxu0 %v4889
      %4909 = vmatpush.msra.mxu0 %v4888
      %4910 = vmatpush.msra.mxu0 %v4887
      %4911 = vmatpush.msra.mxu0 %v4886
      %4912 = vmatpush.msra.mxu0 %v4885
      %4913 = vmatmul.f32.gmra.mxu0 %v4895
      %v4914 = vpop.f32.mrf.mxu0
      %v4915 = vadd.f32 %v4892, %v4914
      %4916 = vdwg.mxu0
      %vm4917 = vcmask 19456
      %v4918 = vsel %vm4917, %v4915, -inf
      %4919 = vmax.xlane.f32.xlu0 %v4918
      %v4920 = vpop.xlane.xlu0 %4919
      %v4921 = vsub.f32 %v4915, %v4920
      %v4922 = vmul.f32 %v4921, 1.442695
      %v4923 = vpow.pop %v4922
      %v4924 = vsel %vm4917, %v4923, 0.0
      %4925 = vadd.xlane.f32.xlu0 %v4924
      %v4926 = vpop.xlane.xlu0 %4925
      %v4927 = vrcp.pop %v4926
      %v4928 = vmul.f32 %v4926, %v4927
      %v4929 = vsub.f32 1.0, %v4928
      %v4930 = vmul.f32 %v4927, %v4929
      %v4931 = vadd.f32 %v4927, %v4930
      %vm4932 = vweird.f32 %v4926
      %vm4933 = vweird.f32 %v4927
      %vm4934 = vmor %vm4932, %vm4933
      %v4935 = vsel %vm4934, %v4927, %v4931
      %v4936 = vand.u32 2147483647, %v4926
      %vm4937 = vcmp.eq.f32.partialorder %v4936, 8.507059e+37
      %v4938 = vand.u32 %v4926, 2147483648
      %v4939 = vor.u32 1.1754944e-38, %v4938
      %v4940 = vsel %vm4937, %v4939, %v4935
      %v4941 = vmul.f32 %v4923, %v4940
      %4942 = vst.msk [vmem:[%s548] sm:$0xf] %vm4917, %v4941
      %p4943 = scmp.lt.s32.totalorder %s28, 1
      %s4944 = scalar_select %p4943, %s28, 1
      %s4945 = smul.addr %s4944, 4
      %s4946 = scalar_lea.vmem %s17, %s4945
      // Predicated region
      $region89: #{net_forward.1} parent=87 // pred_check
        %p4947 = pneg %p408
      $region90: #{net_forward.1} parent=87 // pred_check_branch
        %4949 = sbr.rel (%p4947) target = $region92
      $region91: #{net_forward.1} parent=87 // pred_region
        _
      $region92: #{net_forward.1} parent=87 // pred_fallthru
        _
    $region88: #{net_forward.1} parent=5 // pred_fallthru
      _
    %p4950 = scmp.le.s32.totalorder 2, %s23
    // Predicated region
    $region93: #{net_forward.1} parent=5 // pred_check
      %p4951 = pneg %p4950
    $region94: #{net_forward.1} parent=5 // pred_check_branch
      %4953 = sbr.rel (%p4951) target = $region96
    $region95: #{net_forward.1} parent=5 // pred_region
      %s4954 = ssub.s32 %s23, 2
      // Predicated region
      $region97: #{net_forward.1} parent=95 // pred_check
        %p4955 = pneg %p414
      $region98: #{net_forward.1} parent=95 // pred_check_branch
        %4957 = sbr.rel (%p4955) target = $region100
      $region99: #{net_forward.1} parent=95 // pred_region
        %p4958 = scmp.lt.s32.totalorder %s29, 1
        %s4959 = scalar_select %p4958, %s29, 1
        %s4960 = smul.addr %s4959, 4
        %s4961 = scalar_lea.vmem %s17, %s4960
      $region100: #{net_forward.1} parent=95 // pred_fallthru
        _
    $region96: #{net_forward.1} parent=5 // pred_fallthru
      _
  $region6: #{net_forward.1} parent=0 // loop_footer
    %s27 = sadd.s32 1, %s23
  $region7: #{net_forward.1} parent=0 // loop_footer_branch
    %22 = sbr.rel target = $region3
  $region8: #{net_forward.1} parent=0 // loop_exit
    _

</llo_original>
